<compile_context>
chip_gen: v5e
topology: v5e:2x2
jax: 0.10.0
libtpu: 0.0.40
codegen_flags: <defaults>
</compile_context>

<pallas_src>
import numpy as np
import jax
import jax.numpy as jnp
from jax import lax
from jax.experimental import pallas as pl
from jax.experimental.pallas import tpu as pltpu


# ----------------------------- tiling helpers -------------------------------
def _choose_tile(m, candidates=(512, 256, 128)):
    """Largest tile dividing m that still yields >=2 grid steps (megacore)."""
    for t in candidates:
        if m % t == 0 and m // t >= 2:
            return t
    return m


def _mosaic_params(*block_nbytes):
    total = 2 * sum(block_nbytes)            # double-buffered pipeline
    limit = int(min(96 << 20, max(8 << 20, 4 * total)))
    return pltpu.CompilerParams(dimension_semantics=("parallel",),
                                vmem_limit_bytes=limit)


# ----------------------------- Pallas kernels -------------------------------
def _mm_bias_kernel_factory(relu: bool):
    def kernel(w_ref, x_ref, b_ref, o_ref):
        acc = jnp.dot(w_ref[...], x_ref[...].astype(jnp.bfloat16),
                      preferred_element_type=jnp.float32)
        acc = acc + b_ref[...]                 # f32 epilogue
        if relu:
            acc = jnp.maximum(acc, 0.0)
        o_ref[...] = acc.astype(o_ref.dtype)
    return kernel


def mm_bias(w_bf16, x_f32, b_col, relu=False):
    """out(Cout, M) = relu?(W(Cout,K) @ X(K,M) + b(Cout,1)); M tiled on lanes."""
    cout, k = w_bf16.shape
    _, m = x_f32.shape
    tm = _choose_tile(m)
    params = _mosaic_params(cout * k * 2, k * tm * 4, cout * 4, cout * tm * 4)
    return pl.pallas_call(
        _mm_bias_kernel_factory(relu),
        out_shape=jax.ShapeDtypeStruct((cout, m), jnp.float32),
        grid=(m // tm,),
        in_specs=[
            pl.BlockSpec((cout, k), lambda i: (0, 0)),
            pl.BlockSpec((k, tm), lambda i: (0, i)),
            pl.BlockSpec((cout, 1), lambda i: (0, 0)),
        ],
        out_specs=pl.BlockSpec((cout, tm), lambda i: (0, i)),
        compiler_params=params,
    )(w_bf16, x_f32, b_col)


def _up_kernel(x_ref, a_ref, o_ref):
    o_ref[...] = jnp.dot(x_ref[...].astype(jnp.bfloat16), a_ref[...],
                         preferred_element_type=jnp.float32).astype(o_ref.dtype)


def _up_add_kernel(x_ref, a_ref, lat_ref, o_ref):
    acc = jnp.dot(x_ref[...].astype(jnp.bfloat16), a_ref[...],
                  preferred_element_type=jnp.float32)
    o_ref[...] = (acc + lat_ref[...]).astype(o_ref.dtype)


def mm_rows(x_f32, a_bf16, lat_f32=None):
    """Row-tiled (R,K)@(K,S) [+ lat(R,S)] — one 1-D bilinear upsample step."""
    r, k = x_f32.shape
    _, s = a_bf16.shape
    tr = _choose_tile(r)
    if lat_f32 is None:
        params = _mosaic_params(tr * k * 4, k * s * 2, tr * s * 4)
        return pl.pallas_call(
            _up_kernel,
            out_shape=jax.ShapeDtypeStruct((r, s), jnp.float32),
            grid=(r // tr,),
            in_specs=[pl.BlockSpec((tr, k), lambda i: (i, 0)),
                      pl.BlockSpec((k, s), lambda i: (0, 0))],
            out_specs=pl.BlockSpec((tr, s), lambda i: (i, 0)),
            compiler_params=params,
        )(x_f32, a_bf16)
    params = _mosaic_params(tr * k * 4, k * s * 2, tr * s * 4, tr * s * 4)
    return pl.pallas_call(
        _up_add_kernel,
        out_shape=jax.ShapeDtypeStruct((r, s), jnp.float32),
        grid=(r // tr,),
        in_specs=[pl.BlockSpec((tr, k), lambda i: (i, 0)),
                  pl.BlockSpec((k, s), lambda i: (0, 0)),
                  pl.BlockSpec((tr, s), lambda i: (i, 0))],
        out_specs=pl.BlockSpec((tr, s), lambda i: (i, 0)),
        compiler_params=params,
    )(x_f32, a_bf16, lat_f32)


# ------------------------------ JAX glue -------------------------------------
def _im2col_cm(x_cm, nhw, kh, kw, stride, pad):
    """(C, N*H*W) -> (C*kh*kw, N*Ho*Wo); tap ordering (c, dy, dx) matches
    weight.reshape(Cout, Cin*kh*kw)."""
    # TODO(synk): patches are materialized in HBM (9x activation bytes for a
    # 3x3 conv); a halo-aware in-kernel accumulation over taps would remove
    # this extra traffic at production resolutions.
    c = x_cm.shape[0]
    n, h, w = nhw
    x4 = x_cm.reshape(c, n, h, w)
    xp = jnp.pad(x4, ((0, 0), (0, 0), (pad, pad), (pad, pad)))
    ho = (h + 2 * pad - kh) // stride + 1
    wo = (w + 2 * pad - kw) // stride + 1
    cols = []
    for dy in range(kh):
        for dx in range(kw):
            cols.append(xp[:, :, dy:dy + stride * (ho - 1) + 1:stride,
                           dx:dx + stride * (wo - 1) + 1:stride])
    patches = jnp.stack(cols, axis=1)                  # (C, kh*kw, N, Ho, Wo)
    return patches.reshape(c * kh * kw, n * ho * wo), (n, ho, wo)


def conv_cm(x_cm, nhw, wm_bf16, b_col, kh, kw, stride, pad, relu=False):
    """PyTorch-semantics Conv2d in channel-major layout."""
    if kh == 1 and kw == 1 and stride == 1 and pad == 0:
        patches, out_nhw = x_cm, nhw                   # 1x1 conv: no im2col
    else:
        patches, out_nhw = _im2col_cm(x_cm, nhw, kh, kw, stride, pad)
    return mm_bias(wm_bf16, patches, b_col, relu=relu), out_nhw


def _bilinear_matrix(out_size, in_size):
    # PyTorch F.interpolate(mode='bilinear', align_corners=False) semantics.
    scale = in_size / out_size
    o = np.arange(out_size)
    src = np.maximum((o + 0.5) * scale - 0.5, 0.0)
    i0 = np.minimum(np.floor(src).astype(np.int64), in_size - 1)
    frac = src - i0
    i1 = np.minimum(i0 + 1, in_size - 1)
    a = np.zeros((out_size, in_size), dtype=np.float32)
    np.add.at(a, (o, i0), 1.0 - frac)
    np.add.at(a, (o, i1), frac)
    return a


def _interp_matrix(ho, wo, hi, wi):        # dense kron: used only by the reference
    return jnp.asarray(np.kron(_bilinear_matrix(ho, hi), _bilinear_matrix(wo, wi)),
                       dtype=jnp.float32)


def upsample_add_cm(prev_cm, prev_nhw, lat_cm, lat_nhw):
    """Separable bilinear upsample of prev to lat's spatial size + lateral add.
    The add is fused into the second (W-direction) Pallas matmul."""
    p = prev_cm.shape[0]
    n, hp, wp = prev_nhw
    _, h, w = lat_nhw
    ah_t = jnp.asarray(_bilinear_matrix(h, hp).T, jnp.bfloat16)   # (hp, h)
    aw_t = jnp.asarray(_bilinear_matrix(w, wp).T, jnp.bfloat16)   # (wp, w)
    # H-direction: put hp on the contraction (lane) dim.
    t = prev_cm.reshape(p, n, hp, wp).transpose(0, 1, 3, 2).reshape(p * n * wp, hp)
    u = mm_rows(t, ah_t)                                          # (P*N*wp, h)
    # W-direction (+ fused lateral add): put wp on the contraction dim.
    u = u.reshape(p, n, wp, h).transpose(0, 1, 3, 2).reshape(p * n * h, wp)
    fused = mm_rows(u, aw_t, lat_cm.reshape(p * n * h, w))        # (P*N*h, w)
    return fused.reshape(p, n * h * w), (n, h, w)


# --------------------------- FeaturePyramid ----------------------------------
class FeaturePyramidPallas:
    """JAX/Pallas port of torcharch.conv.FeaturePyramid with a synthetic backbone."""

    def __init__(self, backbone_params, depth2channels, pyramid_feats, key):
        # backbone_params: list of (w_oihw, b, stride, pad, relu)
        # TODO(synk): the real module takes an arbitrary nn.Module backbone; it
        # is replaced by this deterministic synthetic conv stack (also run via
        # the Pallas matmul kernels).
        self.backbone_params = backbone_params
        self.depth2channels = depth2channels
        self.pyramid_feats = pyramid_feats

        n_lat = len(depth2channels)
        keys = jax.random.split(key, 2 * n_lat + 2)
        self.laterals = []
        for j, c in enumerate(depth2channels.values()):
            w = jax.random.normal(keys[2 * j], (pyramid_feats, c, 1, 1),
                                  jnp.float32) * (1.0 / np.sqrt(c))
            b = jax.random.normal(keys[2 * j + 1], (pyramid_feats,),
                                  jnp.float32) * 0.01
            self.laterals.append((w, b))
        self.smooth_w = jax.random.normal(
            keys[-2], (pyramid_feats, pyramid_feats, 3, 3),
            jnp.float32) * (1.0 / np.sqrt(9 * pyramid_feats))
        self.smooth_b = jax.random.normal(keys[-1], (pyramid_feats,),
                                          jnp.float32) * 0.01

        # One-time packing: bf16 (Cout, K) matmul weights, (Cout, 1) f32 biases.
        def pack(w_oihw, b):
            cout = w_oihw.shape[0]
            return (w_oihw.reshape(cout, -1).astype(jnp.bfloat16),
                    b.reshape(cout, 1).astype(jnp.float32))

        self._bb_packed = []
        for (w, b, stride, pad, relu) in backbone_params:
            _, _, kh, kw = w.shape
            wm, bc = pack(w, b)
            self._bb_packed.append((wm, bc, kh, kw, stride, pad, relu))
        self._lat_packed = [pack(w, b) for (w, b) in self.laterals]
        self._smooth_packed = pack(self.smooth_w, self.smooth_b)

        self._jit_forward = jax.jit(self._forward)

    def __call__(self, imgs_nchw):
        return self._jit_forward(imgs_nchw)

    def _forward(self, imgs_nchw):
        n, c, h, w = imgs_nchw.shape
        x = jnp.transpose(imgs_nchw, (1, 0, 2, 3)).reshape(c, n * h * w)  # NCHW->CM
        nhw = (n, h, w)

        bottom_up = []
        for i, (wm, bc, kh, kw, stride, pad, relu) in enumerate(self._bb_packed):
            x, nhw = conv_cm(x, nhw, wm, bc, kh, kw, stride, pad, relu=relu)
            if i in self.depth2channels:
                if x.shape[0] != self.depth2channels[i]:
                    raise RuntimeError(
                        f'Expected {self.depth2channels[i]} channels for layer '
                        f'{i}, got {x.shape[0]}')
                bottom_up.append((x, nhw))

        lw, lb = self._lat_packed[-1]
        top_down = [conv_cm(bottom_up[-1][0], bottom_up[-1][1], lw, lb, 1, 1, 1, 0)]
        for i in range(2, len(bottom_up) + 1):
            bu, bu_nhw = bottom_up[-i]
            lw, lb = self._lat_packed[-i]
            lat, lat_nhw = conv_cm(bu, bu_nhw, lw, lb, 1, 1, 1, 0)
            prev, prev_nhw = top_down[-1]
            top_down.append(upsample_add_cm(prev, prev_nhw, lat, lat_nhw))
        top_down.reverse()

        sw, sb = self._smooth_packed
        pyramid = []
        for t, (tn, th, tw) in top_down:
            y, _ = conv_cm(t, (tn, th, tw), sw, sb, 3, 3, 1, 1)
            pyramid.append(jnp.transpose(
                y.reshape(self.pyramid_feats, tn, th, tw), (1, 0, 2, 3)))  # ->NCHW
        return pyramid


# ----------------------- pure-JAX reference (for check) ----------------------
def _conv2d_ref(x_nhwc, w_oihw, b, stride, pad, relu):
    y = lax.conv_general_dilated(
        x_nhwc, jnp.transpose(w_oihw, (2, 3, 1, 0)),
        window_strides=(stride, stride), padding=((pad, pad), (pad, pad)),
        dimension_numbers=('NHWC', 'HWIO', 'NHWC'),
        precision=lax.Precision.HIGHEST)
    y = y + b
    return jnp.maximum(y, 0.0) if relu else y


def _fpn_ref(fpn, imgs_nchw):
    x = jnp.transpose(imgs_nchw, (0, 2, 3, 1))
    bottom_up = []
    for i, (w, b, stride, pad, relu) in enumerate(fpn.backbone_params):
        x = _conv2d_ref(x, w, b, stride, pad, relu)
        if i in fpn.depth2channels:
            bottom_up.append(x)
    lw, lb = fpn.laterals[-1]
    top_down = [_conv2d_ref(bottom_up[-1], lw, lb, 1, 0, False)]
    for i in range(2, len(bottom_up) + 1):
        lateral = bottom_up[-i]
        n, h, w_, _ = lateral.shape
        lw, lb = fpn.laterals[-i]
        lat = _conv2d_ref(lateral, lw, lb, 1, 0, False)
        prev = top_down[-1]
        _, hp, wp, p = prev.shape
        m = _interp_matrix(h, w_, hp, wp)
        up = jnp.einsum('oi,nic->noc', m, prev.reshape(n, hp * wp, p),
                        precision=lax.Precision.HIGHEST).reshape(n, h, w_, p)
        top_down.append(up + lat)
    top_down.reverse()
    pyramid = [_conv2d_ref(t, fpn.smooth_w, fpn.smooth_b, 1, 1, False)
               for t in top_down]
    return [jnp.transpose(p, (0, 3, 1, 2)) for p in pyramid]


# --------------------------------- main ---------------------------------------
if __name__ == "__main__":
    key = jax.random.PRNGKey(0)
    k_img, k_bb, k_fpn = jax.random.split(key, 3)

    # Small deterministic inputs: NCHW like PyTorch.
    imgs = jax.random.normal(k_img, (2, 3, 32, 32), jnp.float32)

    # Synthetic backbone: 3 stages of 3x3 stride-2 conv + ReLU (channels 8/16/32).
    chans = [3, 8, 16, 32]
    bb_keys = jax.random.split(k_bb, 3)
    backbone_params = []
    for i in range(3):
        cin, cout = chans[i], chans[i + 1]
        w = jax.random.normal(bb_keys[i], (cout, cin, 3, 3),
                              jnp.float32) * (1.0 / np.sqrt(9 * cin))
        b = jnp.full((cout,), 0.01, jnp.float32)
        backbone_params.append((w, b, 2, 1, True))
    depth2channels = {0: 8, 1: 16, 2: 32}

    fpn = FeaturePyramidPallas(backbone_params, depth2channels,
                               pyramid_feats=32, key=k_fpn)
    pyramid = fpn(imgs)
    pyramid = [jax.block_until_ready(p) for p in pyramid]

    # Shapes: high -> low resolution, pyramid_feats channels each.
    expected_shapes = [(2, 32, 16, 16), (2, 32, 8, 8), (2, 32, 4, 4)]
    assert [p.shape for p in pyramid] == expected_shapes

    ref = _fpn_ref(fpn, imgs)
    for p, r in zip(pyramid, ref):
        np.testing.assert_allclose(np.asarray(p), np.asarray(r),
                                   rtol=2e-2, atol=2e-2)

    print("KERNEL_OK")
</pallas_src>

<mosaic_0001>
module attributes {stable_mosaic.version = 11 : i64} {
  func.func @kernel(%arg0: i32, %arg1: memref<8x27xbf16, #tpu.memory_space<vmem>>, %arg2: memref<27x256xf32, #tpu.memory_space<vmem>>, %arg3: memref<8x1xf32, #tpu.memory_space<vmem>>, %arg4: memref<8x256xf32, #tpu.memory_space<vmem>>) attributes {dimension_semantics = [#tpu.dimension_semantics<parallel>], iteration_bounds = array<i64: 2>, scalar_prefetch = 0 : i64, scratch_operands = 0 : i64, tpu.core_type = #tpu.core_type<tc>, window_params = [{pipeline_mode = #tpu.pipeline_mode<synchronous>, transform_indices = @transform_0, window_bounds = array<i64: 8, 27>}, {transform_indices = @transform_1, window_bounds = array<i64: 27, 256>}, {pipeline_mode = #tpu.pipeline_mode<synchronous>, transform_indices = @transform_2, window_bounds = array<i64: 8, 1>}, {transform_indices = @transform_3, window_bounds = array<i64: 8, 256>}]} {
    %c0 = arith.constant 0 : index
    %c0_0 = arith.constant 0 : index
    %0 = vector.load %arg1[%c0, %c0_0] : memref<8x27xbf16, #tpu.memory_space<vmem>>, vector<8x27xbf16>
    %c0_1 = arith.constant 0 : index
    %c0_2 = arith.constant 0 : index
    %1 = vector.load %arg2[%c0_1, %c0_2] : memref<27x256xf32, #tpu.memory_space<vmem>>, vector<27x256xf32>
    %2 = arith.truncf %1 : vector<27x256xf32> to vector<27x256xbf16>
    %cst = arith.constant dense<0.000000e+00> : vector<8x256xf32>
    %3 = tpu.matmul %0, %2, %cst {dimension_numbers = #tpu.dot_dimension_numbers<[1], [0], [0], [1], [0, 0, 1, 1], [], []>} : vector<8x27xbf16>, vector<27x256xbf16>, vector<8x256xf32> -> vector<8x256xf32>
    %c0_3 = arith.constant 0 : index
    %c0_4 = arith.constant 0 : index
    %4 = vector.load %arg3[%c0_3, %c0_4] : memref<8x1xf32, #tpu.memory_space<vmem>>, vector<8x1xf32>
    %5 = vector.broadcast %4 : vector<8x1xf32> to vector<8x256xf32>
    %6 = arith.addf %3, %5 : vector<8x256xf32>
    %cst_5 = arith.constant 0.000000e+00 : f32
    %7 = vector.broadcast %cst_5 : f32 to vector<8x256xf32>
    %8 = arith.maximumf %6, %7 : vector<8x256xf32>
    %c0_6 = arith.constant 0 : index
    %c0_7 = arith.constant 0 : index
    %9 = vector.load %arg4[%c0_6, %c0_7] : memref<8x256xf32, #tpu.memory_space<vmem>>, vector<8x256xf32>
    tpu.vector_store %arg4[%c0_6, %c0_7], %8 {strides = array<i32>} : memref<8x256xf32, #tpu.memory_space<vmem>>, vector<8x256xf32>,
    return
  }
  func.func @transform_0(%arg0: i32) -> (i32, i32) {
    %c0_i32 = arith.constant 0 : i32
    %c0_i32_0 = arith.constant 0 : i32
    %c0_i32_1 = arith.constant 0 : i32
    return %c0_i32, %c0_i32_0 : i32, i32
  }
  func.func @transform_1(%arg0: i32) -> (i32, i32) {
    %c0_i32 = arith.constant 0 : i32
    %c0_i32_0 = arith.constant 0 : i32
    return %c0_i32, %arg0 : i32, i32
  }
  func.func @transform_2(%arg0: i32) -> (i32, i32) {
    %c0_i32 = arith.constant 0 : i32
    %c0_i32_0 = arith.constant 0 : i32
    %c0_i32_1 = arith.constant 0 : i32
    return %c0_i32, %c0_i32_0 : i32, i32
  }
  func.func @transform_3(%arg0: i32) -> (i32, i32) {
    %c0_i32 = arith.constant 0 : i32
    %c0_i32_0 = arith.constant 0 : i32
    return %c0_i32, %arg0 : i32, i32
  }
}

module attributes {stable_mosaic.version = 11 : i64} {
  func.func @kernel(%arg0: i32, %arg1: memref<32x8xbf16, #tpu.memory_space<vmem>>, %arg2: memref<8x256xf32, #tpu.memory_space<vmem>>, %arg3: memref<32x1xf32, #tpu.memory_space<vmem>>, %arg4: memref<32x256xf32, #tpu.memory_space<vmem>>) attributes {dimension_semantics = [#tpu.dimension_semantics<parallel>], iteration_bounds = array<i64: 2>, scalar_prefetch = 0 : i64, scratch_operands = 0 : i64, tpu.core_type = #tpu.core_type<tc>, window_params = [{pipeline_mode = #tpu.pipeline_mode<synchronous>, transform_indices = @transform_0, window_bounds = array<i64: 32, 8>}, {transform_indices = @transform_1, window_bounds = array<i64: 8, 256>}, {pipeline_mode = #tpu.pipeline_mode<synchronous>, transform_indices = @transform_2, window_bounds = array<i64: 32, 1>}, {transform_indices = @transform_3, window_bounds = array<i64: 32, 256>}]} {
    %c0 = arith.constant 0 : index
    %c0_0 = arith.constant 0 : index
    %0 = vector.load %arg1[%c0, %c0_0] : memref<32x8xbf16, #tpu.memory_space<vmem>>, vector<32x8xbf16>
    %c0_1 = arith.constant 0 : index
    %c0_2 = arith.constant 0 : index
    %1 = vector.load %arg2[%c0_1, %c0_2] : memref<8x256xf32, #tpu.memory_space<vmem>>, vector<8x256xf32>
    %2 = arith.truncf %1 : vector<8x256xf32> to vector<8x256xbf16>
    %cst = arith.constant dense<0.000000e+00> : vector<32x256xf32>
    %3 = tpu.matmul %0, %2, %cst {dimension_numbers = #tpu.dot_dimension_numbers<[1], [0], [0], [1], [0, 0, 1, 1], [], []>} : vector<32x8xbf16>, vector<8x256xbf16>, vector<32x256xf32> -> vector<32x256xf32>
    %c0_3 = arith.constant 0 : index
    %c0_4 = arith.constant 0 : index
    %4 = vector.load %arg3[%c0_3, %c0_4] : memref<32x1xf32, #tpu.memory_space<vmem>>, vector<32x1xf32>
    %5 = vector.broadcast %4 : vector<32x1xf32> to vector<32x256xf32>
    %6 = arith.addf %3, %5 : vector<32x256xf32>
    %c0_5 = arith.constant 0 : index
    %c0_6 = arith.constant 0 : index
    %7 = vector.load %arg4[%c0_5, %c0_6] : memref<32x256xf32, #tpu.memory_space<vmem>>, vector<32x256xf32>
    tpu.vector_store %arg4[%c0_5, %c0_6], %6 {strides = array<i32>} : memref<32x256xf32, #tpu.memory_space<vmem>>, vector<32x256xf32>,
    return
  }
  func.func @transform_0(%arg0: i32) -> (i32, i32) {
    %c0_i32 = arith.constant 0 : i32
    %c0_i32_0 = arith.constant 0 : i32
    %c0_i32_1 = arith.constant 0 : i32
    return %c0_i32, %c0_i32_0 : i32, i32
  }
  func.func @transform_1(%arg0: i32) -> (i32, i32) {
    %c0_i32 = arith.constant 0 : i32
    %c0_i32_0 = arith.constant 0 : i32
    return %c0_i32, %arg0 : i32, i32
  }
  func.func @transform_2(%arg0: i32) -> (i32, i32) {
    %c0_i32 = arith.constant 0 : i32
    %c0_i32_0 = arith.constant 0 : i32
    %c0_i32_1 = arith.constant 0 : i32
    return %c0_i32, %c0_i32_0 : i32, i32
  }
  func.func @transform_3(%arg0: i32) -> (i32, i32) {
    %c0_i32 = arith.constant 0 : i32
    %c0_i32_0 = arith.constant 0 : i32
    return %c0_i32, %arg0 : i32, i32
  }
}

module attributes {stable_mosaic.version = 11 : i64} {
  func.func @kernel(%arg0: i32, %arg1: memref<16x72xbf16, #tpu.memory_space<vmem>>, %arg2: memref<72x128xf32, #tpu.memory_space<vmem>>, %arg3: memref<16x1xf32, #tpu.memory_space<vmem>>, %arg4: memref<16x128xf32, #tpu.memory_space<vmem>>) attributes {dimension_semantics = [#tpu.dimension_semantics<parallel>], iteration_bounds = array<i64: 1>, scalar_prefetch = 0 : i64, scratch_operands = 0 : i64, tpu.core_type = #tpu.core_type<tc>, window_params = [{pipeline_mode = #tpu.pipeline_mode<synchronous>, transform_indices = @transform_0, window_bounds = array<i64: 16, 72>}, {transform_indices = @transform_1, window_bounds = array<i64: 72, 128>}, {pipeline_mode = #tpu.pipeline_mode<synchronous>, transform_indices = @transform_2, window_bounds = array<i64: 16, 1>}, {transform_indices = @transform_3, window_bounds = array<i64: 16, 128>}]} {
    %c0 = arith.constant 0 : index
    %c0_0 = arith.constant 0 : index
    %0 = vector.load %arg1[%c0, %c0_0] : memref<16x72xbf16, #tpu.memory_space<vmem>>, vector<16x72xbf16>
    %c0_1 = arith.constant 0 : index
    %c0_2 = arith.constant 0 : index
    %1 = vector.load %arg2[%c0_1, %c0_2] : memref<72x128xf32, #tpu.memory_space<vmem>>, vector<72x128xf32>
    %2 = arith.truncf %1 : vector<72x128xf32> to vector<72x128xbf16>
    %cst = arith.constant dense<0.000000e+00> : vector<16x128xf32>
    %3 = tpu.matmul %0, %2, %cst {dimension_numbers = #tpu.dot_dimension_numbers<[1], [0], [0], [1], [0, 0, 1, 1], [], []>} : vector<16x72xbf16>, vector<72x128xbf16>, vector<16x128xf32> -> vector<16x128xf32>
    %c0_3 = arith.constant 0 : index
    %c0_4 = arith.constant 0 : index
    %4 = vector.load %arg3[%c0_3, %c0_4] : memref<16x1xf32, #tpu.memory_space<vmem>>, vector<16x1xf32>
    %5 = vector.broadcast %4 : vector<16x1xf32> to vector<16x128xf32>
    %6 = arith.addf %3, %5 : vector<16x128xf32>
    %cst_5 = arith.constant 0.000000e+00 : f32
    %7 = vector.broadcast %cst_5 : f32 to vector<16x128xf32>
    %8 = arith.maximumf %6, %7 : vector<16x128xf32>
    %c0_6 = arith.constant 0 : index
    %c0_7 = arith.constant 0 : index
    %9 = vector.load %arg4[%c0_6, %c0_7] : memref<16x128xf32, #tpu.memory_space<vmem>>, vector<16x128xf32>
    tpu.vector_store %arg4[%c0_6, %c0_7], %8 {strides = array<i32>} : memref<16x128xf32, #tpu.memory_space<vmem>>, vector<16x128xf32>,
    return
  }
  func.func @transform_0(%arg0: i32) -> (i32, i32) {
    %c0_i32 = arith.constant 0 : i32
    %c0_i32_0 = arith.constant 0 : i32
    %c0_i32_1 = arith.constant 0 : i32
    return %c0_i32, %c0_i32_0 : i32, i32
  }
  func.func @transform_1(%arg0: i32) -> (i32, i32) {
    %c0_i32 = arith.constant 0 : i32
    %c0_i32_0 = arith.constant 0 : i32
    return %c0_i32, %arg0 : i32, i32
  }
  func.func @transform_2(%arg0: i32) -> (i32, i32) {
    %c0_i32 = arith.constant 0 : i32
    %c0_i32_0 = arith.constant 0 : i32
    %c0_i32_1 = arith.constant 0 : i32
    return %c0_i32, %c0_i32_0 : i32, i32
  }
  func.func @transform_3(%arg0: i32) -> (i32, i32) {
    %c0_i32 = arith.constant 0 : i32
    %c0_i32_0 = arith.constant 0 : i32
    return %c0_i32, %arg0 : i32, i32
  }
}

module attributes {stable_mosaic.version = 11 : i64} {
  func.func @kernel(%arg0: i32, %arg1: memref<32x16xbf16, #tpu.memory_space<vmem>>, %arg2: memref<16x128xf32, #tpu.memory_space<vmem>>, %arg3: memref<32x1xf32, #tpu.memory_space<vmem>>, %arg4: memref<32x128xf32, #tpu.memory_space<vmem>>) attributes {dimension_semantics = [#tpu.dimension_semantics<parallel>], iteration_bounds = array<i64: 1>, scalar_prefetch = 0 : i64, scratch_operands = 0 : i64, tpu.core_type = #tpu.core_type<tc>, window_params = [{pipeline_mode = #tpu.pipeline_mode<synchronous>, transform_indices = @transform_0, window_bounds = array<i64: 32, 16>}, {transform_indices = @transform_1, window_bounds = array<i64: 16, 128>}, {pipeline_mode = #tpu.pipeline_mode<synchronous>, transform_indices = @transform_2, window_bounds = array<i64: 32, 1>}, {transform_indices = @transform_3, window_bounds = array<i64: 32, 128>}]} {
    %c0 = arith.constant 0 : index
    %c0_0 = arith.constant 0 : index
    %0 = vector.load %arg1[%c0, %c0_0] : memref<32x16xbf16, #tpu.memory_space<vmem>>, vector<32x16xbf16>
    %c0_1 = arith.constant 0 : index
    %c0_2 = arith.constant 0 : index
    %1 = vector.load %arg2[%c0_1, %c0_2] : memref<16x128xf32, #tpu.memory_space<vmem>>, vector<16x128xf32>
    %2 = arith.truncf %1 : vector<16x128xf32> to vector<16x128xbf16>
    %cst = arith.constant dense<0.000000e+00> : vector<32x128xf32>
    %3 = tpu.matmul %0, %2, %cst {dimension_numbers = #tpu.dot_dimension_numbers<[1], [0], [0], [1], [0, 0, 1, 1], [], []>} : vector<32x16xbf16>, vector<16x128xbf16>, vector<32x128xf32> -> vector<32x128xf32>
    %c0_3 = arith.constant 0 : index
    %c0_4 = arith.constant 0 : index
    %4 = vector.load %arg3[%c0_3, %c0_4] : memref<32x1xf32, #tpu.memory_space<vmem>>, vector<32x1xf32>
    %5 = vector.broadcast %4 : vector<32x1xf32> to vector<32x128xf32>
    %6 = arith.addf %3, %5 : vector<32x128xf32>
    %c0_5 = arith.constant 0 : index
    %c0_6 = arith.constant 0 : index
    %7 = vector.load %arg4[%c0_5, %c0_6] : memref<32x128xf32, #tpu.memory_space<vmem>>, vector<32x128xf32>
    tpu.vector_store %arg4[%c0_5, %c0_6], %6 {strides = array<i32>} : memref<32x128xf32, #tpu.memory_space<vmem>>, vector<32x128xf32>,
    return
  }
  func.func @transform_0(%arg0: i32) -> (i32, i32) {
    %c0_i32 = arith.constant 0 : i32
    %c0_i32_0 = arith.constant 0 : i32
    %c0_i32_1 = arith.constant 0 : i32
    return %c0_i32, %c0_i32_0 : i32, i32
  }
  func.func @transform_1(%arg0: i32) -> (i32, i32) {
    %c0_i32 = arith.constant 0 : i32
    %c0_i32_0 = arith.constant 0 : i32
    return %c0_i32, %arg0 : i32, i32
  }
  func.func @transform_2(%arg0: i32) -> (i32, i32) {
    %c0_i32 = arith.constant 0 : i32
    %c0_i32_0 = arith.constant 0 : i32
    %c0_i32_1 = arith.constant 0 : i32
    return %c0_i32, %c0_i32_0 : i32, i32
  }
  func.func @transform_3(%arg0: i32) -> (i32, i32) {
    %c0_i32 = arith.constant 0 : i32
    %c0_i32_0 = arith.constant 0 : i32
    return %c0_i32, %arg0 : i32, i32
  }
}

module attributes {stable_mosaic.version = 11 : i64} {
  func.func @kernel(%arg0: i32, %arg1: memref<32x144xbf16, #tpu.memory_space<vmem>>, %arg2: memref<144x32xf32, #tpu.memory_space<vmem>>, %arg3: memref<32x1xf32, #tpu.memory_space<vmem>>, %arg4: memref<32x32xf32, #tpu.memory_space<vmem>>) attributes {dimension_semantics = [#tpu.dimension_semantics<parallel>], iteration_bounds = array<i64: 1>, scalar_prefetch = 0 : i64, scratch_operands = 0 : i64, tpu.core_type = #tpu.core_type<tc>, window_params = [{pipeline_mode = #tpu.pipeline_mode<synchronous>, transform_indices = @transform_0, window_bounds = array<i64: 32, 144>}, {transform_indices = @transform_1, window_bounds = array<i64: 144, 32>}, {pipeline_mode = #tpu.pipeline_mode<synchronous>, transform_indices = @transform_2, window_bounds = array<i64: 32, 1>}, {transform_indices = @transform_3, window_bounds = array<i64: 32, 32>}]} {
    %c0 = arith.constant 0 : index
    %c0_0 = arith.constant 0 : index
    %0 = vector.load %arg1[%c0, %c0_0] : memref<32x144xbf16, #tpu.memory_space<vmem>>, vector<32x144xbf16>
    %c0_1 = arith.constant 0 : index
    %c0_2 = arith.constant 0 : index
    %1 = vector.load %arg2[%c0_1, %c0_2] : memref<144x32xf32, #tpu.memory_space<vmem>>, vector<144x32xf32>
    %2 = arith.truncf %1 : vector<144x32xf32> to vector<144x32xbf16>
    %cst = arith.constant dense<0.000000e+00> : vector<32x32xf32>
    %3 = tpu.matmul %0, %2, %cst {dimension_numbers = #tpu.dot_dimension_numbers<[1], [0], [0], [1], [0, 0, 1, 1], [], []>} : vector<32x144xbf16>, vector<144x32xbf16>, vector<32x32xf32> -> vector<32x32xf32>
    %c0_3 = arith.constant 0 : index
    %c0_4 = arith.constant 0 : index
    %4 = vector.load %arg3[%c0_3, %c0_4] : memref<32x1xf32, #tpu.memory_space<vmem>>, vector<32x1xf32>
    %5 = vector.broadcast %4 : vector<32x1xf32> to vector<32x32xf32>
    %6 = arith.addf %3, %5 : vector<32x32xf32>
    %cst_5 = arith.constant 0.000000e+00 : f32
    %7 = vector.broadcast %cst_5 : f32 to vector<32x32xf32>
    %8 = arith.maximumf %6, %7 : vector<32x32xf32>
    %c0_6 = arith.constant 0 : index
    %c0_7 = arith.constant 0 : index
    %9 = vector.load %arg4[%c0_6, %c0_7] : memref<32x32xf32, #tpu.memory_space<vmem>>, vector<32x32xf32>
    tpu.vector_store %arg4[%c0_6, %c0_7], %8 {strides = array<i32>} : memref<32x32xf32, #tpu.memory_space<vmem>>, vector<32x32xf32>,
    return
  }
  func.func @transform_0(%arg0: i32) -> (i32, i32) {
    %c0_i32 = arith.constant 0 : i32
    %c0_i32_0 = arith.constant 0 : i32
    %c0_i32_1 = arith.constant 0 : i32
    return %c0_i32, %c0_i32_0 : i32, i32
  }
  func.func @transform_1(%arg0: i32) -> (i32, i32) {
    %c0_i32 = arith.constant 0 : i32
    %c0_i32_0 = arith.constant 0 : i32
    return %c0_i32, %arg0 : i32, i32
  }
  func.func @transform_2(%arg0: i32) -> (i32, i32) {
    %c0_i32 = arith.constant 0 : i32
    %c0_i32_0 = arith.constant 0 : i32
    %c0_i32_1 = arith.constant 0 : i32
    return %c0_i32, %c0_i32_0 : i32, i32
  }
  func.func @transform_3(%arg0: i32) -> (i32, i32) {
    %c0_i32 = arith.constant 0 : i32
    %c0_i32_0 = arith.constant 0 : i32
    return %c0_i32, %arg0 : i32, i32
  }
}

module attributes {stable_mosaic.version = 11 : i64} {
  func.func @kernel(%arg0: i32, %arg1: memref<32x32xbf16, #tpu.memory_space<vmem>>, %arg2: memref<32x32xf32, #tpu.memory_space<vmem>>, %arg3: memref<32x1xf32, #tpu.memory_space<vmem>>, %arg4: memref<32x32xf32, #tpu.memory_space<vmem>>) attributes {dimension_semantics = [#tpu.dimension_semantics<parallel>], iteration_bounds = array<i64: 1>, scalar_prefetch = 0 : i64, scratch_operands = 0 : i64, tpu.core_type = #tpu.core_type<tc>, window_params = [{pipeline_mode = #tpu.pipeline_mode<synchronous>, transform_indices = @transform_0, window_bounds = array<i64: 32, 32>}, {transform_indices = @transform_1, window_bounds = array<i64: 32, 32>}, {pipeline_mode = #tpu.pipeline_mode<synchronous>, transform_indices = @transform_2, window_bounds = array<i64: 32, 1>}, {transform_indices = @transform_3, window_bounds = array<i64: 32, 32>}]} {
    %c0 = arith.constant 0 : index
    %c0_0 = arith.constant 0 : index
    %0 = vector.load %arg1[%c0, %c0_0] : memref<32x32xbf16, #tpu.memory_space<vmem>>, vector<32x32xbf16>
    %c0_1 = arith.constant 0 : index
    %c0_2 = arith.constant 0 : index
    %1 = vector.load %arg2[%c0_1, %c0_2] : memref<32x32xf32, #tpu.memory_space<vmem>>, vector<32x32xf32>
    %2 = arith.truncf %1 : vector<32x32xf32> to vector<32x32xbf16>
    %cst = arith.constant dense<0.000000e+00> : vector<32x32xf32>
    %3 = tpu.matmul %0, %2, %cst {dimension_numbers = #tpu.dot_dimension_numbers<[1], [0], [0], [1], [0, 0, 1, 1], [], []>} : vector<32x32xbf16>, vector<32x32xbf16>, vector<32x32xf32> -> vector<32x32xf32>
    %c0_3 = arith.constant 0 : index
    %c0_4 = arith.constant 0 : index
    %4 = vector.load %arg3[%c0_3, %c0_4] : memref<32x1xf32, #tpu.memory_space<vmem>>, vector<32x1xf32>
    %5 = vector.broadcast %4 : vector<32x1xf32> to vector<32x32xf32>
    %6 = arith.addf %3, %5 : vector<32x32xf32>
    %c0_5 = arith.constant 0 : index
    %c0_6 = arith.constant 0 : index
    %7 = vector.load %arg4[%c0_5, %c0_6] : memref<32x32xf32, #tpu.memory_space<vmem>>, vector<32x32xf32>
    tpu.vector_store %arg4[%c0_5, %c0_6], %6 {strides = array<i32>} : memref<32x32xf32, #tpu.memory_space<vmem>>, vector<32x32xf32>,
    return
  }
  func.func @transform_0(%arg0: i32) -> (i32, i32) {
    %c0_i32 = arith.constant 0 : i32
    %c0_i32_0 = arith.constant 0 : i32
    %c0_i32_1 = arith.constant 0 : i32
    return %c0_i32, %c0_i32_0 : i32, i32
  }
  func.func @transform_1(%arg0: i32) -> (i32, i32) {
    %c0_i32 = arith.constant 0 : i32
    %c0_i32_0 = arith.constant 0 : i32
    return %c0_i32, %arg0 : i32, i32
  }
  func.func @transform_2(%arg0: i32) -> (i32, i32) {
    %c0_i32 = arith.constant 0 : i32
    %c0_i32_0 = arith.constant 0 : i32
    %c0_i32_1 = arith.constant 0 : i32
    return %c0_i32, %c0_i32_0 : i32, i32
  }
  func.func @transform_3(%arg0: i32) -> (i32, i32) {
    %c0_i32 = arith.constant 0 : i32
    %c0_i32_0 = arith.constant 0 : i32
    return %c0_i32, %arg0 : i32, i32
  }
}

module attributes {stable_mosaic.version = 11 : i64} {
  func.func @_up_kernel(%arg0: i32, %arg1: memref<128x4xf32, #tpu.memory_space<vmem>>, %arg2: memref<4x8xbf16, #tpu.memory_space<vmem>>, %arg3: memref<128x8xf32, #tpu.memory_space<vmem>>) attributes {dimension_semantics = [#tpu.dimension_semantics<parallel>], iteration_bounds = array<i64: 2>, scalar_prefetch = 0 : i64, scratch_operands = 0 : i64, tpu.core_type = #tpu.core_type<tc>, window_params = [{transform_indices = @transform_0, window_bounds = array<i64: 128, 4>}, {pipeline_mode = #tpu.pipeline_mode<synchronous>, transform_indices = @transform_1, window_bounds = array<i64: 4, 8>}, {transform_indices = @transform_2, window_bounds = array<i64: 128, 8>}]} {
    %c0 = arith.constant 0 : index
    %c0_0 = arith.constant 0 : index
    %0 = vector.load %arg1[%c0, %c0_0] : memref<128x4xf32, #tpu.memory_space<vmem>>, vector<128x4xf32>
    %1 = arith.truncf %0 : vector<128x4xf32> to vector<128x4xbf16>
    %c0_1 = arith.constant 0 : index
    %c0_2 = arith.constant 0 : index
    %2 = vector.load %arg2[%c0_1, %c0_2] : memref<4x8xbf16, #tpu.memory_space<vmem>>, vector<4x8xbf16>
    %cst = arith.constant dense<0.000000e+00> : vector<128x8xf32>
    %3 = tpu.matmul %1, %2, %cst {dimension_numbers = #tpu.dot_dimension_numbers<[1], [0], [0], [1], [0, 0, 1, 1], [], []>} : vector<128x4xbf16>, vector<4x8xbf16>, vector<128x8xf32> -> vector<128x8xf32>
    %c0_3 = arith.constant 0 : index
    %c0_4 = arith.constant 0 : index
    %4 = vector.load %arg3[%c0_3, %c0_4] : memref<128x8xf32, #tpu.memory_space<vmem>>, vector<128x8xf32>
    tpu.vector_store %arg3[%c0_3, %c0_4], %3 {strides = array<i32>} : memref<128x8xf32, #tpu.memory_space<vmem>>, vector<128x8xf32>,
    return
  }
  func.func @transform_0(%arg0: i32) -> (i32, i32) {
    %c0_i32 = arith.constant 0 : i32
    %c0_i32_0 = arith.constant 0 : i32
    return %arg0, %c0_i32 : i32, i32
  }
  func.func @transform_1(%arg0: i32) -> (i32, i32) {
    %c0_i32 = arith.constant 0 : i32
    %c0_i32_0 = arith.constant 0 : i32
    %c0_i32_1 = arith.constant 0 : i32
    return %c0_i32, %c0_i32_0 : i32, i32
  }
  func.func @transform_2(%arg0: i32) -> (i32, i32) {
    %c0_i32 = arith.constant 0 : i32
    %c0_i32_0 = arith.constant 0 : i32
    return %arg0, %c0_i32 : i32, i32
  }
}

module attributes {stable_mosaic.version = 11 : i64} {
  func.func @_up_add_kernel(%arg0: i32, %arg1: memref<256x4xf32, #tpu.memory_space<vmem>>, %arg2: memref<4x8xbf16, #tpu.memory_space<vmem>>, %arg3: memref<256x8xf32, #tpu.memory_space<vmem>>, %arg4: memref<256x8xf32, #tpu.memory_space<vmem>>) attributes {dimension_semantics = [#tpu.dimension_semantics<parallel>], iteration_bounds = array<i64: 2>, scalar_prefetch = 0 : i64, scratch_operands = 0 : i64, tpu.core_type = #tpu.core_type<tc>, window_params = [{transform_indices = @transform_0, window_bounds = array<i64: 256, 4>}, {pipeline_mode = #tpu.pipeline_mode<synchronous>, transform_indices = @transform_1, window_bounds = array<i64: 4, 8>}, {transform_indices = @transform_2, window_bounds = array<i64: 256, 8>}, {transform_indices = @transform_3, window_bounds = array<i64: 256, 8>}]} {
    %c0 = arith.constant 0 : index
    %c0_0 = arith.constant 0 : index
    %0 = vector.load %arg1[%c0, %c0_0] : memref<256x4xf32, #tpu.memory_space<vmem>>, vector<256x4xf32>
    %1 = arith.truncf %0 : vector<256x4xf32> to vector<256x4xbf16>
    %c0_1 = arith.constant 0 : index
    %c0_2 = arith.constant 0 : index
    %2 = vector.load %arg2[%c0_1, %c0_2] : memref<4x8xbf16, #tpu.memory_space<vmem>>, vector<4x8xbf16>
    %cst = arith.constant dense<0.000000e+00> : vector<256x8xf32>
    %3 = tpu.matmul %1, %2, %cst {dimension_numbers = #tpu.dot_dimension_numbers<[1], [0], [0], [1], [0, 0, 1, 1], [], []>} : vector<256x4xbf16>, vector<4x8xbf16>, vector<256x8xf32> -> vector<256x8xf32>
    %c0_3 = arith.constant 0 : index
    %c0_4 = arith.constant 0 : index
    %4 = vector.load %arg3[%c0_3, %c0_4] : memref<256x8xf32, #tpu.memory_space<vmem>>, vector<256x8xf32>
    %5 = arith.addf %3, %4 : vector<256x8xf32>
    %c0_5 = arith.constant 0 : index
    %c0_6 = arith.constant 0 : index
    %6 = vector.load %arg4[%c0_5, %c0_6] : memref<256x8xf32, #tpu.memory_space<vmem>>, vector<256x8xf32>
    tpu.vector_store %arg4[%c0_5, %c0_6], %5 {strides = array<i32>} : memref<256x8xf32, #tpu.memory_space<vmem>>, vector<256x8xf32>,
    return
  }
  func.func @transform_0(%arg0: i32) -> (i32, i32) {
    %c0_i32 = arith.constant 0 : i32
    %c0_i32_0 = arith.constant 0 : i32
    return %arg0, %c0_i32 : i32, i32
  }
  func.func @transform_1(%arg0: i32) -> (i32, i32) {
    %c0_i32 = arith.constant 0 : i32
    %c0_i32_0 = arith.constant 0 : i32
    %c0_i32_1 = arith.constant 0 : i32
    return %c0_i32, %c0_i32_0 : i32, i32
  }
  func.func @transform_2(%arg0: i32) -> (i32, i32) {
    %c0_i32 = arith.constant 0 : i32
    %c0_i32_0 = arith.constant 0 : i32
    return %arg0, %c0_i32 : i32, i32
  }
  func.func @transform_3(%arg0: i32) -> (i32, i32) {
    %c0_i32 = arith.constant 0 : i32
    %c0_i32_0 = arith.constant 0 : i32
    return %arg0, %c0_i32 : i32, i32
  }
}

module attributes {stable_mosaic.version = 11 : i64} {
  func.func @_up_kernel(%arg0: i32, %arg1: memref<256x8xf32, #tpu.memory_space<vmem>>, %arg2: memref<8x16xbf16, #tpu.memory_space<vmem>>, %arg3: memref<256x16xf32, #tpu.memory_space<vmem>>) attributes {dimension_semantics = [#tpu.dimension_semantics<parallel>], iteration_bounds = array<i64: 2>, scalar_prefetch = 0 : i64, scratch_operands = 0 : i64, tpu.core_type = #tpu.core_type<tc>, window_params = [{transform_indices = @transform_0, window_bounds = array<i64: 256, 8>}, {pipeline_mode = #tpu.pipeline_mode<synchronous>, transform_indices = @transform_1, window_bounds = array<i64: 8, 16>}, {transform_indices = @transform_2, window_bounds = array<i64: 256, 16>}]} {
    %c0 = arith.constant 0 : index
    %c0_0 = arith.constant 0 : index
    %0 = vector.load %arg1[%c0, %c0_0] : memref<256x8xf32, #tpu.memory_space<vmem>>, vector<256x8xf32>
    %1 = arith.truncf %0 : vector<256x8xf32> to vector<256x8xbf16>
    %c0_1 = arith.constant 0 : index
    %c0_2 = arith.constant 0 : index
    %2 = vector.load %arg2[%c0_1, %c0_2] : memref<8x16xbf16, #tpu.memory_space<vmem>>, vector<8x16xbf16>
    %cst = arith.constant dense<0.000000e+00> : vector<256x16xf32>
    %3 = tpu.matmul %1, %2, %cst {dimension_numbers = #tpu.dot_dimension_numbers<[1], [0], [0], [1], [0, 0, 1, 1], [], []>} : vector<256x8xbf16>, vector<8x16xbf16>, vector<256x16xf32> -> vector<256x16xf32>
    %c0_3 = arith.constant 0 : index
    %c0_4 = arith.constant 0 : index
    %4 = vector.load %arg3[%c0_3, %c0_4] : memref<256x16xf32, #tpu.memory_space<vmem>>, vector<256x16xf32>
    tpu.vector_store %arg3[%c0_3, %c0_4], %3 {strides = array<i32>} : memref<256x16xf32, #tpu.memory_space<vmem>>, vector<256x16xf32>,
    return
  }
  func.func @transform_0(%arg0: i32) -> (i32, i32) {
    %c0_i32 = arith.constant 0 : i32
    %c0_i32_0 = arith.constant 0 : i32
    return %arg0, %c0_i32 : i32, i32
  }
  func.func @transform_1(%arg0: i32) -> (i32, i32) {
    %c0_i32 = arith.constant 0 : i32
    %c0_i32_0 = arith.constant 0 : i32
    %c0_i32_1 = arith.constant 0 : i32
    return %c0_i32, %c0_i32_0 : i32, i32
  }
  func.func @transform_2(%arg0: i32) -> (i32, i32) {
    %c0_i32 = arith.constant 0 : i32
    %c0_i32_0 = arith.constant 0 : i32
    return %arg0, %c0_i32 : i32, i32
  }
}

module attributes {stable_mosaic.version = 11 : i64} {
  func.func @_up_add_kernel(%arg0: i32, %arg1: memref<512x8xf32, #tpu.memory_space<vmem>>, %arg2: memref<8x16xbf16, #tpu.memory_space<vmem>>, %arg3: memref<512x16xf32, #tpu.memory_space<vmem>>, %arg4: memref<512x16xf32, #tpu.memory_space<vmem>>) attributes {dimension_semantics = [#tpu.dimension_semantics<parallel>], iteration_bounds = array<i64: 2>, scalar_prefetch = 0 : i64, scratch_operands = 0 : i64, tpu.core_type = #tpu.core_type<tc>, window_params = [{transform_indices = @transform_0, window_bounds = array<i64: 512, 8>}, {pipeline_mode = #tpu.pipeline_mode<synchronous>, transform_indices = @transform_1, window_bounds = array<i64: 8, 16>}, {transform_indices = @transform_2, window_bounds = array<i64: 512, 16>}, {transform_indices = @transform_3, window_bounds = array<i64: 512, 16>}]} {
    %c0 = arith.constant 0 : index
    %c0_0 = arith.constant 0 : index
    %0 = vector.load %arg1[%c0, %c0_0] : memref<512x8xf32, #tpu.memory_space<vmem>>, vector<512x8xf32>
    %1 = arith.truncf %0 : vector<512x8xf32> to vector<512x8xbf16>
    %c0_1 = arith.constant 0 : index
    %c0_2 = arith.constant 0 : index
    %2 = vector.load %arg2[%c0_1, %c0_2] : memref<8x16xbf16, #tpu.memory_space<vmem>>, vector<8x16xbf16>
    %cst = arith.constant dense<0.000000e+00> : vector<512x16xf32>
    %3 = tpu.matmul %1, %2, %cst {dimension_numbers = #tpu.dot_dimension_numbers<[1], [0], [0], [1], [0, 0, 1, 1], [], []>} : vector<512x8xbf16>, vector<8x16xbf16>, vector<512x16xf32> -> vector<512x16xf32>
    %c0_3 = arith.constant 0 : index
    %c0_4 = arith.constant 0 : index
    %4 = vector.load %arg3[%c0_3, %c0_4] : memref<512x16xf32, #tpu.memory_space<vmem>>, vector<512x16xf32>
    %5 = arith.addf %3, %4 : vector<512x16xf32>
    %c0_5 = arith.constant 0 : index
    %c0_6 = arith.constant 0 : index
    %6 = vector.load %arg4[%c0_5, %c0_6] : memref<512x16xf32, #tpu.memory_space<vmem>>, vector<512x16xf32>
    tpu.vector_store %arg4[%c0_5, %c0_6], %5 {strides = array<i32>} : memref<512x16xf32, #tpu.memory_space<vmem>>, vector<512x16xf32>,
    return
  }
  func.func @transform_0(%arg0: i32) -> (i32, i32) {
    %c0_i32 = arith.constant 0 : i32
    %c0_i32_0 = arith.constant 0 : i32
    return %arg0, %c0_i32 : i32, i32
  }
  func.func @transform_1(%arg0: i32) -> (i32, i32) {
    %c0_i32 = arith.constant 0 : i32
    %c0_i32_0 = arith.constant 0 : i32
    %c0_i32_1 = arith.constant 0 : i32
    return %c0_i32, %c0_i32_0 : i32, i32
  }
  func.func @transform_2(%arg0: i32) -> (i32, i32) {
    %c0_i32 = arith.constant 0 : i32
    %c0_i32_0 = arith.constant 0 : i32
    return %arg0, %c0_i32 : i32, i32
  }
  func.func @transform_3(%arg0: i32) -> (i32, i32) {
    %c0_i32 = arith.constant 0 : i32
    %c0_i32_0 = arith.constant 0 : i32
    return %arg0, %c0_i32 : i32, i32
  }
}

module attributes {stable_mosaic.version = 11 : i64} {
  func.func @kernel(%arg0: i32, %arg1: memref<32x288xbf16, #tpu.memory_space<vmem>>, %arg2: memref<288x32xf32, #tpu.memory_space<vmem>>, %arg3: memref<32x1xf32, #tpu.memory_space<vmem>>, %arg4: memref<32x32xf32, #tpu.memory_space<vmem>>) attributes {dimension_semantics = [#tpu.dimension_semantics<parallel>], iteration_bounds = array<i64: 1>, scalar_prefetch = 0 : i64, scratch_operands = 0 : i64, tpu.core_type = #tpu.core_type<tc>, window_params = [{pipeline_mode = #tpu.pipeline_mode<synchronous>, transform_indices = @transform_0, window_bounds = array<i64: 32, 288>}, {transform_indices = @transform_1, window_bounds = array<i64: 288, 32>}, {pipeline_mode = #tpu.pipeline_mode<synchronous>, transform_indices = @transform_2, window_bounds = array<i64: 32, 1>}, {transform_indices = @transform_3, window_bounds = array<i64: 32, 32>}]} {
    %c0 = arith.constant 0 : index
    %c0_0 = arith.constant 0 : index
    %0 = vector.load %arg1[%c0, %c0_0] : memref<32x288xbf16, #tpu.memory_space<vmem>>, vector<32x288xbf16>
    %c0_1 = arith.constant 0 : index
    %c0_2 = arith.constant 0 : index
    %1 = vector.load %arg2[%c0_1, %c0_2] : memref<288x32xf32, #tpu.memory_space<vmem>>, vector<288x32xf32>
    %2 = arith.truncf %1 : vector<288x32xf32> to vector<288x32xbf16>
    %cst = arith.constant dense<0.000000e+00> : vector<32x32xf32>
    %3 = tpu.matmul %0, %2, %cst {dimension_numbers = #tpu.dot_dimension_numbers<[1], [0], [0], [1], [0, 0, 1, 1], [], []>} : vector<32x288xbf16>, vector<288x32xbf16>, vector<32x32xf32> -> vector<32x32xf32>
    %c0_3 = arith.constant 0 : index
    %c0_4 = arith.constant 0 : index
    %4 = vector.load %arg3[%c0_3, %c0_4] : memref<32x1xf32, #tpu.memory_space<vmem>>, vector<32x1xf32>
    %5 = vector.broadcast %4 : vector<32x1xf32> to vector<32x32xf32>
    %6 = arith.addf %3, %5 : vector<32x32xf32>
    %c0_5 = arith.constant 0 : index
    %c0_6 = arith.constant 0 : index
    %7 = vector.load %arg4[%c0_5, %c0_6] : memref<32x32xf32, #tpu.memory_space<vmem>>, vector<32x32xf32>
    tpu.vector_store %arg4[%c0_5, %c0_6], %6 {strides = array<i32>} : memref<32x32xf32, #tpu.memory_space<vmem>>, vector<32x32xf32>,
    return
  }
  func.func @transform_0(%arg0: i32) -> (i32, i32) {
    %c0_i32 = arith.constant 0 : i32
    %c0_i32_0 = arith.constant 0 : i32
    %c0_i32_1 = arith.constant 0 : i32
    return %c0_i32, %c0_i32_0 : i32, i32
  }
  func.func @transform_1(%arg0: i32) -> (i32, i32) {
    %c0_i32 = arith.constant 0 : i32
    %c0_i32_0 = arith.constant 0 : i32
    return %c0_i32, %arg0 : i32, i32
  }
  func.func @transform_2(%arg0: i32) -> (i32, i32) {
    %c0_i32 = arith.constant 0 : i32
    %c0_i32_0 = arith.constant 0 : i32
    %c0_i32_1 = arith.constant 0 : i32
    return %c0_i32, %c0_i32_0 : i32, i32
  }
  func.func @transform_3(%arg0: i32) -> (i32, i32) {
    %c0_i32 = arith.constant 0 : i32
    %c0_i32_0 = arith.constant 0 : i32
    return %c0_i32, %arg0 : i32, i32
  }
}

module attributes {stable_mosaic.version = 11 : i64} {
  func.func @kernel(%arg0: i32, %arg1: memref<32x288xbf16, #tpu.memory_space<vmem>>, %arg2: memref<288x128xf32, #tpu.memory_space<vmem>>, %arg3: memref<32x1xf32, #tpu.memory_space<vmem>>, %arg4: memref<32x128xf32, #tpu.memory_space<vmem>>) attributes {dimension_semantics = [#tpu.dimension_semantics<parallel>], iteration_bounds = array<i64: 1>, scalar_prefetch = 0 : i64, scratch_operands = 0 : i64, tpu.core_type = #tpu.core_type<tc>, window_params = [{pipeline_mode = #tpu.pipeline_mode<synchronous>, transform_indices = @transform_0, window_bounds = array<i64: 32, 288>}, {transform_indices = @transform_1, window_bounds = array<i64: 288, 128>}, {pipeline_mode = #tpu.pipeline_mode<synchronous>, transform_indices = @transform_2, window_bounds = array<i64: 32, 1>}, {transform_indices = @transform_3, window_bounds = array<i64: 32, 128>}]} {
    %c0 = arith.constant 0 : index
    %c0_0 = arith.constant 0 : index
    %0 = vector.load %arg1[%c0, %c0_0] : memref<32x288xbf16, #tpu.memory_space<vmem>>, vector<32x288xbf16>
    %c0_1 = arith.constant 0 : index
    %c0_2 = arith.constant 0 : index
    %1 = vector.load %arg2[%c0_1, %c0_2] : memref<288x128xf32, #tpu.memory_space<vmem>>, vector<288x128xf32>
    %2 = arith.truncf %1 : vector<288x128xf32> to vector<288x128xbf16>
    %cst = arith.constant dense<0.000000e+00> : vector<32x128xf32>
    %3 = tpu.matmul %0, %2, %cst {dimension_numbers = #tpu.dot_dimension_numbers<[1], [0], [0], [1], [0, 0, 1, 1], [], []>} : vector<32x288xbf16>, vector<288x128xbf16>, vector<32x128xf32> -> vector<32x128xf32>
    %c0_3 = arith.constant 0 : index
    %c0_4 = arith.constant 0 : index
    %4 = vector.load %arg3[%c0_3, %c0_4] : memref<32x1xf32, #tpu.memory_space<vmem>>, vector<32x1xf32>
    %5 = vector.broadcast %4 : vector<32x1xf32> to vector<32x128xf32>
    %6 = arith.addf %3, %5 : vector<32x128xf32>
    %c0_5 = arith.constant 0 : index
    %c0_6 = arith.constant 0 : index
    %7 = vector.load %arg4[%c0_5, %c0_6] : memref<32x128xf32, #tpu.memory_space<vmem>>, vector<32x128xf32>
    tpu.vector_store %arg4[%c0_5, %c0_6], %6 {strides = array<i32>} : memref<32x128xf32, #tpu.memory_space<vmem>>, vector<32x128xf32>,
    return
  }
  func.func @transform_0(%arg0: i32) -> (i32, i32) {
    %c0_i32 = arith.constant 0 : i32
    %c0_i32_0 = arith.constant 0 : i32
    %c0_i32_1 = arith.constant 0 : i32
    return %c0_i32, %c0_i32_0 : i32, i32
  }
  func.func @transform_1(%arg0: i32) -> (i32, i32) {
    %c0_i32 = arith.constant 0 : i32
    %c0_i32_0 = arith.constant 0 : i32
    return %c0_i32, %arg0 : i32, i32
  }
  func.func @transform_2(%arg0: i32) -> (i32, i32) {
    %c0_i32 = arith.constant 0 : i32
    %c0_i32_0 = arith.constant 0 : i32
    %c0_i32_1 = arith.constant 0 : i32
    return %c0_i32, %c0_i32_0 : i32, i32
  }
  func.func @transform_3(%arg0: i32) -> (i32, i32) {
    %c0_i32 = arith.constant 0 : i32
    %c0_i32_0 = arith.constant 0 : i32
    return %c0_i32, %arg0 : i32, i32
  }
}

module attributes {stable_mosaic.version = 11 : i64} {
  func.func @kernel(%arg0: i32, %arg1: memref<32x288xbf16, #tpu.memory_space<vmem>>, %arg2: memref<288x256xf32, #tpu.memory_space<vmem>>, %arg3: memref<32x1xf32, #tpu.memory_space<vmem>>, %arg4: memref<32x256xf32, #tpu.memory_space<vmem>>) attributes {dimension_semantics = [#tpu.dimension_semantics<parallel>], iteration_bounds = array<i64: 2>, scalar_prefetch = 0 : i64, scratch_operands = 0 : i64, tpu.core_type = #tpu.core_type<tc>, window_params = [{pipeline_mode = #tpu.pipeline_mode<synchronous>, transform_indices = @transform_0, window_bounds = array<i64: 32, 288>}, {transform_indices = @transform_1, window_bounds = array<i64: 288, 256>}, {pipeline_mode = #tpu.pipeline_mode<synchronous>, transform_indices = @transform_2, window_bounds = array<i64: 32, 1>}, {transform_indices = @transform_3, window_bounds = array<i64: 32, 256>}]} {
    %c0 = arith.constant 0 : index
    %c0_0 = arith.constant 0 : index
    %0 = vector.load %arg1[%c0, %c0_0] : memref<32x288xbf16, #tpu.memory_space<vmem>>, vector<32x288xbf16>
    %c0_1 = arith.constant 0 : index
    %c0_2 = arith.constant 0 : index
    %1 = vector.load %arg2[%c0_1, %c0_2] : memref<288x256xf32, #tpu.memory_space<vmem>>, vector<288x256xf32>
    %2 = arith.truncf %1 : vector<288x256xf32> to vector<288x256xbf16>
    %cst = arith.constant dense<0.000000e+00> : vector<32x256xf32>
    %3 = tpu.matmul %0, %2, %cst {dimension_numbers = #tpu.dot_dimension_numbers<[1], [0], [0], [1], [0, 0, 1, 1], [], []>} : vector<32x288xbf16>, vector<288x256xbf16>, vector<32x256xf32> -> vector<32x256xf32>
    %c0_3 = arith.constant 0 : index
    %c0_4 = arith.constant 0 : index
    %4 = vector.load %arg3[%c0_3, %c0_4] : memref<32x1xf32, #tpu.memory_space<vmem>>, vector<32x1xf32>
    %5 = vector.broadcast %4 : vector<32x1xf32> to vector<32x256xf32>
    %6 = arith.addf %3, %5 : vector<32x256xf32>
    %c0_5 = arith.constant 0 : index
    %c0_6 = arith.constant 0 : index
    %7 = vector.load %arg4[%c0_5, %c0_6] : memref<32x256xf32, #tpu.memory_space<vmem>>, vector<32x256xf32>
    tpu.vector_store %arg4[%c0_5, %c0_6], %6 {strides = array<i32>} : memref<32x256xf32, #tpu.memory_space<vmem>>, vector<32x256xf32>,
    return
  }
  func.func @transform_0(%arg0: i32) -> (i32, i32) {
    %c0_i32 = arith.constant 0 : i32
    %c0_i32_0 = arith.constant 0 : i32
    %c0_i32_1 = arith.constant 0 : i32
    return %c0_i32, %c0_i32_0 : i32, i32
  }
  func.func @transform_1(%arg0: i32) -> (i32, i32) {
    %c0_i32 = arith.constant 0 : i32
    %c0_i32_0 = arith.constant 0 : i32
    return %c0_i32, %arg0 : i32, i32
  }
  func.func @transform_2(%arg0: i32) -> (i32, i32) {
    %c0_i32 = arith.constant 0 : i32
    %c0_i32_0 = arith.constant 0 : i32
    %c0_i32_1 = arith.constant 0 : i32
    return %c0_i32, %c0_i32_0 : i32, i32
  }
  func.func @transform_3(%arg0: i32) -> (i32, i32) {
    %c0_i32 = arith.constant 0 : i32
    %c0_i32_0 = arith.constant 0 : i32
    return %c0_i32, %arg0 : i32, i32
  }
}

</mosaic_0001>

<llo_original>
// kernel: _forward.13
$region0: #{_forward.13}
  #allocation0 [shape = 'u32[]', space=smem, size = 0x4, offset = 0x4, fixed_abs, tag = 'smem constant byte address 0x4 - core index']
  #allocation1 [shape = 'u32[72,128]{1,0:T(1,128)}', space=vmem, size = 0x9000, scoped, tag = 'internal scratch']
  %s0 = inlined_call_operand.hbm [shape: bf16[8,27], index: 0, kind: input, shape index: {}]
  %s1 = inlined_call_operand.vmem [shape: f32[27,512], index: 1, kind: input, shape index: {}]
  %s2 = inlined_call_operand.vmem [shape: f32[8,1], index: 2, kind: input, shape index: {}]
  %s3 = inlined_call_operand.vmem [shape: f32[8,512], index: 3, kind: output, shape index: {}]
  %s4 = sld [smem:[#allocation0]]
  $region72: #{_forward.13} parent=0
    _
  %s6 = ssub.s32 1, %s4
  %s7 = scalar_select 0, %s6, %s4
  $region1: #{_forward.13} parent=0
    #allocation2 [shape = 'u8[2048]{0}', space=vmem, size = 0x800, scoped, tag = 'input window, operand 0, single buffered']
    #allocation3 [shape = 's32[2]{0}', space=sflag, size = 0x8, scoped, tag = 'scoped memory for _forward.13']
    #allocation4 [shape = 'u8[65536]{0}', space=vmem, size = 0x10000, scoped, tag = 'input window, operand 1']
    %8 = vsyncpa [#allocation3], 0
    loop: start=0, step=1, limit=4
    $region2: #{_forward.13} parent=1 // loop_pre_header
      _
    $region3: #{_forward.13} parent=1 // loop_header
      %s10 = sphi 0, %s14
      %p11 = scmp.ge.s32.totalorder %s10, 4
      %s18 = sphi 0, %s18
      %s20 = sphi 0, %s18
      %s21 = sphi 0, %s20
      %s35 = sphi 0, %s21
      %s41 = sphi 0, %s43
      %s44 = sphi 0, %s41
      %s45 = sphi 0, %s44
      %s61 = sphi 0, %s45
      %s65 = sphi 0, %s65
      %s67 = sphi 0, %s65
      %s68 = sphi 0, %s67
      %s82 = sphi 0, %s68
      %s88 = sphi 0, %s90
      %s91 = sphi 0, %s88
      %s92 = sphi 0, %s91
      %s108 = sphi 0, %s92
    $region4: #{_forward.13} parent=1 // loop_header_branch
      %13 = sbr.rel (%p11) target = $region8
    $region5: #{_forward.13} parent=1 // loop_body
      %s15 = ssub.s32 %s10, 1
      %s16 = ssub.s32 %s10, 2
      %s17 = sadd.s32 %s10, 1
      %s19 = sadd.s32 %s18, 1
      %p22 = scmp.eq.s32.totalorder %s10, 1
      %p23 = scmp.ne.s32.totalorder %s18, %s20
      %p24 = scmp.eq.s32.totalorder %s10, 0
      %p25 = por %p23, %p24
      %p26 = scmp.ne.s32.totalorder %s18, %s20
      %p27 = scmp.eq.s32.totalorder %s15, 1
      %p28 = por %p26, %p27
      %p29 = scmp.ne.s32.totalorder %s20, %s21
      %p30 = scmp.eq.s32.totalorder %s15, 0
      %p31 = por %p29, %p30
      %p32 = scmp.ne.s32.totalorder %s20, %s21
      %p33 = scmp.eq.s32.totalorder %s16, 1
      %p34 = por %p32, %p33
      %p36 = scmp.ne.s32.totalorder %s21, %s35
      %p37 = scmp.eq.s32.totalorder %s16, 0
      %p38 = por %p36, %p37
      %s39 = ssub.s32 %s10, %s17
      %p40 = scmp.eq.s32.totalorder %s39, 0
      %s42 = sadd.s32 %s41, 1
      %s43 = scalar_select %p40, %s41, %s42
      %p46 = pneg %p40
      %p47 = scmp.eq.s32.totalorder %s10, 1
      %p48 = por %p46, %p47
      %p49 = scmp.ne.s32.totalorder %s41, %s44
      %p50 = scmp.eq.s32.totalorder %s10, 0
      %p51 = por %p49, %p50
      %p52 = scmp.ne.s32.totalorder %s41, %s44
      %p53 = scmp.eq.s32.totalorder %s15, 1
      %p54 = por %p52, %p53
      %p55 = scmp.ne.s32.totalorder %s44, %s45
      %p56 = scmp.eq.s32.totalorder %s15, 0
      %p57 = por %p55, %p56
      %p58 = scmp.ne.s32.totalorder %s44, %s45
      %p59 = scmp.eq.s32.totalorder %s16, 1
      %p60 = por %p58, %p59
      %p62 = scmp.ne.s32.totalorder %s45, %s61
      %p63 = scmp.eq.s32.totalorder %s16, 0
      %p64 = por %p62, %p63
      %s66 = sadd.s32 %s65, 1
      %p69 = scmp.eq.s32.totalorder %s10, 1
      %p70 = scmp.ne.s32.totalorder %s65, %s67
      %p71 = scmp.eq.s32.totalorder %s10, 0
      %p72 = por %p70, %p71
      %p73 = scmp.ne.s32.totalorder %s65, %s67
      %p74 = scmp.eq.s32.totalorder %s15, 1
      %p75 = por %p73, %p74
      %p76 = scmp.ne.s32.totalorder %s67, %s68
      %p77 = scmp.eq.s32.totalorder %s15, 0
      %p78 = por %p76, %p77
      %p79 = scmp.ne.s32.totalorder %s67, %s68
      %p80 = scmp.eq.s32.totalorder %s16, 1
      %p81 = por %p79, %p80
      %p83 = scmp.ne.s32.totalorder %s68, %s82
      %p84 = scmp.eq.s32.totalorder %s16, 0
      %p85 = por %p83, %p84
      %s86 = ssub.s32 %s10, %s17
      %p87 = scmp.eq.s32.totalorder %s86, 0
      %s89 = sadd.s32 %s88, 1
      %s90 = scalar_select %p87, %s88, %s89
      %p93 = pneg %p87
      %p94 = scmp.eq.s32.totalorder %s10, 1
      %p95 = por %p93, %p94
      %p96 = scmp.ne.s32.totalorder %s88, %s91
      %p97 = scmp.eq.s32.totalorder %s10, 0
      %p98 = por %p96, %p97
      %p99 = scmp.ne.s32.totalorder %s88, %s91
      %p100 = scmp.eq.s32.totalorder %s15, 1
      %p101 = por %p99, %p100
      %p102 = scmp.ne.s32.totalorder %s91, %s92
      %p103 = scmp.eq.s32.totalorder %s15, 0
      %p104 = por %p102, %p103
      %p105 = scmp.ne.s32.totalorder %s91, %s92
      %p106 = scmp.eq.s32.totalorder %s16, 1
      %p107 = por %p105, %p106
      %p109 = scmp.ne.s32.totalorder %s92, %s108
      %p110 = scmp.eq.s32.totalorder %s16, 0
      %p111 = por %p109, %p110
      %p112 = scmp.le.s32.totalorder 1, %s10
      %p113 = scmp.lt.s32.totalorder %s10, 3
      %p114 = pnand %p112, %p113
      %p115 = pneg %p114
      // Predicated region
      $region9: #{_forward.13} parent=5 // pred_check
        _
      $region10: #{_forward.13} parent=5 // pred_check_branch
        %117 = sbr.rel (%p114) target = $region12
      $region11: #{_forward.13} parent=5 // pred_region
        %s118 = ssub.s32 %s10, 1
        // Predicated region
        $region13: #{_forward.13} parent=11 // pred_check
          %p119 = pneg %p31
        $region14: #{_forward.13} parent=11 // pred_check_branch
          %121 = sbr.rel (%p119) target = $region16
        $region15: #{_forward.13} parent=11 // pred_region
          %123 = vsyncadd [#allocation3], 0
          %s125 = sshll.u32 %s0, 4
          %s126 = int_to_ptr.hbm [resolvable:$true] %s125
          %s127 = sshll.u32 [#allocation2], 4
          %s128 = int_to_ptr.vmem [resolvable:$true] %s127
          %130 = dma.hbm_to_vmem [thread:$0]  %s126, 64, %s128, [#allocation3]
        $region16: #{_forward.13} parent=11 // pred_fallthru
          _
        // Predicated region
        $region17: #{_forward.13} parent=11 // pred_check
          %p131 = pneg %p78
        $region18: #{_forward.13} parent=11 // pred_check_branch
          %133 = sbr.rel (%p131) target = $region20
        $region19: #{_forward.13} parent=11 // pred_region
          _
        $region20: #{_forward.13} parent=11 // pred_fallthru
          _
      $region12: #{_forward.13} parent=5 // pred_fallthru
        _
      %p134 = scmp.lt.s32.totalorder %s10, 2
      // Predicated region
      $region21: #{_forward.13} parent=5 // pred_check
        %p135 = pneg %p134
      $region22: #{_forward.13} parent=5 // pred_check_branch
        %137 = sbr.rel (%p135) target = $region24
      $region23: #{_forward.13} parent=5 // pred_region
        // Predicated region
        $region25: #{_forward.13} parent=23 // pred_check
          %p138 = pneg %p51
        $region26: #{_forward.13} parent=23 // pred_check_branch
          %140 = sbr.rel (%p138) target = $region28
        $region27: #{_forward.13} parent=23 // pred_region
          %s141 = sand.u32 %s41, 1
          %s142 = sand.u32 %s41, 1
          %s143 = smul.addr %s142, 64
          %s144 = scalar_lea.vmem [#allocation4], %s143
          %s145 = smul.u32 2, %s10
          %s146 = smul.addr %s145, 8
          %s147 = scalar_lea.vmem %s1, %s146
          // Predicated region
          $region29: #{_forward.13} parent=27 // pred_check
            _
          $region30: #{_forward.13} parent=27 // pred_check_branch
            %149 = sbr.rel (0) target = $region32
          $region31: #{_forward.13} parent=27 // pred_region
            // Predicated region
            $region33: #{_forward.13} parent=31 // pred_check
              _
            $region34: #{_forward.13} parent=31 // pred_check_branch
              %151 = sbr.rel (0) target = $region36
            $region35: #{_forward.13} parent=31 // pred_region
              loop: start=0, step=1, limit=1
              $region37: #{_forward.13} parent=35 // loop_pre_header
                _
              $region38: #{_forward.13} parent=35 // loop_header
                %s153 = sphi 0, %s157
                %p154 = scmp.ge.s32.totalorder %s153, 1
                %s158 = sphi %s147, %s147
                %s159 = sphi %s144, %s144
              $region39: #{_forward.13} parent=35 // loop_header_branch
                %156 = sbr.rel (%p154) target = $region43
              $region40: #{_forward.13} parent=35 // loop_body
                %v160 = vld [vmem:[%s158] sm:$0xff]
                %161 = vst [vmem:[%s159] sm:$0xff] %v160
                %v162 = vld [vmem:[%s158 + $0x8] sm:$0xff]
                %163 = vst [vmem:[%s159 + $0x8] sm:$0xff] %v162
                %v164 = vld [vmem:[%s158 + $0x20] sm:$0xff]
                %165 = vst [vmem:[%s159 + $0x10] sm:$0xff] %v164
                %v166 = vld [vmem:[%s158 + $0x28] sm:$0xff]
                %167 = vst [vmem:[%s159 + $0x18] sm:$0xff] %v166
                %v168 = vld [vmem:[%s158 + $0x40] sm:$0xff]
                %169 = vst [vmem:[%s159 + $0x20] sm:$0xff] %v168
                %v170 = vld [vmem:[%s158 + $0x48] sm:$0xff]
                %171 = vst [vmem:[%s159 + $0x28] sm:$0xff] %v170
                %v172 = vld [vmem:[%s158 + $0x60] sm:$0xff]
                %173 = vst [vmem:[%s159 + $0x30] sm:$0xff] %v172
                %v174 = vld [vmem:[%s158 + $0x68] sm:$0xff]
                %175 = vst [vmem:[%s159 + $0x38] sm:$0xff] %v174
              $region41: #{_forward.13} parent=35 // loop_footer
                %s157 = sadd.s32 1, %s153
              $region42: #{_forward.13} parent=35 // loop_footer_branch
                %152 = sbr.rel target = $region38
              $region43: #{_forward.13} parent=35 // loop_exit
                _
            $region36: #{_forward.13} parent=31 // pred_fallthru
              _
            // Predicated region
            $region44: #{_forward.13} parent=31 // pred_check
              _
            $region45: #{_forward.13} parent=31 // pred_check_branch
              %177 = sbr.rel target = $region47
            $region46: #{_forward.13} parent=31 // pred_region
              _
            $region47: #{_forward.13} parent=31 // pred_fallthru
              _
          $region32: #{_forward.13} parent=27 // pred_fallthru
            _
          %178 = vnop
        $region28: #{_forward.13} parent=23 // pred_fallthru
          _
      $region24: #{_forward.13} parent=5 // pred_fallthru
        _
      %p179 = scmp.le.s32.totalorder 1, %s10
      %p180 = scmp.lt.s32.totalorder %s10, 3
      %p181 = pnand %p179, %p180
      %p182 = pneg %p181
      // Predicated region
      $region48: #{_forward.13} parent=5 // pred_check
        _
      $region49: #{_forward.13} parent=5 // pred_check_branch
        %184 = sbr.rel (%p181) target = $region51
      $region50: #{_forward.13} parent=5 // pred_region
        %s185 = ssub.s32 %s10, 1
        // Predicated region
        $region52: #{_forward.13} parent=50 // pred_check
          %p186 = pneg %p31
        $region53: #{_forward.13} parent=50 // pred_check_branch
          %188 = sbr.rel (%p186) target = $region55
        $region54: #{_forward.13} parent=50 // pred_region
          %190 = dma.done [#allocation3], 64
        $region55: #{_forward.13} parent=50 // pred_fallthru
          _
        %s191 = sand.u32 %s44, 1
        %s192 = sand.u32 %s44, 1
        %s193 = smul.addr %s192, 64
        %s194 = scalar_lea.vmem [#allocation4], %s193
        // Predicated region
        $region56: #{_forward.13} parent=50 // pred_check
          %p195 = pneg %p57
        $region57: #{_forward.13} parent=50 // pred_check_branch
          %197 = sbr.rel (%p195) target = $region59
        $region58: #{_forward.13} parent=50 // pred_region
          _
        $region59: #{_forward.13} parent=50 // pred_fallthru
          _
        %p198 = pneg %p31
        %p199 = pneg %p28
        %s200 = sand.u32 %s44, 1
        %s201 = sand.u32 %s44, 1
        %s202 = smul.addr %s201, 64
        %s203 = scalar_lea.vmem [#allocation4], %s202
        %p204 = pneg %p57
        %p205 = pneg %p54
        %p206 = pneg %p78
        %p207 = pneg %p75
        %p208 = pneg %p104
        %p209 = pneg %p101
        %s210 = smul.u32 2, %s15
        %p211 = scmp.lt.s32.totalorder %s210, 3
        %s212 = scalar_select %p211, %s210, 3
        %s213 = smul.addr %s212, 8
        %s214 = scalar_lea.vmem %s3, %s213
        %s215 = smul.u32 2, %s15
        %s216 = smul.u32 2, %s15
        %p217 = scmp.lt.s32.totalorder %s216, 3
        %s218 = scalar_select %p217, %s216, 3
        %s219 = smul.addr %s218, 8
        %s220 = scalar_lea.vmem %s3, %s219
        %s221 = smul.u32 2, %s15
        %v223 = vld [vmem:[#allocation2] sm:$0xf]
        %v224 = vld [vmem:[%s194] sm:$0xff]
        %v225 = vld [vmem:[%s194 + $0x8] sm:$0xff]
        %v226 = vld [vmem:[%s194 + $0x10] sm:$0xff]
        %v227 = vld [vmem:[%s194 + $0x18] sm:$0xff]
        %v228 = vld [vmem:[%s194 + $0x20] sm:$0xff]
        %v229 = vld [vmem:[%s194 + $0x28] sm:$0xff]
        %v230 = vld [vmem:[%s194 + $0x30] sm:$0x7]
        %v231 = vld [vmem:[%s194 + $0x38] sm:$0x7]
        %v232 = vpack.c.bf16 %v226, %v224
        %v233 = vpack.c.bf16 %v227, %v225
        %v234 = vpack.c.bf16 %v230, %v228
        %v235 = vpack.c.bf16 %v231, %v229
        %v236 = vld [vmem:[%s2] sm:$0xff]
        %238 = vset.pattern.permute.xlu0 0
        %239 = vperm.xlu0 %238, %v236
        %v240 = vpop.permute.xlu0 %239
        %vm242 = vcmask 220160
        %v244 = vsel %vm242, %v223, 0
        %vm246 = vcmask 1044480
        %vm247 = vcmask 1045504
        %v248 = vsel %vm246, 4294967295, 65535
        %v249 = vsel %vm247, %v248, 0
        %v251 = vand.u32 %v234, %v249
        %v254 = vand.u32 %v235, %v249
        %256 = vmatpush.bf16.msra.mxu0 0
        %257 = vmatpush.bf16.msra.mxu0 0
        %258 = vmatpush.bf16.msra.mxu0 0
        %259 = vmatpush.bf16.msra.mxu0 0
        %260 = vmatpush.bf16.msra.mxu0 0
        %261 = vmatpush.bf16.msra.mxu0 0
        %262 = vmatpush.bf16.msra.mxu0 %v251
        %263 = vmatpush.bf16.msra.mxu0 %v232
        %264 = vmatmul.bf16.gmra.mxu0 %v244
        %v265 = vpop.f32.mrf.mxu0
        %v266 = vadd.f32 %v240, %v265
        %v267 = vpop.f32.mrf.mxu0
        %268 = vdwg.mxu0
        %269 = vmatpush.bf16.msra.mxu0 0
        %270 = vmatpush.bf16.msra.mxu0 0
        %271 = vmatpush.bf16.msra.mxu0 0
        %272 = vmatpush.bf16.msra.mxu0 0
        %273 = vmatpush.bf16.msra.mxu0 0
        %274 = vmatpush.bf16.msra.mxu0 0
        %275 = vmatpush.bf16.msra.mxu0 %v254
        %276 = vmatpush.bf16.msra.mxu0 %v233
        %277 = vmatmul.bf16.gmra.mxu0 %v244
        %v278 = vpop.f32.mrf.mxu0
        %v279 = vadd.f32 %v240, %v278
        %v280 = vpop.f32.mrf.mxu0
        %281 = vdwg.mxu0
        %v282 = vmax.f32 %v266, 0.0
        %v283 = vmax.f32 %v279, 0.0
        %284 = vst [vmem:[%s220] sm:$0xff] %v282
        %285 = vst [vmem:[%s220 + $0x8] sm:$0xff] %v283
        %s286 = smul.u32 2, %s15
        %p287 = scmp.lt.s32.totalorder %s286, 3
        %s288 = scalar_select %p287, %s286, 3
        %s289 = smul.addr %s288, 8
        %s290 = scalar_lea.vmem %s3, %s289
        // Predicated region
        $region60: #{_forward.13} parent=50 // pred_check
          %p291 = pneg %p101
        $region61: #{_forward.13} parent=50 // pred_check_branch
          %293 = sbr.rel (%p291) target = $region63
        $region62: #{_forward.13} parent=50 // pred_region
          %s294 = smul.u32 2, %s15
        $region63: #{_forward.13} parent=50 // pred_fallthru
          _
      $region51: #{_forward.13} parent=5 // pred_fallthru
        _
      %p295 = scmp.le.s32.totalorder 2, %s10
      // Predicated region
      $region64: #{_forward.13} parent=5 // pred_check
        %p296 = pneg %p295
      $region65: #{_forward.13} parent=5 // pred_check_branch
        %298 = sbr.rel (%p296) target = $region67
      $region66: #{_forward.13} parent=5 // pred_region
        %s299 = ssub.s32 %s10, 2
        // Predicated region
        $region68: #{_forward.13} parent=66 // pred_check
          %p300 = pneg %p107
        $region69: #{_forward.13} parent=66 // pred_check_branch
          %302 = sbr.rel (%p300) target = $region71
        $region70: #{_forward.13} parent=66 // pred_region
          %s303 = smul.u32 2, %s16
          %p304 = scmp.lt.s32.totalorder %s303, 3
          %s305 = scalar_select %p304, %s303, 3
          %s306 = smul.addr %s305, 8
          %s307 = scalar_lea.vmem %s3, %s306
        $region71: #{_forward.13} parent=66 // pred_fallthru
          _
      $region67: #{_forward.13} parent=5 // pred_fallthru
        _
    $region6: #{_forward.13} parent=1 // loop_footer
      %s14 = sadd.s32 1, %s10
    $region7: #{_forward.13} parent=1 // loop_footer_branch
      %9 = sbr.rel target = $region3
    $region8: #{_forward.13} parent=1 // loop_exit
      _
    %308 = vsyncpa [#allocation3], 1
    %s309 = scalar_lea.sflag [#allocation3], 1
    %310 = vsyncpa %s309, 1

// kernel: _forward.20
$region0: #{_forward.20}
  #allocation0 [shape = 'u32[]', space=smem, size = 0x4, offset = 0x4, fixed_abs, tag = 'smem constant byte address 0x4 - core index']
  #allocation1 [shape = 'u32[72,128]{1,0:T(1,128)}', space=vmem, size = 0x9000, scoped, tag = 'internal scratch']
  %s0 = inlined_call_operand.hbm [shape: bf16[32,8], index: 0, kind: input, shape index: {}]
  %s1 = inlined_call_operand.vmem [shape: f32[8,512], index: 1, kind: input, shape index: {}]
  %s2 = inlined_call_operand.hbm [shape: f32[32,1], index: 2, kind: input, shape index: {}]
  %s3 = inlined_call_operand.vmem [shape: f32[32,512], index: 3, kind: output, shape index: {}]
  %s4 = sld [smem:[#allocation0]]
  $region72: #{_forward.20} parent=0
    _
  %s6 = ssub.s32 1, %s4
  %s7 = scalar_select 0, %s6, %s4
  $region1: #{_forward.20} parent=0
    #allocation2 [shape = 'u8[8192]{0}', space=vmem, size = 0x2000, scoped, tag = 'input window, operand 0, single buffered']
    #allocation3 [shape = 's32[2]{0}', space=sflag, size = 0x8, scoped, tag = 'scoped memory for _forward.20']
    #allocation4 [shape = 'u8[16384]{0}', space=vmem, size = 0x4000, scoped, tag = 'input window, operand 2, single buffered']
    #allocation5 [shape = 's32[1]{0}', space=sflag, size = 0x4, scoped, tag = 'scoped memory for _forward.20']
    #allocation6 [shape = 'u8[65536]{0}', space=vmem, size = 0x10000, scoped, tag = 'output window, operand 0']
    %8 = vsyncpa [#allocation3], 0
    %9 = vsyncpa [#allocation5], 0
    loop: start=0, step=1, limit=4
    $region2: #{_forward.20} parent=1 // loop_pre_header
      _
    $region3: #{_forward.20} parent=1 // loop_header
      %s11 = sphi 0, %s15
      %p12 = scmp.ge.s32.totalorder %s11, 4
      %s19 = sphi 0, %s19
      %s21 = sphi 0, %s19
      %s22 = sphi 0, %s21
      %s36 = sphi 0, %s22
      %s42 = sphi 0, %s44
      %s45 = sphi 0, %s42
      %s46 = sphi 0, %s45
      %s62 = sphi 0, %s46
      %s66 = sphi 0, %s66
      %s68 = sphi 0, %s66
      %s69 = sphi 0, %s68
      %s83 = sphi 0, %s69
      %s89 = sphi 0, %s91
      %s92 = sphi 0, %s89
      %s93 = sphi 0, %s92
      %s109 = sphi 0, %s93
    $region4: #{_forward.20} parent=1 // loop_header_branch
      %14 = sbr.rel (%p12) target = $region8
    $region5: #{_forward.20} parent=1 // loop_body
      %s16 = ssub.s32 %s11, 1
      %s17 = ssub.s32 %s11, 2
      %s18 = sadd.s32 %s11, 1
      %s20 = sadd.s32 %s19, 1
      %p23 = scmp.eq.s32.totalorder %s11, 1
      %p24 = scmp.ne.s32.totalorder %s19, %s21
      %p25 = scmp.eq.s32.totalorder %s11, 0
      %p26 = por %p24, %p25
      %p27 = scmp.ne.s32.totalorder %s19, %s21
      %p28 = scmp.eq.s32.totalorder %s16, 1
      %p29 = por %p27, %p28
      %p30 = scmp.ne.s32.totalorder %s21, %s22
      %p31 = scmp.eq.s32.totalorder %s16, 0
      %p32 = por %p30, %p31
      %p33 = scmp.ne.s32.totalorder %s21, %s22
      %p34 = scmp.eq.s32.totalorder %s17, 1
      %p35 = por %p33, %p34
      %p37 = scmp.ne.s32.totalorder %s22, %s36
      %p38 = scmp.eq.s32.totalorder %s17, 0
      %p39 = por %p37, %p38
      %s40 = ssub.s32 %s11, %s18
      %p41 = scmp.eq.s32.totalorder %s40, 0
      %s43 = sadd.s32 %s42, 1
      %s44 = scalar_select %p41, %s42, %s43
      %p47 = pneg %p41
      %p48 = scmp.eq.s32.totalorder %s11, 1
      %p49 = por %p47, %p48
      %p50 = scmp.ne.s32.totalorder %s42, %s45
      %p51 = scmp.eq.s32.totalorder %s11, 0
      %p52 = por %p50, %p51
      %p53 = scmp.ne.s32.totalorder %s42, %s45
      %p54 = scmp.eq.s32.totalorder %s16, 1
      %p55 = por %p53, %p54
      %p56 = scmp.ne.s32.totalorder %s45, %s46
      %p57 = scmp.eq.s32.totalorder %s16, 0
      %p58 = por %p56, %p57
      %p59 = scmp.ne.s32.totalorder %s45, %s46
      %p60 = scmp.eq.s32.totalorder %s17, 1
      %p61 = por %p59, %p60
      %p63 = scmp.ne.s32.totalorder %s46, %s62
      %p64 = scmp.eq.s32.totalorder %s17, 0
      %p65 = por %p63, %p64
      %s67 = sadd.s32 %s66, 1
      %p70 = scmp.eq.s32.totalorder %s11, 1
      %p71 = scmp.ne.s32.totalorder %s66, %s68
      %p72 = scmp.eq.s32.totalorder %s11, 0
      %p73 = por %p71, %p72
      %p74 = scmp.ne.s32.totalorder %s66, %s68
      %p75 = scmp.eq.s32.totalorder %s16, 1
      %p76 = por %p74, %p75
      %p77 = scmp.ne.s32.totalorder %s68, %s69
      %p78 = scmp.eq.s32.totalorder %s16, 0
      %p79 = por %p77, %p78
      %p80 = scmp.ne.s32.totalorder %s68, %s69
      %p81 = scmp.eq.s32.totalorder %s17, 1
      %p82 = por %p80, %p81
      %p84 = scmp.ne.s32.totalorder %s69, %s83
      %p85 = scmp.eq.s32.totalorder %s17, 0
      %p86 = por %p84, %p85
      %s87 = ssub.s32 %s11, %s18
      %p88 = scmp.eq.s32.totalorder %s87, 0
      %s90 = sadd.s32 %s89, 1
      %s91 = scalar_select %p88, %s89, %s90
      %p94 = pneg %p88
      %p95 = scmp.eq.s32.totalorder %s11, 1
      %p96 = por %p94, %p95
      %p97 = scmp.ne.s32.totalorder %s89, %s92
      %p98 = scmp.eq.s32.totalorder %s11, 0
      %p99 = por %p97, %p98
      %p100 = scmp.ne.s32.totalorder %s89, %s92
      %p101 = scmp.eq.s32.totalorder %s16, 1
      %p102 = por %p100, %p101
      %p103 = scmp.ne.s32.totalorder %s92, %s93
      %p104 = scmp.eq.s32.totalorder %s16, 0
      %p105 = por %p103, %p104
      %p106 = scmp.ne.s32.totalorder %s92, %s93
      %p107 = scmp.eq.s32.totalorder %s17, 1
      %p108 = por %p106, %p107
      %p110 = scmp.ne.s32.totalorder %s93, %s109
      %p111 = scmp.eq.s32.totalorder %s17, 0
      %p112 = por %p110, %p111
      %p113 = scmp.le.s32.totalorder 1, %s11
      %p114 = scmp.lt.s32.totalorder %s11, 3
      %p115 = pnand %p113, %p114
      %p116 = pneg %p115
      // Predicated region
      $region9: #{_forward.20} parent=5 // pred_check
        _
      $region10: #{_forward.20} parent=5 // pred_check_branch
        %118 = sbr.rel (%p115) target = $region12
      $region11: #{_forward.20} parent=5 // pred_region
        %s119 = ssub.s32 %s11, 1
        // Predicated region
        $region13: #{_forward.20} parent=11 // pred_check
          %p120 = pneg %p32
        $region14: #{_forward.20} parent=11 // pred_check_branch
          %122 = sbr.rel (%p120) target = $region16
        $region15: #{_forward.20} parent=11 // pred_region
          %124 = vsyncadd [#allocation3], 0
          %s125 = sshll.u32 %s0, 4
          %s126 = int_to_ptr.hbm [resolvable:$true] %s125
          %s127 = sshll.u32 [#allocation2], 4
          %s128 = int_to_ptr.vmem [resolvable:$true] %s127
          %133 = dma.hbm_to_vmem [thread:$0]  %s126, 256, %s128, [#allocation3], 64, 64, 4
        $region16: #{_forward.20} parent=11 // pred_fallthru
          _
        // Predicated region
        $region17: #{_forward.20} parent=11 // pred_check
          %p134 = pneg %p79
        $region18: #{_forward.20} parent=11 // pred_check_branch
          %136 = sbr.rel (%p134) target = $region20
        $region19: #{_forward.20} parent=11 // pred_region
          %138 = vsyncadd [#allocation5], 0
          %s139 = sshll.u32 %s2, 4
          %s140 = int_to_ptr.hbm [resolvable:$true] %s139
          %s141 = sshll.u32 [#allocation4], 4
          %s142 = int_to_ptr.vmem [resolvable:$true] %s141
          %147 = dma.hbm_to_vmem [thread:$0]  %s140, 512, %s142, [#allocation5], 128, 128, 8
        $region20: #{_forward.20} parent=11 // pred_fallthru
          _
      $region12: #{_forward.20} parent=5 // pred_fallthru
        _
      %p148 = scmp.lt.s32.totalorder %s11, 2
      // Predicated region
      $region21: #{_forward.20} parent=5 // pred_check
        %p149 = pneg %p148
      $region22: #{_forward.20} parent=5 // pred_check_branch
        %151 = sbr.rel (%p149) target = $region24
      $region23: #{_forward.20} parent=5 // pred_region
        // Predicated region
        $region25: #{_forward.20} parent=23 // pred_check
          %p152 = pneg %p52
        $region26: #{_forward.20} parent=23 // pred_check_branch
          %154 = sbr.rel (%p152) target = $region28
        $region27: #{_forward.20} parent=23 // pred_region
          %s155 = smul.u32 2, %s11
          %p156 = scmp.lt.s32.totalorder %s155, 3
          %s157 = scalar_select %p156, %s155, 3
          %s158 = smul.addr %s157, 8
          %s159 = scalar_lea.vmem %s1, %s158
          %s160 = smul.u32 2, %s11
        $region28: #{_forward.20} parent=23 // pred_fallthru
          _
      $region24: #{_forward.20} parent=5 // pred_fallthru
        _
      %p161 = scmp.le.s32.totalorder 1, %s11
      %p162 = scmp.lt.s32.totalorder %s11, 3
      %p163 = pnand %p161, %p162
      %p164 = pneg %p163
      // Predicated region
      $region29: #{_forward.20} parent=5 // pred_check
        _
      $region30: #{_forward.20} parent=5 // pred_check_branch
        %166 = sbr.rel (%p163) target = $region32
      $region31: #{_forward.20} parent=5 // pred_region
        %s167 = ssub.s32 %s11, 1
        // Predicated region
        $region33: #{_forward.20} parent=31 // pred_check
          %p168 = pneg %p32
        $region34: #{_forward.20} parent=31 // pred_check_branch
          %170 = sbr.rel (%p168) target = $region36
        $region35: #{_forward.20} parent=31 // pred_region
          %172 = dma.done [#allocation3], 256
        $region36: #{_forward.20} parent=31 // pred_fallthru
          _
        // Predicated region
        $region37: #{_forward.20} parent=31 // pred_check
          %p173 = pneg %p79
        $region38: #{_forward.20} parent=31 // pred_check_branch
          %175 = sbr.rel (%p173) target = $region40
        $region39: #{_forward.20} parent=31 // pred_region
          %177 = dma.done [#allocation5], 512
        $region40: #{_forward.20} parent=31 // pred_fallthru
          _
        %p178 = pneg %p32
        %p179 = pneg %p29
        %s180 = smul.u32 2, %s16
        %p181 = scmp.lt.s32.totalorder %s180, 3
        %s182 = scalar_select %p181, %s180, 3
        %s183 = smul.addr %s182, 8
        %s184 = scalar_lea.vmem %s1, %s183
        %p185 = pneg %p58
        %p186 = pneg %p55
        %p187 = pneg %p79
        %p188 = pneg %p76
        %p189 = pneg %p105
        %p190 = pneg %p102
        %s191 = sand.u32 %s92, 1
        %s192 = sand.u32 %s92, 1
        %s193 = smul.addr %s192, 64
        %s194 = scalar_lea.vmem [#allocation6], %s193
        %s195 = smul.u32 2, %s16
        %p196 = scmp.lt.s32.totalorder %s195, 3
        %s197 = scalar_select %p196, %s195, 3
        %s198 = smul.addr %s197, 8
        %s199 = scalar_lea.vmem %s1, %s198
        %s200 = smul.u32 2, %s16
        %s201 = smul.u32 2, %s16
        %v203 = vld [vmem:[#allocation2] sm:$0xf]
        %v204 = vld [vmem:[#allocation2 + $0x4] sm:$0xf]
        %v205 = vld [vmem:[#allocation2 + $0x8] sm:$0xf]
        %v206 = vld [vmem:[#allocation2 + $0xc] sm:$0xf]
        %v207 = vld [vmem:[%s199] sm:$0xff]
        %v208 = vld [vmem:[%s199 + $0x8] sm:$0xff]
        %v209 = vpack.c.bf16 %v207, %v207
        %v210 = vpack.c.bf16 %v208, %v208
        %v211 = vld [vmem:[#allocation4] sm:$0xff]
        %v212 = vld [vmem:[#allocation4 + $0x8] sm:$0xff]
        %v213 = vld [vmem:[#allocation4 + $0x10] sm:$0xff]
        %v214 = vld [vmem:[#allocation4 + $0x18] sm:$0xff]
        %216 = vset.pattern.permute.xlu0 0
        %217 = vperm.xlu0 %216, %v211
        %v218 = vpop.permute.xlu0 %217
        %221 = vset.pattern.permute.xlu0 0
        %222 = vperm.xlu0 %221, %v212
        %v223 = vpop.permute.xlu0 %222
        %226 = vset.pattern.permute.xlu0 0
        %227 = vperm.xlu0 %226, %v213
        %v228 = vpop.permute.xlu0 %227
        %231 = vset.pattern.permute.xlu0 0
        %232 = vperm.xlu0 %231, %v214
        %v233 = vpop.permute.xlu0 %232
        %v239 = vunpack.c.l.b16 %v203
        %v240 = vunpack.c.l.b16 %v204
        %v241 = vunpack.c.l.b16 %v205
        %v242 = vunpack.c.l.b16 %v206
        %v243 = vpack.c.b16 %v240, %v239
        %v244 = vpack.c.b16 %v242, %v241
        %vm245 = vcmask 64512
        %v247 = vsel %vm245, %v243, 0
        %v250 = vsel %vm245, %v244, 0
        %vm252 = vcmask 1043456
        %v254 = vsel %vm252, %v209, 0
        %v257 = vsel %vm252, %v210, 0
        %259 = vmatpush.bf16.msra.mxu0 0
        %260 = vmatpush.bf16.msra.mxu0 0
        %261 = vmatpush.bf16.msra.mxu0 0
        %262 = vmatpush.bf16.msra.mxu0 0
        %263 = vmatpush.bf16.msra.mxu0 0
        %264 = vmatpush.bf16.msra.mxu0 0
        %265 = vmatpush.bf16.msra.mxu0 0
        %266 = vmatpush.bf16.msra.mxu0 %v254
        %267 = vmatmul.bf16.gmra.mxu0 %v247
        %v268 = vpop.f32.mrf.mxu0
        %v269 = vadd.f32 %v218, %v268
        %v270 = vpop.f32.mrf.mxu0
        %v271 = vadd.f32 %v223, %v270
        %272 = vmatmul.bf16.gmra.mxu0 %v250
        %v273 = vpop.f32.mrf.mxu0
        %v274 = vadd.f32 %v228, %v273
        %v275 = vpop.f32.mrf.mxu0
        %v276 = vadd.f32 %v233, %v275
        %277 = vdwg.mxu0
        %278 = vmatpush.bf16.msra.mxu0 0
        %279 = vmatpush.bf16.msra.mxu0 0
        %280 = vmatpush.bf16.msra.mxu0 0
        %281 = vmatpush.bf16.msra.mxu0 0
        %282 = vmatpush.bf16.msra.mxu0 0
        %283 = vmatpush.bf16.msra.mxu0 0
        %284 = vmatpush.bf16.msra.mxu0 0
        %285 = vmatpush.bf16.msra.mxu0 %v257
        %286 = vmatmul.bf16.gmra.mxu0 %v247
        %v287 = vpop.f32.mrf.mxu0
        %v288 = vadd.f32 %v218, %v287
        %v289 = vpop.f32.mrf.mxu0
        %v290 = vadd.f32 %v223, %v289
        %291 = vmatmul.bf16.gmra.mxu0 %v250
        %v292 = vpop.f32.mrf.mxu0
        %v293 = vadd.f32 %v228, %v292
        %v294 = vpop.f32.mrf.mxu0
        %v295 = vadd.f32 %v233, %v294
        %296 = vdwg.mxu0
        %297 = vst [vmem:[%s194] sm:$0xff] %v269
        %298 = vst [vmem:[%s194 + $0x8] sm:$0xff] %v288
        %299 = vst [vmem:[%s194 + $0x10] sm:$0xff] %v271
        %300 = vst [vmem:[%s194 + $0x18] sm:$0xff] %v290
        %301 = vst [vmem:[%s194 + $0x20] sm:$0xff] %v274
        %302 = vst [vmem:[%s194 + $0x28] sm:$0xff] %v293
        %303 = vst [vmem:[%s194 + $0x30] sm:$0xff] %v276
        %304 = vst [vmem:[%s194 + $0x38] sm:$0xff] %v295
        %s305 = sand.u32 %s92, 1
        %s306 = sand.u32 %s92, 1
        %s307 = smul.addr %s306, 64
        %s308 = scalar_lea.vmem [#allocation6], %s307
        // Predicated region
        $region41: #{_forward.20} parent=31 // pred_check
          %p309 = pneg %p102
        $region42: #{_forward.20} parent=31 // pred_check_branch
          %311 = sbr.rel (%p309) target = $region44
        $region43: #{_forward.20} parent=31 // pred_region
          %s312 = smul.u32 2, %s16
          %s313 = smul.addr %s312, 8
          %s314 = scalar_lea.vmem %s3, %s313
          // Predicated region
          $region45: #{_forward.20} parent=43 // pred_check
            _
          $region46: #{_forward.20} parent=43 // pred_check_branch
            %316 = sbr.rel (0) target = $region48
          $region47: #{_forward.20} parent=43 // pred_region
            // Predicated region
            $region49: #{_forward.20} parent=47 // pred_check
              _
            $region50: #{_forward.20} parent=47 // pred_check_branch
              %318 = sbr.rel (0) target = $region52
            $region51: #{_forward.20} parent=47 // pred_region
              loop: start=0, step=1, limit=1
              $region53: #{_forward.20} parent=51 // loop_pre_header
                _
              $region54: #{_forward.20} parent=51 // loop_header
                %s320 = sphi 0, %s324
                %p321 = scmp.ge.s32.totalorder %s320, 1
                %s325 = sphi %s308, %s308
                %s326 = sphi %s314, %s314
              $region55: #{_forward.20} parent=51 // loop_header_branch
                %323 = sbr.rel (%p321) target = $region59
              $region56: #{_forward.20} parent=51 // loop_body
                %v327 = vld [vmem:[%s325] sm:$0xff]
                %328 = vst [vmem:[%s326] sm:$0xff] %v327
                %v329 = vld [vmem:[%s325 + $0x8] sm:$0xff]
                %330 = vst [vmem:[%s326 + $0x8] sm:$0xff] %v329
                %v331 = vld [vmem:[%s325 + $0x10] sm:$0xff]
                %332 = vst [vmem:[%s326 + $0x20] sm:$0xff] %v331
                %v333 = vld [vmem:[%s325 + $0x18] sm:$0xff]
                %334 = vst [vmem:[%s326 + $0x28] sm:$0xff] %v333
                %v335 = vld [vmem:[%s325 + $0x20] sm:$0xff]
                %336 = vst [vmem:[%s326 + $0x40] sm:$0xff] %v335
                %v337 = vld [vmem:[%s325 + $0x28] sm:$0xff]
                %338 = vst [vmem:[%s326 + $0x48] sm:$0xff] %v337
                %v339 = vld [vmem:[%s325 + $0x30] sm:$0xff]
                %340 = vst [vmem:[%s326 + $0x60] sm:$0xff] %v339
                %v341 = vld [vmem:[%s325 + $0x38] sm:$0xff]
                %342 = vst [vmem:[%s326 + $0x68] sm:$0xff] %v341
              $region57: #{_forward.20} parent=51 // loop_footer
                %s324 = sadd.s32 1, %s320
              $region58: #{_forward.20} parent=51 // loop_footer_branch
                %319 = sbr.rel target = $region54
              $region59: #{_forward.20} parent=51 // loop_exit
                _
            $region52: #{_forward.20} parent=47 // pred_fallthru
              _
            // Predicated region
            $region60: #{_forward.20} parent=47 // pred_check
              _
            $region61: #{_forward.20} parent=47 // pred_check_branch
              %344 = sbr.rel target = $region63
            $region62: #{_forward.20} parent=47 // pred_region
              _
            $region63: #{_forward.20} parent=47 // pred_fallthru
              _
          $region48: #{_forward.20} parent=43 // pred_fallthru
            _
          %345 = vnop
        $region44: #{_forward.20} parent=31 // pred_fallthru
          _
      $region32: #{_forward.20} parent=5 // pred_fallthru
        _
      %p346 = scmp.le.s32.totalorder 2, %s11
      // Predicated region
      $region64: #{_forward.20} parent=5 // pred_check
        %p347 = pneg %p346
      $region65: #{_forward.20} parent=5 // pred_check_branch
        %349 = sbr.rel (%p347) target = $region67
      $region66: #{_forward.20} parent=5 // pred_region
        %s350 = ssub.s32 %s11, 2
        // Predicated region
        $region68: #{_forward.20} parent=66 // pred_check
          %p351 = pneg %p108
        $region69: #{_forward.20} parent=66 // pred_check_branch
          %353 = sbr.rel (%p351) target = $region71
        $region70: #{_forward.20} parent=66 // pred_region
          %s354 = sand.u32 %s93, 1
          %s355 = sand.u32 %s93, 1
          %s356 = smul.addr %s355, 64
          %s357 = scalar_lea.vmem [#allocation6], %s356
        $region71: #{_forward.20} parent=66 // pred_fallthru
          _
      $region67: #{_forward.20} parent=5 // pred_fallthru
        _
    $region6: #{_forward.20} parent=1 // loop_footer
      %s15 = sadd.s32 1, %s11
    $region7: #{_forward.20} parent=1 // loop_footer_branch
      %10 = sbr.rel target = $region3
    $region8: #{_forward.20} parent=1 // loop_exit
      _
    %358 = vsyncpa [#allocation3], 1
    %s359 = scalar_lea.sflag [#allocation3], 1
    %360 = vsyncpa %s359, 1
    %361 = vsyncpa [#allocation5], 1

// kernel: _forward.14
$region0: #{_forward.14}
  #allocation0 [shape = 'u32[]', space=smem, size = 0x4, offset = 0x4, fixed_abs, tag = 'smem constant byte address 0x4 - core index']
  #allocation1 [shape = 'u32[72,128]{1,0:T(1,128)}', space=vmem, size = 0x9000, scoped, tag = 'internal scratch']
  %s0 = inlined_call_operand.vmem [shape: bf16[16,72], index: 0, kind: input, shape index: {}]
  %s1 = inlined_call_operand.vmem [shape: f32[72,128], index: 1, kind: input, shape index: {}]
  %s2 = inlined_call_operand.vmem [shape: f32[16,1], index: 2, kind: input, shape index: {}]
  %s3 = inlined_call_operand.vmem [shape: f32[16,128], index: 3, kind: output, shape index: {}]
  %s4 = sld [smem:[#allocation0]]
  $region22: #{_forward.14} parent=0
    _
  %s6 = ssub.s32 1, %s4
  %s7 = scalar_select 0, %s6, %s4
  // Predicated region
  $region2: #{_forward.14} parent=0 // pred_check
    _
  $region3: #{_forward.14} parent=0 // pred_check_branch
    %9 = sbr.rel (0) target = $region5
  $region4: #{_forward.14} parent=0 // pred_region
    _
  $region5: #{_forward.14} parent=0 // pred_fallthru
    _
  // Predicated region
  $region6: #{_forward.14} parent=0 // pred_check
    _
  $region7: #{_forward.14} parent=0 // pred_check_branch
    %11 = sbr.rel (0) target = $region9
  $region8: #{_forward.14} parent=0 // pred_region
    _
  $region9: #{_forward.14} parent=0 // pred_fallthru
    _
  // Predicated region
  $region10: #{_forward.14} parent=0 // pred_check
    _
  $region11: #{_forward.14} parent=0 // pred_check_branch
    %13 = sbr.rel (0) target = $region13
  $region12: #{_forward.14} parent=0 // pred_region
    _
  $region13: #{_forward.14} parent=0 // pred_fallthru
    _
  %v15 = vld [vmem:[%s0] sm:$0xf]
  %v16 = vld [vmem:[%s0 + $0x4] sm:$0xf]
  %v17 = vld [vmem:[%s1] sm:$0xff]
  %v18 = vld [vmem:[%s1 + $0x8] sm:$0xff]
  %v19 = vld [vmem:[%s1 + $0x10] sm:$0xff]
  %v20 = vld [vmem:[%s1 + $0x18] sm:$0xff]
  %v21 = vld [vmem:[%s1 + $0x20] sm:$0xff]
  %v22 = vld [vmem:[%s1 + $0x28] sm:$0xff]
  %v23 = vld [vmem:[%s1 + $0x30] sm:$0xff]
  %v24 = vld [vmem:[%s1 + $0x38] sm:$0xff]
  %v25 = vld [vmem:[%s1 + $0x40] sm:$0xff]
  %v26 = vpack.c.bf16 %v18, %v17
  %v27 = vpack.c.bf16 %v20, %v19
  %v28 = vpack.c.bf16 %v22, %v21
  %v29 = vpack.c.bf16 %v24, %v23
  %v30 = vpack.c.bf16 %v25, %v25
  %v31 = vld [vmem:[%s2] sm:$0xff]
  %v32 = vld [vmem:[%s2 + $0x8] sm:$0xff]
  %34 = vset.pattern.permute.xlu0 0
  %35 = vperm.xlu0 %34, %v31
  %v36 = vpop.permute.xlu0 %35
  %39 = vset.pattern.permute.xlu0 0
  %40 = vperm.xlu0 %39, %v32
  %v41 = vpop.permute.xlu0 %40
  %v45 = vunpack.c.l.b16 %v15
  %v46 = vunpack.c.l.b16 %v16
  %v47 = vpack.c.b16 %v46, %v45
  %vm48 = vcmask 588800
  %v50 = vsel %vm48, %v47, 0
  %vm52 = vcmask 1043456
  %v54 = vsel %vm52, %v30, 0
  %56 = vmatpush.bf16.msra.mxu0 0
  %57 = vmatpush.bf16.msra.mxu0 0
  %58 = vmatpush.bf16.msra.mxu0 0
  %59 = vmatpush.bf16.msra.mxu0 %v54
  %60 = vmatpush.bf16.msra.mxu0 %v29
  %61 = vmatpush.bf16.msra.mxu0 %v28
  %62 = vmatpush.bf16.msra.mxu0 %v27
  %63 = vmatpush.bf16.msra.mxu0 %v26
  %64 = vmatmul.bf16.gmra.mxu0 %v50
  %v65 = vpop.f32.mrf.mxu0
  %v66 = vadd.f32 %v36, %v65
  %v67 = vpop.f32.mrf.mxu0
  %v68 = vadd.f32 %v41, %v67
  %69 = vdwg.mxu0
  %v70 = vmax.f32 %v66, 0.0
  %v71 = vmax.f32 %v68, 0.0
  %72 = vst [vmem:[%s3] sm:$0xff] %v70
  %73 = vst [vmem:[%s3 + $0x8] sm:$0xff] %v71
  // Predicated region
  $region14: #{_forward.14} parent=0 // pred_check
    _
  $region15: #{_forward.14} parent=0 // pred_check_branch
    %75 = sbr.rel (0) target = $region17
  $region16: #{_forward.14} parent=0 // pred_region
    _
  $region17: #{_forward.14} parent=0 // pred_fallthru
    _
  // Predicated region
  $region18: #{_forward.14} parent=0 // pred_check
    _
  $region19: #{_forward.14} parent=0 // pred_check_branch
    %77 = sbr.rel (0) target = $region21
  $region20: #{_forward.14} parent=0 // pred_region
    _
  $region21: #{_forward.14} parent=0 // pred_fallthru
    _

// kernel: _forward.17
$region0: #{_forward.17}
  #allocation0 [shape = 'u32[]', space=smem, size = 0x4, offset = 0x4, fixed_abs, tag = 'smem constant byte address 0x4 - core index']
  #allocation1 [shape = 'u32[72,128]{1,0:T(1,128)}', space=vmem, size = 0x9000, scoped, tag = 'internal scratch']
  %s0 = inlined_call_operand.vmem [shape: bf16[32,16], index: 0, kind: input, shape index: {}]
  %s1 = inlined_call_operand.vmem [shape: f32[16,128], index: 1, kind: input, shape index: {}]
  %s2 = inlined_call_operand.vmem [shape: f32[32,1], index: 2, kind: input, shape index: {}]
  %s3 = inlined_call_operand.vmem [shape: f32[32,128], index: 3, kind: output, shape index: {}]
  %s4 = sld [smem:[#allocation0]]
  $region22: #{_forward.17} parent=0
    _
  %s6 = ssub.s32 1, %s4
  %s7 = scalar_select 0, %s6, %s4
  // Predicated region
  $region2: #{_forward.17} parent=0 // pred_check
    _
  $region3: #{_forward.17} parent=0 // pred_check_branch
    %9 = sbr.rel (0) target = $region5
  $region4: #{_forward.17} parent=0 // pred_region
    _
  $region5: #{_forward.17} parent=0 // pred_fallthru
    _
  // Predicated region
  $region6: #{_forward.17} parent=0 // pred_check
    _
  $region7: #{_forward.17} parent=0 // pred_check_branch
    %11 = sbr.rel (0) target = $region9
  $region8: #{_forward.17} parent=0 // pred_region
    _
  $region9: #{_forward.17} parent=0 // pred_fallthru
    _
  // Predicated region
  $region10: #{_forward.17} parent=0 // pred_check
    _
  $region11: #{_forward.17} parent=0 // pred_check_branch
    %13 = sbr.rel (0) target = $region13
  $region12: #{_forward.17} parent=0 // pred_region
    _
  $region13: #{_forward.17} parent=0 // pred_fallthru
    _
  %v15 = vld [vmem:[%s0] sm:$0xf]
  %v16 = vld [vmem:[%s0 + $0x4] sm:$0xf]
  %v17 = vld [vmem:[%s0 + $0x8] sm:$0xf]
  %v18 = vld [vmem:[%s0 + $0xc] sm:$0xf]
  %v19 = vld [vmem:[%s1] sm:$0xff]
  %v20 = vld [vmem:[%s1 + $0x8] sm:$0xff]
  %v21 = vpack.c.bf16 %v20, %v19
  %v22 = vld [vmem:[%s2] sm:$0xff]
  %v23 = vld [vmem:[%s2 + $0x8] sm:$0xff]
  %v24 = vld [vmem:[%s2 + $0x10] sm:$0xff]
  %v25 = vld [vmem:[%s2 + $0x18] sm:$0xff]
  %27 = vset.pattern.permute.xlu0 0
  %28 = vperm.xlu0 %27, %v22
  %v29 = vpop.permute.xlu0 %28
  %32 = vset.pattern.permute.xlu0 0
  %33 = vperm.xlu0 %32, %v23
  %v34 = vpop.permute.xlu0 %33
  %37 = vset.pattern.permute.xlu0 0
  %38 = vperm.xlu0 %37, %v24
  %v39 = vpop.permute.xlu0 %38
  %42 = vset.pattern.permute.xlu0 0
  %43 = vperm.xlu0 %42, %v25
  %v44 = vpop.permute.xlu0 %43
  %v50 = vunpack.c.l.b16 %v15
  %v51 = vunpack.c.l.b16 %v16
  %v52 = vunpack.c.l.b16 %v17
  %v53 = vunpack.c.l.b16 %v18
  %v54 = vpack.c.b16 %v51, %v50
  %v55 = vpack.c.b16 %v53, %v52
  %vm56 = vcmask 130048
  %v58 = vsel %vm56, %v54, 0
  %v61 = vsel %vm56, %v55, 0
  %63 = vmatpush.bf16.msra.mxu0 0
  %64 = vmatpush.bf16.msra.mxu0 0
  %65 = vmatpush.bf16.msra.mxu0 0
  %66 = vmatpush.bf16.msra.mxu0 0
  %67 = vmatpush.bf16.msra.mxu0 0
  %68 = vmatpush.bf16.msra.mxu0 0
  %69 = vmatpush.bf16.msra.mxu0 0
  %70 = vmatpush.bf16.msra.mxu0 %v21
  %71 = vmatmul.bf16.gmra.mxu0 %v58
  %v72 = vpop.f32.mrf.mxu0
  %v73 = vadd.f32 %v29, %v72
  %v74 = vpop.f32.mrf.mxu0
  %v75 = vadd.f32 %v34, %v74
  %76 = vmatmul.bf16.gmra.mxu0 %v61
  %v77 = vpop.f32.mrf.mxu0
  %v78 = vadd.f32 %v39, %v77
  %v79 = vpop.f32.mrf.mxu0
  %v80 = vadd.f32 %v44, %v79
  %81 = vdwg.mxu0
  %82 = vst [vmem:[%s3] sm:$0xff] %v73
  %83 = vst [vmem:[%s3 + $0x8] sm:$0xff] %v75
  %84 = vst [vmem:[%s3 + $0x10] sm:$0xff] %v78
  %85 = vst [vmem:[%s3 + $0x18] sm:$0xff] %v80
  // Predicated region
  $region14: #{_forward.17} parent=0 // pred_check
    _
  $region15: #{_forward.17} parent=0 // pred_check_branch
    %87 = sbr.rel (0) target = $region17
  $region16: #{_forward.17} parent=0 // pred_region
    _
  $region17: #{_forward.17} parent=0 // pred_fallthru
    _
  // Predicated region
  $region18: #{_forward.17} parent=0 // pred_check
    _
  $region19: #{_forward.17} parent=0 // pred_check_branch
    %89 = sbr.rel (0) target = $region21
  $region20: #{_forward.17} parent=0 // pred_region
    _
  $region21: #{_forward.17} parent=0 // pred_fallthru
    _

// kernel: _forward.15
$region0: #{_forward.15}
  #allocation0 [shape = 'u32[]', space=smem, size = 0x4, offset = 0x4, fixed_abs, tag = 'smem constant byte address 0x4 - core index']
  #allocation1 [shape = 'u32[72,128]{1,0:T(1,128)}', space=vmem, size = 0x9000, scoped, tag = 'internal scratch']
  %s0 = inlined_call_operand.vmem [shape: bf16[32,144], index: 0, kind: input, shape index: {}]
  %s1 = inlined_call_operand.vmem [shape: f32[144,32], index: 1, kind: input, shape index: {}]
  %s2 = inlined_call_operand.vmem [shape: f32[32,1], index: 2, kind: input, shape index: {}]
  %s3 = inlined_call_operand.vmem [shape: f32[32,32], index: 3, kind: output, shape index: {}]
  %s4 = sld [smem:[#allocation0]]
  $region22: #{_forward.15} parent=0
    _
  %s6 = ssub.s32 1, %s4
  %s7 = scalar_select 0, %s6, %s4
  // Predicated region
  $region2: #{_forward.15} parent=0 // pred_check
    _
  $region3: #{_forward.15} parent=0 // pred_check_branch
    %9 = sbr.rel (0) target = $region5
  $region4: #{_forward.15} parent=0 // pred_region
    _
  $region5: #{_forward.15} parent=0 // pred_fallthru
    _
  // Predicated region
  $region6: #{_forward.15} parent=0 // pred_check
    _
  $region7: #{_forward.15} parent=0 // pred_check_branch
    %11 = sbr.rel (0) target = $region9
  $region8: #{_forward.15} parent=0 // pred_region
    _
  $region9: #{_forward.15} parent=0 // pred_fallthru
    _
  // Predicated region
  $region10: #{_forward.15} parent=0 // pred_check
    _
  $region11: #{_forward.15} parent=0 // pred_check_branch
    %13 = sbr.rel (0) target = $region13
  $region12: #{_forward.15} parent=0 // pred_region
    _
  $region13: #{_forward.15} parent=0 // pred_fallthru
    _
  %v15 = vld [vmem:[%s0] sm:$0xff]
  %v16 = vld [vmem:[%s0 + $0x8] sm:$0xff]
  %v17 = vld [vmem:[%s0 + $0x10] sm:$0xff]
  %v18 = vld [vmem:[%s0 + $0x18] sm:$0xff]
  %v19 = vld [vmem:[%s1] sm:$0xff]
  %v20 = vld [vmem:[%s1 + $0x8] sm:$0xff]
  %v21 = vld [vmem:[%s1 + $0x10] sm:$0xff]
  %v22 = vld [vmem:[%s1 + $0x18] sm:$0xff]
  %v23 = vld [vmem:[%s1 + $0x20] sm:$0xff]
  %v24 = vld [vmem:[%s1 + $0x28] sm:$0xff]
  %v25 = vld [vmem:[%s1 + $0x30] sm:$0xff]
  %v26 = vld [vmem:[%s1 + $0x38] sm:$0xff]
  %v27 = vld [vmem:[%s1 + $0x40] sm:$0xff]
  %v28 = vld [vmem:[%s1 + $0x48] sm:$0xff]
  %v29 = vld [vmem:[%s1 + $0x50] sm:$0xff]
  %v30 = vld [vmem:[%s1 + $0x58] sm:$0xff]
  %v31 = vld [vmem:[%s1 + $0x60] sm:$0xff]
  %v32 = vld [vmem:[%s1 + $0x68] sm:$0xff]
  %v33 = vld [vmem:[%s1 + $0x70] sm:$0xff]
  %v34 = vld [vmem:[%s1 + $0x78] sm:$0xff]
  %v35 = vld [vmem:[%s1 + $0x80] sm:$0xff]
  %v36 = vld [vmem:[%s1 + $0x88] sm:$0xff]
  %v37 = vpack.c.bf16 %v20, %v19
  %v38 = vpack.c.bf16 %v22, %v21
  %v39 = vpack.c.bf16 %v24, %v23
  %v40 = vpack.c.bf16 %v26, %v25
  %v41 = vpack.c.bf16 %v28, %v27
  %v42 = vpack.c.bf16 %v30, %v29
  %v43 = vpack.c.bf16 %v32, %v31
  %v44 = vpack.c.bf16 %v34, %v33
  %v45 = vpack.c.bf16 %v36, %v35
  %v46 = vld [vmem:[%s2] sm:$0xff]
  %v47 = vld [vmem:[%s2 + $0x8] sm:$0xff]
  %v48 = vld [vmem:[%s2 + $0x10] sm:$0xff]
  %v49 = vld [vmem:[%s2 + $0x18] sm:$0xff]
  %51 = vset.pattern.permute.xlu0 0
  %52 = vperm.xlu0 %51, %v46
  %v53 = vpop.permute.xlu0 %52
  %56 = vset.pattern.permute.xlu0 0
  %57 = vperm.xlu0 %56, %v47
  %v58 = vpop.permute.xlu0 %57
  %61 = vset.pattern.permute.xlu0 0
  %62 = vperm.xlu0 %61, %v48
  %v63 = vpop.permute.xlu0 %62
  %66 = vset.pattern.permute.xlu0 0
  %67 = vperm.xlu0 %66, %v49
  %v68 = vpop.permute.xlu0 %67
  %v74 = vunpack.c.l.b16 %v15
  %v75 = vunpack.c.h.b16 %v15
  %v76 = vunpack.c.l.b16 %v16
  %v77 = vunpack.c.h.b16 %v16
  %v78 = vunpack.c.l.b16 %v17
  %v79 = vunpack.c.h.b16 %v17
  %v80 = vunpack.c.l.b16 %v18
  %v81 = vunpack.c.h.b16 %v18
  %v82 = vpack.c.b16 %v76, %v74
  %v83 = vpack.c.b16 %v77, %v75
  %v84 = vpack.c.b16 %v80, %v78
  %v85 = vpack.c.b16 %v81, %v79
  %vm88 = vcmask 130048
  %v90 = vsel %vm88, %v83, 0
  %v93 = vsel %vm88, %v85, 0
  %95 = vmatpush.bf16.msra.mxu0 %v44
  %96 = vmatpush.bf16.msra.mxu0 %v43
  %97 = vmatpush.bf16.msra.mxu0 %v42
  %98 = vmatpush.bf16.msra.mxu0 %v41
  %99 = vmatpush.bf16.msra.mxu0 %v40
  %100 = vmatpush.bf16.msra.mxu0 %v39
  %101 = vmatpush.bf16.msra.mxu0 %v38
  %102 = vmatpush.bf16.msra.mxu0 %v37
  %103 = vmatmul.bf16.gmra.mxu0 %v82
  %v104 = vpop.f32.mrf.mxu0
  %v105 = vadd.f32 %v53, %v104
  %v106 = vpop.f32.mrf.mxu0
  %v107 = vadd.f32 %v58, %v106
  %108 = vmatmul.bf16.gmra.mxu0 %v84
  %v109 = vpop.f32.mrf.mxu0
  %v110 = vadd.f32 %v63, %v109
  %v111 = vpop.f32.mrf.mxu0
  %v112 = vadd.f32 %v68, %v111
  %113 = vdwg.mxu0
  %114 = vmatpush.bf16.msra.mxu0 0
  %115 = vmatpush.bf16.msra.mxu0 0
  %116 = vmatpush.bf16.msra.mxu0 0
  %117 = vmatpush.bf16.msra.mxu0 0
  %118 = vmatpush.bf16.msra.mxu0 0
  %119 = vmatpush.bf16.msra.mxu0 0
  %120 = vmatpush.bf16.msra.mxu0 0
  %121 = vmatpush.bf16.msra.mxu0 %v45
  %122 = vmatmul.bf16.gmra.mxu0 %v90
  %v123 = vpop.f32.mrf.mxu0
  %v124 = vadd.f32 %v105, %v123
  %v125 = vpop.f32.mrf.mxu0
  %v126 = vadd.f32 %v107, %v125
  %127 = vmatmul.bf16.gmra.mxu0 %v93
  %v128 = vpop.f32.mrf.mxu0
  %v129 = vadd.f32 %v110, %v128
  %v130 = vpop.f32.mrf.mxu0
  %v131 = vadd.f32 %v112, %v130
  %132 = vdwg.mxu0
  %v133 = vmax.f32 %v124, 0.0
  %v134 = vmax.f32 %v126, 0.0
  %v135 = vmax.f32 %v129, 0.0
  %v136 = vmax.f32 %v131, 0.0
  %vm137 = vcmask 261120
  %138 = vst.msk [vmem:[%s3] sm:$0xff] %vm137, %v133
  %139 = vst.msk [vmem:[%s3 + $0x8] sm:$0xff] %vm137, %v134
  %140 = vst.msk [vmem:[%s3 + $0x10] sm:$0xff] %vm137, %v135
  %141 = vst.msk [vmem:[%s3 + $0x18] sm:$0xff] %vm137, %v136
  // Predicated region
  $region14: #{_forward.15} parent=0 // pred_check
    _
  $region15: #{_forward.15} parent=0 // pred_check_branch
    %143 = sbr.rel (0) target = $region17
  $region16: #{_forward.15} parent=0 // pred_region
    _
  $region17: #{_forward.15} parent=0 // pred_fallthru
    _
  // Predicated region
  $region18: #{_forward.15} parent=0 // pred_check
    _
  $region19: #{_forward.15} parent=0 // pred_check_branch
    %145 = sbr.rel (0) target = $region21
  $region20: #{_forward.15} parent=0 // pred_region
    _
  $region21: #{_forward.15} parent=0 // pred_fallthru
    _

// kernel: _forward.16
$region0: #{_forward.16}
  #allocation0 [shape = 'u32[]', space=smem, size = 0x4, offset = 0x4, fixed_abs, tag = 'smem constant byte address 0x4 - core index']
  #allocation1 [shape = 'u32[72,128]{1,0:T(1,128)}', space=vmem, size = 0x9000, scoped, tag = 'internal scratch']
  %s0 = inlined_call_operand.vmem [shape: bf16[32,32], index: 0, kind: input, shape index: {}]
  %s1 = inlined_call_operand.vmem [shape: f32[32,32], index: 1, kind: input, shape index: {}]
  %s2 = inlined_call_operand.vmem [shape: f32[32,1], index: 2, kind: input, shape index: {}]
  %s3 = inlined_call_operand.vmem [shape: f32[32,32], index: 3, kind: output, shape index: {}]
  %s4 = sld [smem:[#allocation0]]
  $region22: #{_forward.16} parent=0
    _
  %s6 = ssub.s32 1, %s4
  %s7 = scalar_select 0, %s6, %s4
  // Predicated region
  $region2: #{_forward.16} parent=0 // pred_check
    _
  $region3: #{_forward.16} parent=0 // pred_check_branch
    %9 = sbr.rel (0) target = $region5
  $region4: #{_forward.16} parent=0 // pred_region
    _
  $region5: #{_forward.16} parent=0 // pred_fallthru
    _
  // Predicated region
  $region6: #{_forward.16} parent=0 // pred_check
    _
  $region7: #{_forward.16} parent=0 // pred_check_branch
    %11 = sbr.rel (0) target = $region9
  $region8: #{_forward.16} parent=0 // pred_region
    _
  $region9: #{_forward.16} parent=0 // pred_fallthru
    _
  // Predicated region
  $region10: #{_forward.16} parent=0 // pred_check
    _
  $region11: #{_forward.16} parent=0 // pred_check_branch
    %13 = sbr.rel (0) target = $region13
  $region12: #{_forward.16} parent=0 // pred_region
    _
  $region13: #{_forward.16} parent=0 // pred_fallthru
    _
  %v15 = vld [vmem:[%s0] sm:$0xf]
  %v16 = vld [vmem:[%s0 + $0x4] sm:$0xf]
  %v17 = vld [vmem:[%s0 + $0x8] sm:$0xf]
  %v18 = vld [vmem:[%s0 + $0xc] sm:$0xf]
  %v19 = vld [vmem:[%s1] sm:$0xff]
  %v20 = vld [vmem:[%s1 + $0x8] sm:$0xff]
  %v21 = vld [vmem:[%s1 + $0x10] sm:$0xff]
  %v22 = vld [vmem:[%s1 + $0x18] sm:$0xff]
  %v23 = vpack.c.bf16 %v20, %v19
  %v24 = vpack.c.bf16 %v22, %v21
  %v25 = vld [vmem:[%s2] sm:$0xff]
  %v26 = vld [vmem:[%s2 + $0x8] sm:$0xff]
  %v27 = vld [vmem:[%s2 + $0x10] sm:$0xff]
  %v28 = vld [vmem:[%s2 + $0x18] sm:$0xff]
  %30 = vset.pattern.permute.xlu0 0
  %31 = vperm.xlu0 %30, %v25
  %v32 = vpop.permute.xlu0 %31
  %35 = vset.pattern.permute.xlu0 0
  %36 = vperm.xlu0 %35, %v26
  %v37 = vpop.permute.xlu0 %36
  %40 = vset.pattern.permute.xlu0 0
  %41 = vperm.xlu0 %40, %v27
  %v42 = vpop.permute.xlu0 %41
  %45 = vset.pattern.permute.xlu0 0
  %46 = vperm.xlu0 %45, %v28
  %v47 = vpop.permute.xlu0 %46
  %v53 = vunpack.c.l.b16 %v15
  %v54 = vunpack.c.l.b16 %v16
  %v55 = vunpack.c.l.b16 %v17
  %v56 = vunpack.c.l.b16 %v18
  %v57 = vpack.c.b16 %v54, %v53
  %v58 = vpack.c.b16 %v56, %v55
  %vm59 = vcmask 261120
  %v61 = vsel %vm59, %v57, 0
  %v64 = vsel %vm59, %v58, 0
  %66 = vmatpush.bf16.msra.mxu0 0
  %67 = vmatpush.bf16.msra.mxu0 0
  %68 = vmatpush.bf16.msra.mxu0 0
  %69 = vmatpush.bf16.msra.mxu0 0
  %70 = vmatpush.bf16.msra.mxu0 0
  %71 = vmatpush.bf16.msra.mxu0 0
  %72 = vmatpush.bf16.msra.mxu0 %v24
  %73 = vmatpush.bf16.msra.mxu0 %v23
  %74 = vmatmul.bf16.gmra.mxu0 %v61
  %v75 = vpop.f32.mrf.mxu0
  %v76 = vadd.f32 %v32, %v75
  %v77 = vpop.f32.mrf.mxu0
  %v78 = vadd.f32 %v37, %v77
  %79 = vmatmul.bf16.gmra.mxu0 %v64
  %v80 = vpop.f32.mrf.mxu0
  %v81 = vadd.f32 %v42, %v80
  %v82 = vpop.f32.mrf.mxu0
  %v83 = vadd.f32 %v47, %v82
  %84 = vdwg.mxu0
  %85 = vst.msk [vmem:[%s3] sm:$0xff] %vm59, %v76
  %86 = vst.msk [vmem:[%s3 + $0x8] sm:$0xff] %vm59, %v78
  %87 = vst.msk [vmem:[%s3 + $0x10] sm:$0xff] %vm59, %v81
  %88 = vst.msk [vmem:[%s3 + $0x18] sm:$0xff] %vm59, %v83
  // Predicated region
  $region14: #{_forward.16} parent=0 // pred_check
    _
  $region15: #{_forward.16} parent=0 // pred_check_branch
    %90 = sbr.rel (0) target = $region17
  $region16: #{_forward.16} parent=0 // pred_region
    _
  $region17: #{_forward.16} parent=0 // pred_fallthru
    _
  // Predicated region
  $region18: #{_forward.16} parent=0 // pred_check
    _
  $region19: #{_forward.16} parent=0 // pred_check_branch
    %92 = sbr.rel (0) target = $region21
  $region20: #{_forward.16} parent=0 // pred_region
    _
  $region21: #{_forward.16} parent=0 // pred_fallthru
    _

// kernel: _forward.18
$region0: #{_forward.18}
  #allocation0 [shape = 'u32[]', space=smem, size = 0x4, offset = 0x4, fixed_abs, tag = 'smem constant byte address 0x4 - core index']
  #allocation1 [shape = 'u32[72,128]{1,0:T(1,128)}', space=vmem, size = 0x9000, scoped, tag = 'internal scratch']
  %s0 = inlined_call_operand.vmem [shape: f32[256,4], index: 0, kind: input, shape index: {}]
  %s1 = inlined_call_operand.vmem [shape: bf16[4,8], index: 1, kind: input, shape index: {}]
  %s2 = inlined_call_operand.vmem [shape: f32[256,8], index: 2, kind: output, shape index: {}]
  %s3 = sld [smem:[#allocation0]]
  $region41: #{_forward.18} parent=0
    _
  %s5 = ssub.s32 1, %s3
  %s6 = scalar_select 0, %s5, %s3
  loop: start=0, step=1, limit=4
  $region2: #{_forward.18} parent=0 // loop_pre_header
    _
  $region3: #{_forward.18} parent=0 // loop_header
    %s8 = sphi 0, %s12
    %p9 = scmp.ge.s32.totalorder %s8, 4
    %s18 = sphi 0, %s20
    %s21 = sphi 0, %s18
    %s22 = sphi 0, %s21
    %s38 = sphi 0, %s22
    %s42 = sphi 0, %s42
    %s44 = sphi 0, %s42
    %s45 = sphi 0, %s44
    %s59 = sphi 0, %s45
    %s65 = sphi 0, %s67
    %s68 = sphi 0, %s65
    %s69 = sphi 0, %s68
    %s85 = sphi 0, %s69
  $region4: #{_forward.18} parent=0 // loop_header_branch
    %11 = sbr.rel (%p9) target = $region8
  $region5: #{_forward.18} parent=0 // loop_body
    %s13 = ssub.s32 %s8, 1
    %s14 = ssub.s32 %s8, 2
    %s15 = sadd.s32 %s8, 1
    %s16 = ssub.s32 %s8, %s15
    %p17 = scmp.eq.s32.totalorder %s16, 0
    %s19 = sadd.s32 %s18, 1
    %s20 = scalar_select %p17, %s18, %s19
    %p23 = pneg %p17
    %p24 = scmp.eq.s32.totalorder %s8, 1
    %p25 = por %p23, %p24
    %p26 = scmp.ne.s32.totalorder %s18, %s21
    %p27 = scmp.eq.s32.totalorder %s8, 0
    %p28 = por %p26, %p27
    %p29 = scmp.ne.s32.totalorder %s18, %s21
    %p30 = scmp.eq.s32.totalorder %s13, 1
    %p31 = por %p29, %p30
    %p32 = scmp.ne.s32.totalorder %s21, %s22
    %p33 = scmp.eq.s32.totalorder %s13, 0
    %p34 = por %p32, %p33
    %p35 = scmp.ne.s32.totalorder %s21, %s22
    %p36 = scmp.eq.s32.totalorder %s14, 1
    %p37 = por %p35, %p36
    %p39 = scmp.ne.s32.totalorder %s22, %s38
    %p40 = scmp.eq.s32.totalorder %s14, 0
    %p41 = por %p39, %p40
    %s43 = sadd.s32 %s42, 1
    %p46 = scmp.eq.s32.totalorder %s8, 1
    %p47 = scmp.ne.s32.totalorder %s42, %s44
    %p48 = scmp.eq.s32.totalorder %s8, 0
    %p49 = por %p47, %p48
    %p50 = scmp.ne.s32.totalorder %s42, %s44
    %p51 = scmp.eq.s32.totalorder %s13, 1
    %p52 = por %p50, %p51
    %p53 = scmp.ne.s32.totalorder %s44, %s45
    %p54 = scmp.eq.s32.totalorder %s13, 0
    %p55 = por %p53, %p54
    %p56 = scmp.ne.s32.totalorder %s44, %s45
    %p57 = scmp.eq.s32.totalorder %s14, 1
    %p58 = por %p56, %p57
    %p60 = scmp.ne.s32.totalorder %s45, %s59
    %p61 = scmp.eq.s32.totalorder %s14, 0
    %p62 = por %p60, %p61
    %s63 = ssub.s32 %s8, %s15
    %p64 = scmp.eq.s32.totalorder %s63, 0
    %s66 = sadd.s32 %s65, 1
    %s67 = scalar_select %p64, %s65, %s66
    %p70 = pneg %p64
    %p71 = scmp.eq.s32.totalorder %s8, 1
    %p72 = por %p70, %p71
    %p73 = scmp.ne.s32.totalorder %s65, %s68
    %p74 = scmp.eq.s32.totalorder %s8, 0
    %p75 = por %p73, %p74
    %p76 = scmp.ne.s32.totalorder %s65, %s68
    %p77 = scmp.eq.s32.totalorder %s13, 1
    %p78 = por %p76, %p77
    %p79 = scmp.ne.s32.totalorder %s68, %s69
    %p80 = scmp.eq.s32.totalorder %s13, 0
    %p81 = por %p79, %p80
    %p82 = scmp.ne.s32.totalorder %s68, %s69
    %p83 = scmp.eq.s32.totalorder %s14, 1
    %p84 = por %p82, %p83
    %p86 = scmp.ne.s32.totalorder %s69, %s85
    %p87 = scmp.eq.s32.totalorder %s14, 0
    %p88 = por %p86, %p87
    %p89 = scmp.le.s32.totalorder 1, %s8
    %p90 = scmp.lt.s32.totalorder %s8, 3
    %p91 = pnand %p89, %p90
    %p92 = pneg %p91
    // Predicated region
    $region9: #{_forward.18} parent=5 // pred_check
      _
    $region10: #{_forward.18} parent=5 // pred_check_branch
      %94 = sbr.rel (%p91) target = $region12
    $region11: #{_forward.18} parent=5 // pred_region
      %s95 = ssub.s32 %s8, 1
      // Predicated region
      $region13: #{_forward.18} parent=11 // pred_check
        %p96 = pneg %p55
      $region14: #{_forward.18} parent=11 // pred_check_branch
        %98 = sbr.rel (%p96) target = $region16
      $region15: #{_forward.18} parent=11 // pred_region
        _
      $region16: #{_forward.18} parent=11 // pred_fallthru
        _
    $region12: #{_forward.18} parent=5 // pred_fallthru
      _
    %p99 = scmp.lt.s32.totalorder %s8, 2
    // Predicated region
    $region17: #{_forward.18} parent=5 // pred_check
      %p100 = pneg %p99
    $region18: #{_forward.18} parent=5 // pred_check_branch
      %102 = sbr.rel (%p100) target = $region20
    $region19: #{_forward.18} parent=5 // pred_region
      // Predicated region
      $region21: #{_forward.18} parent=19 // pred_check
        %p103 = pneg %p28
      $region22: #{_forward.18} parent=19 // pred_check_branch
        %105 = sbr.rel (%p103) target = $region24
      $region23: #{_forward.18} parent=19 // pred_region
        %s106 = smul.u32 16, %s8
        %p107 = scmp.lt.s32.totalorder %s106, 31
        %s108 = scalar_select %p107, %s106, 31
        %s109 = smul.addr %s108, 8
        %s110 = scalar_lea.vmem %s0, %s109
        %s111 = smul.u32 16, %s8
      $region24: #{_forward.18} parent=19 // pred_fallthru
        _
    $region20: #{_forward.18} parent=5 // pred_fallthru
      _
    %p112 = scmp.le.s32.totalorder 1, %s8
    %p113 = scmp.lt.s32.totalorder %s8, 3
    %p114 = pnand %p112, %p113
    %p115 = pneg %p114
    // Predicated region
    $region25: #{_forward.18} parent=5 // pred_check
      _
    $region26: #{_forward.18} parent=5 // pred_check_branch
      %117 = sbr.rel (%p114) target = $region28
    $region27: #{_forward.18} parent=5 // pred_region
      %s118 = ssub.s32 %s8, 1
      %s119 = smul.u32 16, %s13
      %p120 = scmp.lt.s32.totalorder %s119, 31
      %s121 = scalar_select %p120, %s119, 31
      %s122 = smul.addr %s121, 8
      %s123 = scalar_lea.vmem %s0, %s122
      %p124 = pneg %p34
      %p125 = pneg %p31
      %p126 = pneg %p55
      %p127 = pneg %p52
      %p128 = pneg %p81
      %p129 = pneg %p78
      %s130 = smul.u32 16, %s13
      %p131 = scmp.lt.s32.totalorder %s130, 31
      %s132 = scalar_select %p131, %s130, 31
      %s133 = smul.addr %s132, 8
      %s134 = scalar_lea.vmem %s2, %s133
      %s135 = smul.u32 16, %s13
      %p136 = scmp.lt.s32.totalorder %s135, 31
      %s137 = scalar_select %p136, %s135, 31
      %s138 = smul.addr %s137, 8
      %s139 = scalar_lea.vmem %s0, %s138
      %s140 = smul.u32 16, %s13
      %s141 = smul.u32 16, %s13
      %p142 = scmp.lt.s32.totalorder %s141, 31
      %s143 = scalar_select %p142, %s141, 31
      %s144 = smul.addr %s143, 8
      %s145 = scalar_lea.vmem %s2, %s144
      %s146 = smul.u32 16, %s13
      %v148 = vld [vmem:[%s139] sm:$0xff]
      %v149 = vld [vmem:[%s139 + $0x8] sm:$0xff]
      %v150 = vld [vmem:[%s139 + $0x10] sm:$0xff]
      %v151 = vld [vmem:[%s139 + $0x18] sm:$0xff]
      %v152 = vld [vmem:[%s139 + $0x20] sm:$0xff]
      %v153 = vld [vmem:[%s139 + $0x28] sm:$0xff]
      %v154 = vld [vmem:[%s139 + $0x30] sm:$0xff]
      %v155 = vld [vmem:[%s139 + $0x38] sm:$0xff]
      %v156 = vld [vmem:[%s139 + $0x40] sm:$0xff]
      %v157 = vld [vmem:[%s139 + $0x48] sm:$0xff]
      %v158 = vld [vmem:[%s139 + $0x50] sm:$0xff]
      %v159 = vld [vmem:[%s139 + $0x58] sm:$0xff]
      %v160 = vld [vmem:[%s139 + $0x60] sm:$0xff]
      %v161 = vld [vmem:[%s139 + $0x68] sm:$0xff]
      %v162 = vld [vmem:[%s139 + $0x70] sm:$0xff]
      %v163 = vld [vmem:[%s139 + $0x78] sm:$0xff]
      %v164 = vpack.c.bf16 %v149, %v148
      %v165 = vpack.c.bf16 %v151, %v150
      %v166 = vpack.c.bf16 %v153, %v152
      %v167 = vpack.c.bf16 %v155, %v154
      %v168 = vpack.c.bf16 %v157, %v156
      %v169 = vpack.c.bf16 %v159, %v158
      %v170 = vpack.c.bf16 %v161, %v160
      %v171 = vpack.c.bf16 %v163, %v162
      %v172 = vld [vmem:[%s1] sm:$0x3]
      %vm173 = vcmask 31744
      %v175 = vsel %vm173, %v164, 0
      %v178 = vsel %vm173, %v165, 0
      %v181 = vsel %vm173, %v166, 0
      %v184 = vsel %vm173, %v167, 0
      %v187 = vsel %vm173, %v168, 0
      %v190 = vsel %vm173, %v169, 0
      %v193 = vsel %vm173, %v170, 0
      %v196 = vsel %vm173, %v171, 0
      %vm198 = vcmask 1041408
      %v200 = vsel %vm198, %v172, 0
      %202 = vmatpush.bf16.msra.mxu0 0
      %203 = vmatpush.bf16.msra.mxu0 0
      %204 = vmatpush.bf16.msra.mxu0 0
      %205 = vmatpush.bf16.msra.mxu0 0
      %206 = vmatpush.bf16.msra.mxu0 0
      %207 = vmatpush.bf16.msra.mxu0 0
      %208 = vmatpush.bf16.msra.mxu0 0
      %209 = vmatpush.bf16.msra.mxu0 %v200
      %210 = vmatmul.bf16.gmra.mxu0 %v175
      %v211 = vpop.f32.mrf.mxu0
      %v212 = vadd.f32 0.0, %v211
      %v213 = vpop.f32.mrf.mxu0
      %v214 = vadd.f32 0.0, %v213
      %215 = vmatmul.bf16.gmra.mxu0 %v178
      %v216 = vpop.f32.mrf.mxu0
      %v217 = vadd.f32 0.0, %v216
      %v218 = vpop.f32.mrf.mxu0
      %v219 = vadd.f32 0.0, %v218
      %220 = vmatmul.bf16.gmra.mxu0 %v181
      %v221 = vpop.f32.mrf.mxu0
      %v222 = vadd.f32 0.0, %v221
      %v223 = vpop.f32.mrf.mxu0
      %v224 = vadd.f32 0.0, %v223
      %225 = vmatmul.bf16.gmra.mxu0 %v184
      %v226 = vpop.f32.mrf.mxu0
      %v227 = vadd.f32 0.0, %v226
      %v228 = vpop.f32.mrf.mxu0
      %v229 = vadd.f32 0.0, %v228
      %230 = vmatmul.bf16.gmra.mxu0 %v187
      %v231 = vpop.f32.mrf.mxu0
      %v232 = vadd.f32 0.0, %v231
      %v233 = vpop.f32.mrf.mxu0
      %v234 = vadd.f32 0.0, %v233
      %235 = vmatmul.bf16.gmra.mxu0 %v190
      %v236 = vpop.f32.mrf.mxu0
      %v237 = vadd.f32 0.0, %v236
      %v238 = vpop.f32.mrf.mxu0
      %v239 = vadd.f32 0.0, %v238
      %240 = vmatmul.bf16.gmra.mxu0 %v193
      %v241 = vpop.f32.mrf.mxu0
      %v242 = vadd.f32 0.0, %v241
      %v243 = vpop.f32.mrf.mxu0
      %v244 = vadd.f32 0.0, %v243
      %245 = vmatmul.bf16.gmra.mxu0 %v196
      %v246 = vpop.f32.mrf.mxu0
      %v247 = vadd.f32 0.0, %v246
      %v248 = vpop.f32.mrf.mxu0
      %v249 = vadd.f32 0.0, %v248
      %250 = vdwg.mxu0
      %vm251 = vcmask 64512
      %252 = vst.msk [vmem:[%s145] sm:$0xff] %vm251, %v212
      %253 = vst.msk [vmem:[%s145 + $0x8] sm:$0xff] %vm251, %v214
      %254 = vst.msk [vmem:[%s145 + $0x10] sm:$0xff] %vm251, %v217
      %255 = vst.msk [vmem:[%s145 + $0x18] sm:$0xff] %vm251, %v219
      %256 = vst.msk [vmem:[%s145 + $0x20] sm:$0xff] %vm251, %v222
      %257 = vst.msk [vmem:[%s145 + $0x28] sm:$0xff] %vm251, %v224
      %258 = vst.msk [vmem:[%s145 + $0x30] sm:$0xff] %vm251, %v227
      %259 = vst.msk [vmem:[%s145 + $0x38] sm:$0xff] %vm251, %v229
      %260 = vst.msk [vmem:[%s145 + $0x40] sm:$0xff] %vm251, %v232
      %261 = vst.msk [vmem:[%s145 + $0x48] sm:$0xff] %vm251, %v234
      %262 = vst.msk [vmem:[%s145 + $0x50] sm:$0xff] %vm251, %v237
      %263 = vst.msk [vmem:[%s145 + $0x58] sm:$0xff] %vm251, %v239
      %264 = vst.msk [vmem:[%s145 + $0x60] sm:$0xff] %vm251, %v242
      %265 = vst.msk [vmem:[%s145 + $0x68] sm:$0xff] %vm251, %v244
      %266 = vst.msk [vmem:[%s145 + $0x70] sm:$0xff] %vm251, %v247
      %267 = vst.msk [vmem:[%s145 + $0x78] sm:$0xff] %vm251, %v249
      %s268 = smul.u32 16, %s13
      %p269 = scmp.lt.s32.totalorder %s268, 31
      %s270 = scalar_select %p269, %s268, 31
      %s271 = smul.addr %s270, 8
      %s272 = scalar_lea.vmem %s2, %s271
      // Predicated region
      $region29: #{_forward.18} parent=27 // pred_check
        %p273 = pneg %p78
      $region30: #{_forward.18} parent=27 // pred_check_branch
        %275 = sbr.rel (%p273) target = $region32
      $region31: #{_forward.18} parent=27 // pred_region
        %s276 = smul.u32 16, %s13
      $region32: #{_forward.18} parent=27 // pred_fallthru
        _
    $region28: #{_forward.18} parent=5 // pred_fallthru
      _
    %p277 = scmp.le.s32.totalorder 2, %s8
    // Predicated region
    $region33: #{_forward.18} parent=5 // pred_check
      %p278 = pneg %p277
    $region34: #{_forward.18} parent=5 // pred_check_branch
      %280 = sbr.rel (%p278) target = $region36
    $region35: #{_forward.18} parent=5 // pred_region
      %s281 = ssub.s32 %s8, 2
      // Predicated region
      $region37: #{_forward.18} parent=35 // pred_check
        %p282 = pneg %p84
      $region38: #{_forward.18} parent=35 // pred_check_branch
        %284 = sbr.rel (%p282) target = $region40
      $region39: #{_forward.18} parent=35 // pred_region
        %s285 = smul.u32 16, %s14
        %p286 = scmp.lt.s32.totalorder %s285, 31
        %s287 = scalar_select %p286, %s285, 31
        %s288 = smul.addr %s287, 8
        %s289 = scalar_lea.vmem %s2, %s288
      $region40: #{_forward.18} parent=35 // pred_fallthru
        _
    $region36: #{_forward.18} parent=5 // pred_fallthru
      _
  $region6: #{_forward.18} parent=0 // loop_footer
    %s12 = sadd.s32 1, %s8
  $region7: #{_forward.18} parent=0 // loop_footer_branch
    %7 = sbr.rel target = $region3
  $region8: #{_forward.18} parent=0 // loop_exit
    _

// kernel: _forward.19
$region0: #{_forward.19}
  #allocation0 [shape = 'u32[]', space=smem, size = 0x4, offset = 0x4, fixed_abs, tag = 'smem constant byte address 0x4 - core index']
  #allocation1 [shape = 'u32[72,128]{1,0:T(1,128)}', space=vmem, size = 0x9000, scoped, tag = 'internal scratch']
  %s0 = inlined_call_operand.vmem [shape: f32[512,4], index: 0, kind: input, shape index: {}]
  %s1 = inlined_call_operand.vmem [shape: bf16[4,8], index: 1, kind: input, shape index: {}]
  %s2 = inlined_call_operand.vmem [shape: f32[512,8], index: 2, kind: input, shape index: {}]
  %s3 = inlined_call_operand.vmem [shape: f32[512,8], index: 3, kind: output, shape index: {}]
  %s4 = sld [smem:[#allocation0]]
  $region45: #{_forward.19} parent=0
    _
  %s6 = ssub.s32 1, %s4
  %s7 = scalar_select 0, %s6, %s4
  loop: start=0, step=1, limit=4
  $region2: #{_forward.19} parent=0 // loop_pre_header
    _
  $region3: #{_forward.19} parent=0 // loop_header
    %s9 = sphi 0, %s13
    %p10 = scmp.ge.s32.totalorder %s9, 4
    %s19 = sphi 0, %s21
    %s22 = sphi 0, %s19
    %s23 = sphi 0, %s22
    %s39 = sphi 0, %s23
    %s43 = sphi 0, %s43
    %s45 = sphi 0, %s43
    %s46 = sphi 0, %s45
    %s60 = sphi 0, %s46
    %s66 = sphi 0, %s68
    %s69 = sphi 0, %s66
    %s70 = sphi 0, %s69
    %s86 = sphi 0, %s70
    %s92 = sphi 0, %s94
    %s95 = sphi 0, %s92
    %s96 = sphi 0, %s95
    %s112 = sphi 0, %s96
  $region4: #{_forward.19} parent=0 // loop_header_branch
    %12 = sbr.rel (%p10) target = $region8
  $region5: #{_forward.19} parent=0 // loop_body
    %s14 = ssub.s32 %s9, 1
    %s15 = ssub.s32 %s9, 2
    %s16 = sadd.s32 %s9, 1
    %s17 = ssub.s32 %s9, %s16
    %p18 = scmp.eq.s32.totalorder %s17, 0
    %s20 = sadd.s32 %s19, 1
    %s21 = scalar_select %p18, %s19, %s20
    %p24 = pneg %p18
    %p25 = scmp.eq.s32.totalorder %s9, 1
    %p26 = por %p24, %p25
    %p27 = scmp.ne.s32.totalorder %s19, %s22
    %p28 = scmp.eq.s32.totalorder %s9, 0
    %p29 = por %p27, %p28
    %p30 = scmp.ne.s32.totalorder %s19, %s22
    %p31 = scmp.eq.s32.totalorder %s14, 1
    %p32 = por %p30, %p31
    %p33 = scmp.ne.s32.totalorder %s22, %s23
    %p34 = scmp.eq.s32.totalorder %s14, 0
    %p35 = por %p33, %p34
    %p36 = scmp.ne.s32.totalorder %s22, %s23
    %p37 = scmp.eq.s32.totalorder %s15, 1
    %p38 = por %p36, %p37
    %p40 = scmp.ne.s32.totalorder %s23, %s39
    %p41 = scmp.eq.s32.totalorder %s15, 0
    %p42 = por %p40, %p41
    %s44 = sadd.s32 %s43, 1
    %p47 = scmp.eq.s32.totalorder %s9, 1
    %p48 = scmp.ne.s32.totalorder %s43, %s45
    %p49 = scmp.eq.s32.totalorder %s9, 0
    %p50 = por %p48, %p49
    %p51 = scmp.ne.s32.totalorder %s43, %s45
    %p52 = scmp.eq.s32.totalorder %s14, 1
    %p53 = por %p51, %p52
    %p54 = scmp.ne.s32.totalorder %s45, %s46
    %p55 = scmp.eq.s32.totalorder %s14, 0
    %p56 = por %p54, %p55
    %p57 = scmp.ne.s32.totalorder %s45, %s46
    %p58 = scmp.eq.s32.totalorder %s15, 1
    %p59 = por %p57, %p58
    %p61 = scmp.ne.s32.totalorder %s46, %s60
    %p62 = scmp.eq.s32.totalorder %s15, 0
    %p63 = por %p61, %p62
    %s64 = ssub.s32 %s9, %s16
    %p65 = scmp.eq.s32.totalorder %s64, 0
    %s67 = sadd.s32 %s66, 1
    %s68 = scalar_select %p65, %s66, %s67
    %p71 = pneg %p65
    %p72 = scmp.eq.s32.totalorder %s9, 1
    %p73 = por %p71, %p72
    %p74 = scmp.ne.s32.totalorder %s66, %s69
    %p75 = scmp.eq.s32.totalorder %s9, 0
    %p76 = por %p74, %p75
    %p77 = scmp.ne.s32.totalorder %s66, %s69
    %p78 = scmp.eq.s32.totalorder %s14, 1
    %p79 = por %p77, %p78
    %p80 = scmp.ne.s32.totalorder %s69, %s70
    %p81 = scmp.eq.s32.totalorder %s14, 0
    %p82 = por %p80, %p81
    %p83 = scmp.ne.s32.totalorder %s69, %s70
    %p84 = scmp.eq.s32.totalorder %s15, 1
    %p85 = por %p83, %p84
    %p87 = scmp.ne.s32.totalorder %s70, %s86
    %p88 = scmp.eq.s32.totalorder %s15, 0
    %p89 = por %p87, %p88
    %s90 = ssub.s32 %s9, %s16
    %p91 = scmp.eq.s32.totalorder %s90, 0
    %s93 = sadd.s32 %s92, 1
    %s94 = scalar_select %p91, %s92, %s93
    %p97 = pneg %p91
    %p98 = scmp.eq.s32.totalorder %s9, 1
    %p99 = por %p97, %p98
    %p100 = scmp.ne.s32.totalorder %s92, %s95
    %p101 = scmp.eq.s32.totalorder %s9, 0
    %p102 = por %p100, %p101
    %p103 = scmp.ne.s32.totalorder %s92, %s95
    %p104 = scmp.eq.s32.totalorder %s14, 1
    %p105 = por %p103, %p104
    %p106 = scmp.ne.s32.totalorder %s95, %s96
    %p107 = scmp.eq.s32.totalorder %s14, 0
    %p108 = por %p106, %p107
    %p109 = scmp.ne.s32.totalorder %s95, %s96
    %p110 = scmp.eq.s32.totalorder %s15, 1
    %p111 = por %p109, %p110
    %p113 = scmp.ne.s32.totalorder %s96, %s112
    %p114 = scmp.eq.s32.totalorder %s15, 0
    %p115 = por %p113, %p114
    %p116 = scmp.le.s32.totalorder 1, %s9
    %p117 = scmp.lt.s32.totalorder %s9, 3
    %p118 = pnand %p116, %p117
    %p119 = pneg %p118
    // Predicated region
    $region9: #{_forward.19} parent=5 // pred_check
      _
    $region10: #{_forward.19} parent=5 // pred_check_branch
      %121 = sbr.rel (%p118) target = $region12
    $region11: #{_forward.19} parent=5 // pred_region
      %s122 = ssub.s32 %s9, 1
      // Predicated region
      $region13: #{_forward.19} parent=11 // pred_check
        %p123 = pneg %p56
      $region14: #{_forward.19} parent=11 // pred_check_branch
        %125 = sbr.rel (%p123) target = $region16
      $region15: #{_forward.19} parent=11 // pred_region
        _
      $region16: #{_forward.19} parent=11 // pred_fallthru
        _
    $region12: #{_forward.19} parent=5 // pred_fallthru
      _
    %p126 = scmp.lt.s32.totalorder %s9, 2
    // Predicated region
    $region17: #{_forward.19} parent=5 // pred_check
      %p127 = pneg %p126
    $region18: #{_forward.19} parent=5 // pred_check_branch
      %129 = sbr.rel (%p127) target = $region20
    $region19: #{_forward.19} parent=5 // pred_region
      // Predicated region
      $region21: #{_forward.19} parent=19 // pred_check
        %p130 = pneg %p29
      $region22: #{_forward.19} parent=19 // pred_check_branch
        %132 = sbr.rel (%p130) target = $region24
      $region23: #{_forward.19} parent=19 // pred_region
        %s133 = smul.u32 32, %s9
        %p134 = scmp.lt.s32.totalorder %s133, 63
        %s135 = scalar_select %p134, %s133, 63
        %s136 = smul.addr %s135, 8
        %s137 = scalar_lea.vmem %s0, %s136
        %s138 = smul.u32 32, %s9
      $region24: #{_forward.19} parent=19 // pred_fallthru
        _
      // Predicated region
      $region25: #{_forward.19} parent=19 // pred_check
        %p139 = pneg %p76
      $region26: #{_forward.19} parent=19 // pred_check_branch
        %141 = sbr.rel (%p139) target = $region28
      $region27: #{_forward.19} parent=19 // pred_region
        %s142 = smul.u32 32, %s9
        %p143 = scmp.lt.s32.totalorder %s142, 63
        %s144 = scalar_select %p143, %s142, 63
        %s145 = smul.addr %s144, 8
        %s146 = scalar_lea.vmem %s2, %s145
        %s147 = smul.u32 32, %s9
      $region28: #{_forward.19} parent=19 // pred_fallthru
        _
    $region20: #{_forward.19} parent=5 // pred_fallthru
      _
    %p148 = scmp.le.s32.totalorder 1, %s9
    %p149 = scmp.lt.s32.totalorder %s9, 3
    %p150 = pnand %p148, %p149
    %p151 = pneg %p150
    // Predicated region
    $region29: #{_forward.19} parent=5 // pred_check
      _
    $region30: #{_forward.19} parent=5 // pred_check_branch
      %153 = sbr.rel (%p150) target = $region32
    $region31: #{_forward.19} parent=5 // pred_region
      %s154 = ssub.s32 %s9, 1
      %s155 = smul.u32 32, %s14
      %p156 = scmp.lt.s32.totalorder %s155, 63
      %s157 = scalar_select %p156, %s155, 63
      %s158 = smul.addr %s157, 8
      %s159 = scalar_lea.vmem %s0, %s158
      %p160 = pneg %p35
      %p161 = pneg %p32
      %p162 = pneg %p56
      %p163 = pneg %p53
      %s164 = smul.u32 32, %s14
      %p165 = scmp.lt.s32.totalorder %s164, 63
      %s166 = scalar_select %p165, %s164, 63
      %s167 = smul.addr %s166, 8
      %s168 = scalar_lea.vmem %s2, %s167
      %p169 = pneg %p82
      %p170 = pneg %p79
      %p171 = pneg %p108
      %p172 = pneg %p105
      %s173 = smul.u32 32, %s14
      %p174 = scmp.lt.s32.totalorder %s173, 63
      %s175 = scalar_select %p174, %s173, 63
      %s176 = smul.addr %s175, 8
      %s177 = scalar_lea.vmem %s3, %s176
      %s178 = smul.u32 32, %s14
      %p179 = scmp.lt.s32.totalorder %s178, 63
      %s180 = scalar_select %p179, %s178, 63
      %s181 = smul.addr %s180, 8
      %s182 = scalar_lea.vmem %s0, %s181
      %s183 = smul.u32 32, %s14
      %s184 = smul.u32 32, %s14
      %p185 = scmp.lt.s32.totalorder %s184, 63
      %s186 = scalar_select %p185, %s184, 63
      %s187 = smul.addr %s186, 8
      %s188 = scalar_lea.vmem %s2, %s187
      %s189 = smul.u32 32, %s14
      %s190 = smul.u32 32, %s14
      %p191 = scmp.lt.s32.totalorder %s190, 63
      %s192 = scalar_select %p191, %s190, 63
      %s193 = smul.addr %s192, 8
      %s194 = scalar_lea.vmem %s3, %s193
      %s195 = smul.u32 32, %s14
      %v197 = vld [vmem:[%s182] sm:$0xff]
      %v198 = vld [vmem:[%s182 + $0x8] sm:$0xff]
      %v199 = vld [vmem:[%s182 + $0x10] sm:$0xff]
      %v200 = vld [vmem:[%s182 + $0x18] sm:$0xff]
      %v201 = vld [vmem:[%s182 + $0x20] sm:$0xff]
      %v202 = vld [vmem:[%s182 + $0x28] sm:$0xff]
      %v203 = vld [vmem:[%s182 + $0x30] sm:$0xff]
      %v204 = vld [vmem:[%s182 + $0x38] sm:$0xff]
      %v205 = vld [vmem:[%s182 + $0x40] sm:$0xff]
      %v206 = vld [vmem:[%s182 + $0x48] sm:$0xff]
      %v207 = vld [vmem:[%s182 + $0x50] sm:$0xff]
      %v208 = vld [vmem:[%s182 + $0x58] sm:$0xff]
      %v209 = vld [vmem:[%s182 + $0x60] sm:$0xff]
      %v210 = vld [vmem:[%s182 + $0x68] sm:$0xff]
      %v211 = vld [vmem:[%s182 + $0x70] sm:$0xff]
      %v212 = vld [vmem:[%s182 + $0x78] sm:$0xff]
      %v213 = vld [vmem:[%s182 + $0x80] sm:$0xff]
      %v214 = vld [vmem:[%s182 + $0x88] sm:$0xff]
      %v215 = vld [vmem:[%s182 + $0x90] sm:$0xff]
      %v216 = vld [vmem:[%s182 + $0x98] sm:$0xff]
      %v217 = vld [vmem:[%s182 + $0xa0] sm:$0xff]
      %v218 = vld [vmem:[%s182 + $0xa8] sm:$0xff]
      %v219 = vld [vmem:[%s182 + $0xb0] sm:$0xff]
      %v220 = vld [vmem:[%s182 + $0xb8] sm:$0xff]
      %v221 = vld [vmem:[%s182 + $0xc0] sm:$0xff]
      %v222 = vld [vmem:[%s182 + $0xc8] sm:$0xff]
      %v223 = vld [vmem:[%s182 + $0xd0] sm:$0xff]
      %v224 = vld [vmem:[%s182 + $0xd8] sm:$0xff]
      %v225 = vld [vmem:[%s182 + $0xe0] sm:$0xff]
      %v226 = vld [vmem:[%s182 + $0xe8] sm:$0xff]
      %v227 = vld [vmem:[%s182 + $0xf0] sm:$0xff]
      %v228 = vld [vmem:[%s182 + $0xf8] sm:$0xff]
      %v229 = vpack.c.bf16 %v198, %v197
      %v230 = vpack.c.bf16 %v200, %v199
      %v231 = vpack.c.bf16 %v202, %v201
      %v232 = vpack.c.bf16 %v204, %v203
      %v233 = vpack.c.bf16 %v206, %v205
      %v234 = vpack.c.bf16 %v208, %v207
      %v235 = vpack.c.bf16 %v210, %v209
      %v236 = vpack.c.bf16 %v212, %v211
      %v237 = vpack.c.bf16 %v214, %v213
      %v238 = vpack.c.bf16 %v216, %v215
      %v239 = vpack.c.bf16 %v218, %v217
      %v240 = vpack.c.bf16 %v220, %v219
      %v241 = vpack.c.bf16 %v222, %v221
      %v242 = vpack.c.bf16 %v224, %v223
      %v243 = vpack.c.bf16 %v226, %v225
      %v244 = vpack.c.bf16 %v228, %v227
      %v245 = vld [vmem:[%s1] sm:$0x3]
      %v246 = vld [vmem:[%s188] sm:$0xff]
      %v247 = vld [vmem:[%s188 + $0x8] sm:$0xff]
      %v248 = vld [vmem:[%s188 + $0x10] sm:$0xff]
      %v249 = vld [vmem:[%s188 + $0x18] sm:$0xff]
      %v250 = vld [vmem:[%s188 + $0x20] sm:$0xff]
      %v251 = vld [vmem:[%s188 + $0x28] sm:$0xff]
      %v252 = vld [vmem:[%s188 + $0x30] sm:$0xff]
      %v253 = vld [vmem:[%s188 + $0x38] sm:$0xff]
      %v254 = vld [vmem:[%s188 + $0x40] sm:$0xff]
      %v255 = vld [vmem:[%s188 + $0x48] sm:$0xff]
      %v256 = vld [vmem:[%s188 + $0x50] sm:$0xff]
      %v257 = vld [vmem:[%s188 + $0x58] sm:$0xff]
      %v258 = vld [vmem:[%s188 + $0x60] sm:$0xff]
      %v259 = vld [vmem:[%s188 + $0x68] sm:$0xff]
      %v260 = vld [vmem:[%s188 + $0x70] sm:$0xff]
      %v261 = vld [vmem:[%s188 + $0x78] sm:$0xff]
      %v262 = vld [vmem:[%s188 + $0x80] sm:$0xff]
      %v263 = vld [vmem:[%s188 + $0x88] sm:$0xff]
      %v264 = vld [vmem:[%s188 + $0x90] sm:$0xff]
      %v265 = vld [vmem:[%s188 + $0x98] sm:$0xff]
      %v266 = vld [vmem:[%s188 + $0xa0] sm:$0xff]
      %v267 = vld [vmem:[%s188 + $0xa8] sm:$0xff]
      %v268 = vld [vmem:[%s188 + $0xb0] sm:$0xff]
      %v269 = vld [vmem:[%s188 + $0xb8] sm:$0xff]
      %v270 = vld [vmem:[%s188 + $0xc0] sm:$0xff]
      %v271 = vld [vmem:[%s188 + $0xc8] sm:$0xff]
      %v272 = vld [vmem:[%s188 + $0xd0] sm:$0xff]
      %v273 = vld [vmem:[%s188 + $0xd8] sm:$0xff]
      %v274 = vld [vmem:[%s188 + $0xe0] sm:$0xff]
      %v275 = vld [vmem:[%s188 + $0xe8] sm:$0xff]
      %v276 = vld [vmem:[%s188 + $0xf0] sm:$0xff]
      %v277 = vld [vmem:[%s188 + $0xf8] sm:$0xff]
      %vm278 = vcmask 31744
      %v280 = vsel %vm278, %v229, 0
      %v283 = vsel %vm278, %v230, 0
      %v286 = vsel %vm278, %v231, 0
      %v289 = vsel %vm278, %v232, 0
      %v292 = vsel %vm278, %v233, 0
      %v295 = vsel %vm278, %v234, 0
      %v298 = vsel %vm278, %v235, 0
      %v301 = vsel %vm278, %v236, 0
      %v304 = vsel %vm278, %v237, 0
      %v307 = vsel %vm278, %v238, 0
      %v310 = vsel %vm278, %v239, 0
      %v313 = vsel %vm278, %v240, 0
      %v316 = vsel %vm278, %v241, 0
      %v319 = vsel %vm278, %v242, 0
      %v322 = vsel %vm278, %v243, 0
      %v325 = vsel %vm278, %v244, 0
      %vm327 = vcmask 1041408
      %v329 = vsel %vm327, %v245, 0
      %331 = vmatpush.bf16.msra.mxu0 0
      %332 = vmatpush.bf16.msra.mxu0 0
      %333 = vmatpush.bf16.msra.mxu0 0
      %334 = vmatpush.bf16.msra.mxu0 0
      %335 = vmatpush.bf16.msra.mxu0 0
      %336 = vmatpush.bf16.msra.mxu0 0
      %337 = vmatpush.bf16.msra.mxu0 0
      %338 = vmatpush.bf16.msra.mxu0 %v329
      %339 = vmatmul.bf16.gmra.mxu0 %v280
      %v340 = vpop.f32.mrf.mxu0
      %v341 = vadd.f32 %v246, %v340
      %v342 = vpop.f32.mrf.mxu0
      %v343 = vadd.f32 %v247, %v342
      %344 = vmatmul.bf16.gmra.mxu0 %v283
      %v345 = vpop.f32.mrf.mxu0
      %v346 = vadd.f32 %v248, %v345
      %v347 = vpop.f32.mrf.mxu0
      %v348 = vadd.f32 %v249, %v347
      %349 = vmatmul.bf16.gmra.mxu0 %v286
      %v350 = vpop.f32.mrf.mxu0
      %v351 = vadd.f32 %v250, %v350
      %v352 = vpop.f32.mrf.mxu0
      %v353 = vadd.f32 %v251, %v352
      %354 = vmatmul.bf16.gmra.mxu0 %v289
      %v355 = vpop.f32.mrf.mxu0
      %v356 = vadd.f32 %v252, %v355
      %v357 = vpop.f32.mrf.mxu0
      %v358 = vadd.f32 %v253, %v357
      %359 = vmatmul.bf16.gmra.mxu0 %v292
      %v360 = vpop.f32.mrf.mxu0
      %v361 = vadd.f32 %v254, %v360
      %v362 = vpop.f32.mrf.mxu0
      %v363 = vadd.f32 %v255, %v362
      %364 = vmatmul.bf16.gmra.mxu0 %v295
      %v365 = vpop.f32.mrf.mxu0
      %v366 = vadd.f32 %v256, %v365
      %v367 = vpop.f32.mrf.mxu0
      %v368 = vadd.f32 %v257, %v367
      %369 = vmatmul.bf16.gmra.mxu0 %v298
      %v370 = vpop.f32.mrf.mxu0
      %v371 = vadd.f32 %v258, %v370
      %v372 = vpop.f32.mrf.mxu0
      %v373 = vadd.f32 %v259, %v372
      %374 = vmatmul.bf16.gmra.mxu0 %v301
      %v375 = vpop.f32.mrf.mxu0
      %v376 = vadd.f32 %v260, %v375
      %v377 = vpop.f32.mrf.mxu0
      %v378 = vadd.f32 %v261, %v377
      %379 = vmatmul.bf16.gmra.mxu0 %v304
      %v380 = vpop.f32.mrf.mxu0
      %v381 = vadd.f32 %v262, %v380
      %v382 = vpop.f32.mrf.mxu0
      %v383 = vadd.f32 %v263, %v382
      %384 = vmatmul.bf16.gmra.mxu0 %v307
      %v385 = vpop.f32.mrf.mxu0
      %v386 = vadd.f32 %v264, %v385
      %v387 = vpop.f32.mrf.mxu0
      %v388 = vadd.f32 %v265, %v387
      %389 = vmatmul.bf16.gmra.mxu0 %v310
      %v390 = vpop.f32.mrf.mxu0
      %v391 = vadd.f32 %v266, %v390
      %v392 = vpop.f32.mrf.mxu0
      %v393 = vadd.f32 %v267, %v392
      %394 = vmatmul.bf16.gmra.mxu0 %v313
      %v395 = vpop.f32.mrf.mxu0
      %v396 = vadd.f32 %v268, %v395
      %v397 = vpop.f32.mrf.mxu0
      %v398 = vadd.f32 %v269, %v397
      %399 = vmatmul.bf16.gmra.mxu0 %v316
      %v400 = vpop.f32.mrf.mxu0
      %v401 = vadd.f32 %v270, %v400
      %v402 = vpop.f32.mrf.mxu0
      %v403 = vadd.f32 %v271, %v402
      %404 = vmatmul.bf16.gmra.mxu0 %v319
      %v405 = vpop.f32.mrf.mxu0
      %v406 = vadd.f32 %v272, %v405
      %v407 = vpop.f32.mrf.mxu0
      %v408 = vadd.f32 %v273, %v407
      %409 = vmatmul.bf16.gmra.mxu0 %v322
      %v410 = vpop.f32.mrf.mxu0
      %v411 = vadd.f32 %v274, %v410
      %v412 = vpop.f32.mrf.mxu0
      %v413 = vadd.f32 %v275, %v412
      %414 = vmatmul.bf16.gmra.mxu0 %v325
      %v415 = vpop.f32.mrf.mxu0
      %v416 = vadd.f32 %v276, %v415
      %v417 = vpop.f32.mrf.mxu0
      %v418 = vadd.f32 %v277, %v417
      %419 = vdwg.mxu0
      %vm420 = vcmask 64512
      %421 = vst.msk [vmem:[%s194] sm:$0xff] %vm420, %v341
      %422 = vst.msk [vmem:[%s194 + $0x8] sm:$0xff] %vm420, %v343
      %423 = vst.msk [vmem:[%s194 + $0x10] sm:$0xff] %vm420, %v346
      %424 = vst.msk [vmem:[%s194 + $0x18] sm:$0xff] %vm420, %v348
      %425 = vst.msk [vmem:[%s194 + $0x20] sm:$0xff] %vm420, %v351
      %426 = vst.msk [vmem:[%s194 + $0x28] sm:$0xff] %vm420, %v353
      %427 = vst.msk [vmem:[%s194 + $0x30] sm:$0xff] %vm420, %v356
      %428 = vst.msk [vmem:[%s194 + $0x38] sm:$0xff] %vm420, %v358
      %429 = vst.msk [vmem:[%s194 + $0x40] sm:$0xff] %vm420, %v361
      %430 = vst.msk [vmem:[%s194 + $0x48] sm:$0xff] %vm420, %v363
      %431 = vst.msk [vmem:[%s194 + $0x50] sm:$0xff] %vm420, %v366
      %432 = vst.msk [vmem:[%s194 + $0x58] sm:$0xff] %vm420, %v368
      %433 = vst.msk [vmem:[%s194 + $0x60] sm:$0xff] %vm420, %v371
      %434 = vst.msk [vmem:[%s194 + $0x68] sm:$0xff] %vm420, %v373
      %435 = vst.msk [vmem:[%s194 + $0x70] sm:$0xff] %vm420, %v376
      %436 = vst.msk [vmem:[%s194 + $0x78] sm:$0xff] %vm420, %v378
      %437 = vst.msk [vmem:[%s194 + $0x80] sm:$0xff] %vm420, %v381
      %438 = vst.msk [vmem:[%s194 + $0x88] sm:$0xff] %vm420, %v383
      %439 = vst.msk [vmem:[%s194 + $0x90] sm:$0xff] %vm420, %v386
      %440 = vst.msk [vmem:[%s194 + $0x98] sm:$0xff] %vm420, %v388
      %441 = vst.msk [vmem:[%s194 + $0xa0] sm:$0xff] %vm420, %v391
      %442 = vst.msk [vmem:[%s194 + $0xa8] sm:$0xff] %vm420, %v393
      %443 = vst.msk [vmem:[%s194 + $0xb0] sm:$0xff] %vm420, %v396
      %444 = vst.msk [vmem:[%s194 + $0xb8] sm:$0xff] %vm420, %v398
      %445 = vst.msk [vmem:[%s194 + $0xc0] sm:$0xff] %vm420, %v401
      %446 = vst.msk [vmem:[%s194 + $0xc8] sm:$0xff] %vm420, %v403
      %447 = vst.msk [vmem:[%s194 + $0xd0] sm:$0xff] %vm420, %v406
      %448 = vst.msk [vmem:[%s194 + $0xd8] sm:$0xff] %vm420, %v408
      %449 = vst.msk [vmem:[%s194 + $0xe0] sm:$0xff] %vm420, %v411
      %450 = vst.msk [vmem:[%s194 + $0xe8] sm:$0xff] %vm420, %v413
      %451 = vst.msk [vmem:[%s194 + $0xf0] sm:$0xff] %vm420, %v416
      %452 = vst.msk [vmem:[%s194 + $0xf8] sm:$0xff] %vm420, %v418
      %s453 = smul.u32 32, %s14
      %p454 = scmp.lt.s32.totalorder %s453, 63
      %s455 = scalar_select %p454, %s453, 63
      %s456 = smul.addr %s455, 8
      %s457 = scalar_lea.vmem %s3, %s456
      // Predicated region
      $region33: #{_forward.19} parent=31 // pred_check
        %p458 = pneg %p105
      $region34: #{_forward.19} parent=31 // pred_check_branch
        %460 = sbr.rel (%p458) target = $region36
      $region35: #{_forward.19} parent=31 // pred_region
        %s461 = smul.u32 32, %s14
      $region36: #{_forward.19} parent=31 // pred_fallthru
        _
    $region32: #{_forward.19} parent=5 // pred_fallthru
      _
    %p462 = scmp.le.s32.totalorder 2, %s9
    // Predicated region
    $region37: #{_forward.19} parent=5 // pred_check
      %p463 = pneg %p462
    $region38: #{_forward.19} parent=5 // pred_check_branch
      %465 = sbr.rel (%p463) target = $region40
    $region39: #{_forward.19} parent=5 // pred_region
      %s466 = ssub.s32 %s9, 2
      // Predicated region
      $region41: #{_forward.19} parent=39 // pred_check
        %p467 = pneg %p111
      $region42: #{_forward.19} parent=39 // pred_check_branch
        %469 = sbr.rel (%p467) target = $region44
      $region43: #{_forward.19} parent=39 // pred_region
        %s470 = smul.u32 32, %s15
        %p471 = scmp.lt.s32.totalorder %s470, 63
        %s472 = scalar_select %p471, %s470, 63
        %s473 = smul.addr %s472, 8
        %s474 = scalar_lea.vmem %s3, %s473
      $region44: #{_forward.19} parent=39 // pred_fallthru
        _
    $region40: #{_forward.19} parent=5 // pred_fallthru
      _
  $region6: #{_forward.19} parent=0 // loop_footer
    %s13 = sadd.s32 1, %s9
  $region7: #{_forward.19} parent=0 // loop_footer_branch
    %8 = sbr.rel target = $region3
  $region8: #{_forward.19} parent=0 // loop_exit
    _

// kernel: _forward.21
$region0: #{_forward.21}
  #allocation0 [shape = 'u32[]', space=smem, size = 0x4, offset = 0x4, fixed_abs, tag = 'smem constant byte address 0x4 - core index']
  #allocation1 [shape = 'u32[72,128]{1,0:T(1,128)}', space=vmem, size = 0x9000, scoped, tag = 'internal scratch']
  %s0 = inlined_call_operand.vmem [shape: f32[512,8], index: 0, kind: input, shape index: {}]
  %s1 = inlined_call_operand.vmem [shape: bf16[8,16], index: 1, kind: input, shape index: {}]
  %s2 = inlined_call_operand.vmem [shape: f32[512,16], index: 2, kind: output, shape index: {}]
  %s3 = sld [smem:[#allocation0]]
  $region41: #{_forward.21} parent=0
    _
  %s5 = ssub.s32 1, %s3
  %s6 = scalar_select 0, %s5, %s3
  loop: start=0, step=1, limit=4
  $region2: #{_forward.21} parent=0 // loop_pre_header
    _
  $region3: #{_forward.21} parent=0 // loop_header
    %s8 = sphi 0, %s12
    %p9 = scmp.ge.s32.totalorder %s8, 4
    %s18 = sphi 0, %s20
    %s21 = sphi 0, %s18
    %s22 = sphi 0, %s21
    %s38 = sphi 0, %s22
    %s42 = sphi 0, %s42
    %s44 = sphi 0, %s42
    %s45 = sphi 0, %s44
    %s59 = sphi 0, %s45
    %s65 = sphi 0, %s67
    %s68 = sphi 0, %s65
    %s69 = sphi 0, %s68
    %s85 = sphi 0, %s69
  $region4: #{_forward.21} parent=0 // loop_header_branch
    %11 = sbr.rel (%p9) target = $region8
  $region5: #{_forward.21} parent=0 // loop_body
    %s13 = ssub.s32 %s8, 1
    %s14 = ssub.s32 %s8, 2
    %s15 = sadd.s32 %s8, 1
    %s16 = ssub.s32 %s8, %s15
    %p17 = scmp.eq.s32.totalorder %s16, 0
    %s19 = sadd.s32 %s18, 1
    %s20 = scalar_select %p17, %s18, %s19
    %p23 = pneg %p17
    %p24 = scmp.eq.s32.totalorder %s8, 1
    %p25 = por %p23, %p24
    %p26 = scmp.ne.s32.totalorder %s18, %s21
    %p27 = scmp.eq.s32.totalorder %s8, 0
    %p28 = por %p26, %p27
    %p29 = scmp.ne.s32.totalorder %s18, %s21
    %p30 = scmp.eq.s32.totalorder %s13, 1
    %p31 = por %p29, %p30
    %p32 = scmp.ne.s32.totalorder %s21, %s22
    %p33 = scmp.eq.s32.totalorder %s13, 0
    %p34 = por %p32, %p33
    %p35 = scmp.ne.s32.totalorder %s21, %s22
    %p36 = scmp.eq.s32.totalorder %s14, 1
    %p37 = por %p35, %p36
    %p39 = scmp.ne.s32.totalorder %s22, %s38
    %p40 = scmp.eq.s32.totalorder %s14, 0
    %p41 = por %p39, %p40
    %s43 = sadd.s32 %s42, 1
    %p46 = scmp.eq.s32.totalorder %s8, 1
    %p47 = scmp.ne.s32.totalorder %s42, %s44
    %p48 = scmp.eq.s32.totalorder %s8, 0
    %p49 = por %p47, %p48
    %p50 = scmp.ne.s32.totalorder %s42, %s44
    %p51 = scmp.eq.s32.totalorder %s13, 1
    %p52 = por %p50, %p51
    %p53 = scmp.ne.s32.totalorder %s44, %s45
    %p54 = scmp.eq.s32.totalorder %s13, 0
    %p55 = por %p53, %p54
    %p56 = scmp.ne.s32.totalorder %s44, %s45
    %p57 = scmp.eq.s32.totalorder %s14, 1
    %p58 = por %p56, %p57
    %p60 = scmp.ne.s32.totalorder %s45, %s59
    %p61 = scmp.eq.s32.totalorder %s14, 0
    %p62 = por %p60, %p61
    %s63 = ssub.s32 %s8, %s15
    %p64 = scmp.eq.s32.totalorder %s63, 0
    %s66 = sadd.s32 %s65, 1
    %s67 = scalar_select %p64, %s65, %s66
    %p70 = pneg %p64
    %p71 = scmp.eq.s32.totalorder %s8, 1
    %p72 = por %p70, %p71
    %p73 = scmp.ne.s32.totalorder %s65, %s68
    %p74 = scmp.eq.s32.totalorder %s8, 0
    %p75 = por %p73, %p74
    %p76 = scmp.ne.s32.totalorder %s65, %s68
    %p77 = scmp.eq.s32.totalorder %s13, 1
    %p78 = por %p76, %p77
    %p79 = scmp.ne.s32.totalorder %s68, %s69
    %p80 = scmp.eq.s32.totalorder %s13, 0
    %p81 = por %p79, %p80
    %p82 = scmp.ne.s32.totalorder %s68, %s69
    %p83 = scmp.eq.s32.totalorder %s14, 1
    %p84 = por %p82, %p83
    %p86 = scmp.ne.s32.totalorder %s69, %s85
    %p87 = scmp.eq.s32.totalorder %s14, 0
    %p88 = por %p86, %p87
    %p89 = scmp.le.s32.totalorder 1, %s8
    %p90 = scmp.lt.s32.totalorder %s8, 3
    %p91 = pnand %p89, %p90
    %p92 = pneg %p91
    // Predicated region
    $region9: #{_forward.21} parent=5 // pred_check
      _
    $region10: #{_forward.21} parent=5 // pred_check_branch
      %94 = sbr.rel (%p91) target = $region12
    $region11: #{_forward.21} parent=5 // pred_region
      %s95 = ssub.s32 %s8, 1
      // Predicated region
      $region13: #{_forward.21} parent=11 // pred_check
        %p96 = pneg %p55
      $region14: #{_forward.21} parent=11 // pred_check_branch
        %98 = sbr.rel (%p96) target = $region16
      $region15: #{_forward.21} parent=11 // pred_region
        _
      $region16: #{_forward.21} parent=11 // pred_fallthru
        _
    $region12: #{_forward.21} parent=5 // pred_fallthru
      _
    %p99 = scmp.lt.s32.totalorder %s8, 2
    // Predicated region
    $region17: #{_forward.21} parent=5 // pred_check
      %p100 = pneg %p99
    $region18: #{_forward.21} parent=5 // pred_check_branch
      %102 = sbr.rel (%p100) target = $region20
    $region19: #{_forward.21} parent=5 // pred_region
      // Predicated region
      $region21: #{_forward.21} parent=19 // pred_check
        %p103 = pneg %p28
      $region22: #{_forward.21} parent=19 // pred_check_branch
        %105 = sbr.rel (%p103) target = $region24
      $region23: #{_forward.21} parent=19 // pred_region
        %s106 = smul.u32 32, %s8
        %p107 = scmp.lt.s32.totalorder %s106, 63
        %s108 = scalar_select %p107, %s106, 63
        %s109 = smul.addr %s108, 8
        %s110 = scalar_lea.vmem %s0, %s109
        %s111 = smul.u32 32, %s8
      $region24: #{_forward.21} parent=19 // pred_fallthru
        _
    $region20: #{_forward.21} parent=5 // pred_fallthru
      _
    %p112 = scmp.le.s32.totalorder 1, %s8
    %p113 = scmp.lt.s32.totalorder %s8, 3
    %p114 = pnand %p112, %p113
    %p115 = pneg %p114
    // Predicated region
    $region25: #{_forward.21} parent=5 // pred_check
      _
    $region26: #{_forward.21} parent=5 // pred_check_branch
      %117 = sbr.rel (%p114) target = $region28
    $region27: #{_forward.21} parent=5 // pred_region
      %s118 = ssub.s32 %s8, 1
      %s119 = smul.u32 32, %s13
      %p120 = scmp.lt.s32.totalorder %s119, 63
      %s121 = scalar_select %p120, %s119, 63
      %s122 = smul.addr %s121, 8
      %s123 = scalar_lea.vmem %s0, %s122
      %p124 = pneg %p34
      %p125 = pneg %p31
      %p126 = pneg %p55
      %p127 = pneg %p52
      %p128 = pneg %p81
      %p129 = pneg %p78
      %s130 = smul.u32 32, %s13
      %p131 = scmp.lt.s32.totalorder %s130, 63
      %s132 = scalar_select %p131, %s130, 63
      %s133 = smul.addr %s132, 8
      %s134 = scalar_lea.vmem %s2, %s133
      %s135 = smul.u32 32, %s13
      %p136 = scmp.lt.s32.totalorder %s135, 63
      %s137 = scalar_select %p136, %s135, 63
      %s138 = smul.addr %s137, 8
      %s139 = scalar_lea.vmem %s0, %s138
      %s140 = smul.u32 32, %s13
      %s141 = smul.u32 32, %s13
      %p142 = scmp.lt.s32.totalorder %s141, 63
      %s143 = scalar_select %p142, %s141, 63
      %s144 = smul.addr %s143, 8
      %s145 = scalar_lea.vmem %s2, %s144
      %s146 = smul.u32 32, %s13
      %v148 = vld [vmem:[%s139] sm:$0xff]
      %v149 = vld [vmem:[%s139 + $0x8] sm:$0xff]
      %v150 = vld [vmem:[%s139 + $0x10] sm:$0xff]
      %v151 = vld [vmem:[%s139 + $0x18] sm:$0xff]
      %v152 = vld [vmem:[%s139 + $0x20] sm:$0xff]
      %v153 = vld [vmem:[%s139 + $0x28] sm:$0xff]
      %v154 = vld [vmem:[%s139 + $0x30] sm:$0xff]
      %v155 = vld [vmem:[%s139 + $0x38] sm:$0xff]
      %v156 = vld [vmem:[%s139 + $0x40] sm:$0xff]
      %v157 = vld [vmem:[%s139 + $0x48] sm:$0xff]
      %v158 = vld [vmem:[%s139 + $0x50] sm:$0xff]
      %v159 = vld [vmem:[%s139 + $0x58] sm:$0xff]
      %v160 = vld [vmem:[%s139 + $0x60] sm:$0xff]
      %v161 = vld [vmem:[%s139 + $0x68] sm:$0xff]
      %v162 = vld [vmem:[%s139 + $0x70] sm:$0xff]
      %v163 = vld [vmem:[%s139 + $0x78] sm:$0xff]
      %v164 = vld [vmem:[%s139 + $0x80] sm:$0xff]
      %v165 = vld [vmem:[%s139 + $0x88] sm:$0xff]
      %v166 = vld [vmem:[%s139 + $0x90] sm:$0xff]
      %v167 = vld [vmem:[%s139 + $0x98] sm:$0xff]
      %v168 = vld [vmem:[%s139 + $0xa0] sm:$0xff]
      %v169 = vld [vmem:[%s139 + $0xa8] sm:$0xff]
      %v170 = vld [vmem:[%s139 + $0xb0] sm:$0xff]
      %v171 = vld [vmem:[%s139 + $0xb8] sm:$0xff]
      %v172 = vld [vmem:[%s139 + $0xc0] sm:$0xff]
      %v173 = vld [vmem:[%s139 + $0xc8] sm:$0xff]
      %v174 = vld [vmem:[%s139 + $0xd0] sm:$0xff]
      %v175 = vld [vmem:[%s139 + $0xd8] sm:$0xff]
      %v176 = vld [vmem:[%s139 + $0xe0] sm:$0xff]
      %v177 = vld [vmem:[%s139 + $0xe8] sm:$0xff]
      %v178 = vld [vmem:[%s139 + $0xf0] sm:$0xff]
      %v179 = vld [vmem:[%s139 + $0xf8] sm:$0xff]
      %v180 = vpack.c.bf16 %v149, %v148
      %v181 = vpack.c.bf16 %v151, %v150
      %v182 = vpack.c.bf16 %v153, %v152
      %v183 = vpack.c.bf16 %v155, %v154
      %v184 = vpack.c.bf16 %v157, %v156
      %v185 = vpack.c.bf16 %v159, %v158
      %v186 = vpack.c.bf16 %v161, %v160
      %v187 = vpack.c.bf16 %v163, %v162
      %v188 = vpack.c.bf16 %v165, %v164
      %v189 = vpack.c.bf16 %v167, %v166
      %v190 = vpack.c.bf16 %v169, %v168
      %v191 = vpack.c.bf16 %v171, %v170
      %v192 = vpack.c.bf16 %v173, %v172
      %v193 = vpack.c.bf16 %v175, %v174
      %v194 = vpack.c.bf16 %v177, %v176
      %v195 = vpack.c.bf16 %v179, %v178
      %v196 = vld [vmem:[%s1] sm:$0xf]
      %vm197 = vcmask 64512
      %v199 = vsel %vm197, %v180, 0
      %v202 = vsel %vm197, %v181, 0
      %v205 = vsel %vm197, %v182, 0
      %v208 = vsel %vm197, %v183, 0
      %v211 = vsel %vm197, %v184, 0
      %v214 = vsel %vm197, %v185, 0
      %v217 = vsel %vm197, %v186, 0
      %v220 = vsel %vm197, %v187, 0
      %v223 = vsel %vm197, %v188, 0
      %v226 = vsel %vm197, %v189, 0
      %v229 = vsel %vm197, %v190, 0
      %v232 = vsel %vm197, %v191, 0
      %v235 = vsel %vm197, %v192, 0
      %v238 = vsel %vm197, %v193, 0
      %v241 = vsel %vm197, %v194, 0
      %v244 = vsel %vm197, %v195, 0
      %vm246 = vcmask 1043456
      %v248 = vsel %vm246, %v196, 0
      %250 = vmatpush.bf16.msra.mxu0 0
      %251 = vmatpush.bf16.msra.mxu0 0
      %252 = vmatpush.bf16.msra.mxu0 0
      %253 = vmatpush.bf16.msra.mxu0 0
      %254 = vmatpush.bf16.msra.mxu0 0
      %255 = vmatpush.bf16.msra.mxu0 0
      %256 = vmatpush.bf16.msra.mxu0 0
      %257 = vmatpush.bf16.msra.mxu0 %v248
      %258 = vmatmul.bf16.gmra.mxu0 %v199
      %v259 = vpop.f32.mrf.mxu0
      %v260 = vadd.f32 0.0, %v259
      %v261 = vpop.f32.mrf.mxu0
      %v262 = vadd.f32 0.0, %v261
      %263 = vmatmul.bf16.gmra.mxu0 %v202
      %v264 = vpop.f32.mrf.mxu0
      %v265 = vadd.f32 0.0, %v264
      %v266 = vpop.f32.mrf.mxu0
      %v267 = vadd.f32 0.0, %v266
      %268 = vmatmul.bf16.gmra.mxu0 %v205
      %v269 = vpop.f32.mrf.mxu0
      %v270 = vadd.f32 0.0, %v269
      %v271 = vpop.f32.mrf.mxu0
      %v272 = vadd.f32 0.0, %v271
      %273 = vmatmul.bf16.gmra.mxu0 %v208
      %v274 = vpop.f32.mrf.mxu0
      %v275 = vadd.f32 0.0, %v274
      %v276 = vpop.f32.mrf.mxu0
      %v277 = vadd.f32 0.0, %v276
      %278 = vmatmul.bf16.gmra.mxu0 %v211
      %v279 = vpop.f32.mrf.mxu0
      %v280 = vadd.f32 0.0, %v279
      %v281 = vpop.f32.mrf.mxu0
      %v282 = vadd.f32 0.0, %v281
      %283 = vmatmul.bf16.gmra.mxu0 %v214
      %v284 = vpop.f32.mrf.mxu0
      %v285 = vadd.f32 0.0, %v284
      %v286 = vpop.f32.mrf.mxu0
      %v287 = vadd.f32 0.0, %v286
      %288 = vmatmul.bf16.gmra.mxu0 %v217
      %v289 = vpop.f32.mrf.mxu0
      %v290 = vadd.f32 0.0, %v289
      %v291 = vpop.f32.mrf.mxu0
      %v292 = vadd.f32 0.0, %v291
      %293 = vmatmul.bf16.gmra.mxu0 %v220
      %v294 = vpop.f32.mrf.mxu0
      %v295 = vadd.f32 0.0, %v294
      %v296 = vpop.f32.mrf.mxu0
      %v297 = vadd.f32 0.0, %v296
      %298 = vmatmul.bf16.gmra.mxu0 %v223
      %v299 = vpop.f32.mrf.mxu0
      %v300 = vadd.f32 0.0, %v299
      %v301 = vpop.f32.mrf.mxu0
      %v302 = vadd.f32 0.0, %v301
      %303 = vmatmul.bf16.gmra.mxu0 %v226
      %v304 = vpop.f32.mrf.mxu0
      %v305 = vadd.f32 0.0, %v304
      %v306 = vpop.f32.mrf.mxu0
      %v307 = vadd.f32 0.0, %v306
      %308 = vmatmul.bf16.gmra.mxu0 %v229
      %v309 = vpop.f32.mrf.mxu0
      %v310 = vadd.f32 0.0, %v309
      %v311 = vpop.f32.mrf.mxu0
      %v312 = vadd.f32 0.0, %v311
      %313 = vmatmul.bf16.gmra.mxu0 %v232
      %v314 = vpop.f32.mrf.mxu0
      %v315 = vadd.f32 0.0, %v314
      %v316 = vpop.f32.mrf.mxu0
      %v317 = vadd.f32 0.0, %v316
      %318 = vmatmul.bf16.gmra.mxu0 %v235
      %v319 = vpop.f32.mrf.mxu0
      %v320 = vadd.f32 0.0, %v319
      %v321 = vpop.f32.mrf.mxu0
      %v322 = vadd.f32 0.0, %v321
      %323 = vmatmul.bf16.gmra.mxu0 %v238
      %v324 = vpop.f32.mrf.mxu0
      %v325 = vadd.f32 0.0, %v324
      %v326 = vpop.f32.mrf.mxu0
      %v327 = vadd.f32 0.0, %v326
      %328 = vmatmul.bf16.gmra.mxu0 %v241
      %v329 = vpop.f32.mrf.mxu0
      %v330 = vadd.f32 0.0, %v329
      %v331 = vpop.f32.mrf.mxu0
      %v332 = vadd.f32 0.0, %v331
      %333 = vmatmul.bf16.gmra.mxu0 %v244
      %v334 = vpop.f32.mrf.mxu0
      %v335 = vadd.f32 0.0, %v334
      %v336 = vpop.f32.mrf.mxu0
      %v337 = vadd.f32 0.0, %v336
      %338 = vdwg.mxu0
      %vm339 = vcmask 130048
      %340 = vst.msk [vmem:[%s145] sm:$0xff] %vm339, %v260
      %341 = vst.msk [vmem:[%s145 + $0x8] sm:$0xff] %vm339, %v262
      %342 = vst.msk [vmem:[%s145 + $0x10] sm:$0xff] %vm339, %v265
      %343 = vst.msk [vmem:[%s145 + $0x18] sm:$0xff] %vm339, %v267
      %344 = vst.msk [vmem:[%s145 + $0x20] sm:$0xff] %vm339, %v270
      %345 = vst.msk [vmem:[%s145 + $0x28] sm:$0xff] %vm339, %v272
      %346 = vst.msk [vmem:[%s145 + $0x30] sm:$0xff] %vm339, %v275
      %347 = vst.msk [vmem:[%s145 + $0x38] sm:$0xff] %vm339, %v277
      %348 = vst.msk [vmem:[%s145 + $0x40] sm:$0xff] %vm339, %v280
      %349 = vst.msk [vmem:[%s145 + $0x48] sm:$0xff] %vm339, %v282
      %350 = vst.msk [vmem:[%s145 + $0x50] sm:$0xff] %vm339, %v285
      %351 = vst.msk [vmem:[%s145 + $0x58] sm:$0xff] %vm339, %v287
      %352 = vst.msk [vmem:[%s145 + $0x60] sm:$0xff] %vm339, %v290
      %353 = vst.msk [vmem:[%s145 + $0x68] sm:$0xff] %vm339, %v292
      %354 = vst.msk [vmem:[%s145 + $0x70] sm:$0xff] %vm339, %v295
      %355 = vst.msk [vmem:[%s145 + $0x78] sm:$0xff] %vm339, %v297
      %356 = vst.msk [vmem:[%s145 + $0x80] sm:$0xff] %vm339, %v300
      %357 = vst.msk [vmem:[%s145 + $0x88] sm:$0xff] %vm339, %v302
      %358 = vst.msk [vmem:[%s145 + $0x90] sm:$0xff] %vm339, %v305
      %359 = vst.msk [vmem:[%s145 + $0x98] sm:$0xff] %vm339, %v307
      %360 = vst.msk [vmem:[%s145 + $0xa0] sm:$0xff] %vm339, %v310
      %361 = vst.msk [vmem:[%s145 + $0xa8] sm:$0xff] %vm339, %v312
      %362 = vst.msk [vmem:[%s145 + $0xb0] sm:$0xff] %vm339, %v315
      %363 = vst.msk [vmem:[%s145 + $0xb8] sm:$0xff] %vm339, %v317
      %364 = vst.msk [vmem:[%s145 + $0xc0] sm:$0xff] %vm339, %v320
      %365 = vst.msk [vmem:[%s145 + $0xc8] sm:$0xff] %vm339, %v322
      %366 = vst.msk [vmem:[%s145 + $0xd0] sm:$0xff] %vm339, %v325
      %367 = vst.msk [vmem:[%s145 + $0xd8] sm:$0xff] %vm339, %v327
      %368 = vst.msk [vmem:[%s145 + $0xe0] sm:$0xff] %vm339, %v330
      %369 = vst.msk [vmem:[%s145 + $0xe8] sm:$0xff] %vm339, %v332
      %370 = vst.msk [vmem:[%s145 + $0xf0] sm:$0xff] %vm339, %v335
      %371 = vst.msk [vmem:[%s145 + $0xf8] sm:$0xff] %vm339, %v337
      %s372 = smul.u32 32, %s13
      %p373 = scmp.lt.s32.totalorder %s372, 63
      %s374 = scalar_select %p373, %s372, 63
      %s375 = smul.addr %s374, 8
      %s376 = scalar_lea.vmem %s2, %s375
      // Predicated region
      $region29: #{_forward.21} parent=27 // pred_check
        %p377 = pneg %p78
      $region30: #{_forward.21} parent=27 // pred_check_branch
        %379 = sbr.rel (%p377) target = $region32
      $region31: #{_forward.21} parent=27 // pred_region
        %s380 = smul.u32 32, %s13
      $region32: #{_forward.21} parent=27 // pred_fallthru
        _
    $region28: #{_forward.21} parent=5 // pred_fallthru
      _
    %p381 = scmp.le.s32.totalorder 2, %s8
    // Predicated region
    $region33: #{_forward.21} parent=5 // pred_check
      %p382 = pneg %p381
    $region34: #{_forward.21} parent=5 // pred_check_branch
      %384 = sbr.rel (%p382) target = $region36
    $region35: #{_forward.21} parent=5 // pred_region
      %s385 = ssub.s32 %s8, 2
      // Predicated region
      $region37: #{_forward.21} parent=35 // pred_check
        %p386 = pneg %p84
      $region38: #{_forward.21} parent=35 // pred_check_branch
        %388 = sbr.rel (%p386) target = $region40
      $region39: #{_forward.21} parent=35 // pred_region
        %s389 = smul.u32 32, %s14
        %p390 = scmp.lt.s32.totalorder %s389, 63
        %s391 = scalar_select %p390, %s389, 63
        %s392 = smul.addr %s391, 8
        %s393 = scalar_lea.vmem %s2, %s392
      $region40: #{_forward.21} parent=35 // pred_fallthru
        _
    $region36: #{_forward.21} parent=5 // pred_fallthru
      _
  $region6: #{_forward.21} parent=0 // loop_footer
    %s12 = sadd.s32 1, %s8
  $region7: #{_forward.21} parent=0 // loop_footer_branch
    %7 = sbr.rel target = $region3
  $region8: #{_forward.21} parent=0 // loop_exit
    _

// kernel: _forward.22
$region0: #{_forward.22}
  #allocation0 [shape = 'u32[]', space=smem, size = 0x4, offset = 0x4, fixed_abs, tag = 'smem constant byte address 0x4 - core index']
  #allocation1 [shape = 'u32[72,128]{1,0:T(1,128)}', space=vmem, size = 0x9000, scoped, tag = 'internal scratch']
  %s0 = inlined_call_operand.vmem [shape: f32[1024,8], index: 0, kind: input, shape index: {}]
  %s1 = inlined_call_operand.vmem [shape: bf16[8,16], index: 1, kind: input, shape index: {}]
  %s2 = inlined_call_operand.vmem [shape: f32[1024,16], index: 2, kind: input, shape index: {}]
  %s3 = inlined_call_operand.vmem [shape: f32[1024,16], index: 3, kind: output, shape index: {}]
  %s4 = sld [smem:[#allocation0]]
  $region45: #{_forward.22} parent=0
    _
  %s6 = ssub.s32 1, %s4
  %s7 = scalar_select 0, %s6, %s4
  loop: start=0, step=1, limit=4
  $region2: #{_forward.22} parent=0 // loop_pre_header
    _
  $region3: #{_forward.22} parent=0 // loop_header
    %s9 = sphi 0, %s13
    %p10 = scmp.ge.s32.totalorder %s9, 4
    %s19 = sphi 0, %s21
    %s22 = sphi 0, %s19
    %s23 = sphi 0, %s22
    %s39 = sphi 0, %s23
    %s43 = sphi 0, %s43
    %s45 = sphi 0, %s43
    %s46 = sphi 0, %s45
    %s60 = sphi 0, %s46
    %s66 = sphi 0, %s68
    %s69 = sphi 0, %s66
    %s70 = sphi 0, %s69
    %s86 = sphi 0, %s70
    %s92 = sphi 0, %s94
    %s95 = sphi 0, %s92
    %s96 = sphi 0, %s95
    %s112 = sphi 0, %s96
  $region4: #{_forward.22} parent=0 // loop_header_branch
    %12 = sbr.rel (%p10) target = $region8
  $region5: #{_forward.22} parent=0 // loop_body
    %s14 = ssub.s32 %s9, 1
    %s15 = ssub.s32 %s9, 2
    %s16 = sadd.s32 %s9, 1
    %s17 = ssub.s32 %s9, %s16
    %p18 = scmp.eq.s32.totalorder %s17, 0
    %s20 = sadd.s32 %s19, 1
    %s21 = scalar_select %p18, %s19, %s20
    %p24 = pneg %p18
    %p25 = scmp.eq.s32.totalorder %s9, 1
    %p26 = por %p24, %p25
    %p27 = scmp.ne.s32.totalorder %s19, %s22
    %p28 = scmp.eq.s32.totalorder %s9, 0
    %p29 = por %p27, %p28
    %p30 = scmp.ne.s32.totalorder %s19, %s22
    %p31 = scmp.eq.s32.totalorder %s14, 1
    %p32 = por %p30, %p31
    %p33 = scmp.ne.s32.totalorder %s22, %s23
    %p34 = scmp.eq.s32.totalorder %s14, 0
    %p35 = por %p33, %p34
    %p36 = scmp.ne.s32.totalorder %s22, %s23
    %p37 = scmp.eq.s32.totalorder %s15, 1
    %p38 = por %p36, %p37
    %p40 = scmp.ne.s32.totalorder %s23, %s39
    %p41 = scmp.eq.s32.totalorder %s15, 0
    %p42 = por %p40, %p41
    %s44 = sadd.s32 %s43, 1
    %p47 = scmp.eq.s32.totalorder %s9, 1
    %p48 = scmp.ne.s32.totalorder %s43, %s45
    %p49 = scmp.eq.s32.totalorder %s9, 0
    %p50 = por %p48, %p49
    %p51 = scmp.ne.s32.totalorder %s43, %s45
    %p52 = scmp.eq.s32.totalorder %s14, 1
    %p53 = por %p51, %p52
    %p54 = scmp.ne.s32.totalorder %s45, %s46
    %p55 = scmp.eq.s32.totalorder %s14, 0
    %p56 = por %p54, %p55
    %p57 = scmp.ne.s32.totalorder %s45, %s46
    %p58 = scmp.eq.s32.totalorder %s15, 1
    %p59 = por %p57, %p58
    %p61 = scmp.ne.s32.totalorder %s46, %s60
    %p62 = scmp.eq.s32.totalorder %s15, 0
    %p63 = por %p61, %p62
    %s64 = ssub.s32 %s9, %s16
    %p65 = scmp.eq.s32.totalorder %s64, 0
    %s67 = sadd.s32 %s66, 1
    %s68 = scalar_select %p65, %s66, %s67
    %p71 = pneg %p65
    %p72 = scmp.eq.s32.totalorder %s9, 1
    %p73 = por %p71, %p72
    %p74 = scmp.ne.s32.totalorder %s66, %s69
    %p75 = scmp.eq.s32.totalorder %s9, 0
    %p76 = por %p74, %p75
    %p77 = scmp.ne.s32.totalorder %s66, %s69
    %p78 = scmp.eq.s32.totalorder %s14, 1
    %p79 = por %p77, %p78
    %p80 = scmp.ne.s32.totalorder %s69, %s70
    %p81 = scmp.eq.s32.totalorder %s14, 0
    %p82 = por %p80, %p81
    %p83 = scmp.ne.s32.totalorder %s69, %s70
    %p84 = scmp.eq.s32.totalorder %s15, 1
    %p85 = por %p83, %p84
    %p87 = scmp.ne.s32.totalorder %s70, %s86
    %p88 = scmp.eq.s32.totalorder %s15, 0
    %p89 = por %p87, %p88
    %s90 = ssub.s32 %s9, %s16
    %p91 = scmp.eq.s32.totalorder %s90, 0
    %s93 = sadd.s32 %s92, 1
    %s94 = scalar_select %p91, %s92, %s93
    %p97 = pneg %p91
    %p98 = scmp.eq.s32.totalorder %s9, 1
    %p99 = por %p97, %p98
    %p100 = scmp.ne.s32.totalorder %s92, %s95
    %p101 = scmp.eq.s32.totalorder %s9, 0
    %p102 = por %p100, %p101
    %p103 = scmp.ne.s32.totalorder %s92, %s95
    %p104 = scmp.eq.s32.totalorder %s14, 1
    %p105 = por %p103, %p104
    %p106 = scmp.ne.s32.totalorder %s95, %s96
    %p107 = scmp.eq.s32.totalorder %s14, 0
    %p108 = por %p106, %p107
    %p109 = scmp.ne.s32.totalorder %s95, %s96
    %p110 = scmp.eq.s32.totalorder %s15, 1
    %p111 = por %p109, %p110
    %p113 = scmp.ne.s32.totalorder %s96, %s112
    %p114 = scmp.eq.s32.totalorder %s15, 0
    %p115 = por %p113, %p114
    %p116 = scmp.le.s32.totalorder 1, %s9
    %p117 = scmp.lt.s32.totalorder %s9, 3
    %p118 = pnand %p116, %p117
    %p119 = pneg %p118
    // Predicated region
    $region9: #{_forward.22} parent=5 // pred_check
      _
    $region10: #{_forward.22} parent=5 // pred_check_branch
      %121 = sbr.rel (%p118) target = $region12
    $region11: #{_forward.22} parent=5 // pred_region
      %s122 = ssub.s32 %s9, 1
      // Predicated region
      $region13: #{_forward.22} parent=11 // pred_check
        %p123 = pneg %p56
      $region14: #{_forward.22} parent=11 // pred_check_branch
        %125 = sbr.rel (%p123) target = $region16
      $region15: #{_forward.22} parent=11 // pred_region
        _
      $region16: #{_forward.22} parent=11 // pred_fallthru
        _
    $region12: #{_forward.22} parent=5 // pred_fallthru
      _
    %p126 = scmp.lt.s32.totalorder %s9, 2
    // Predicated region
    $region17: #{_forward.22} parent=5 // pred_check
      %p127 = pneg %p126
    $region18: #{_forward.22} parent=5 // pred_check_branch
      %129 = sbr.rel (%p127) target = $region20
    $region19: #{_forward.22} parent=5 // pred_region
      // Predicated region
      $region21: #{_forward.22} parent=19 // pred_check
        %p130 = pneg %p29
      $region22: #{_forward.22} parent=19 // pred_check_branch
        %132 = sbr.rel (%p130) target = $region24
      $region23: #{_forward.22} parent=19 // pred_region
        %s133 = smul.u32 64, %s9
        %p134 = scmp.lt.s32.totalorder %s133, 127
        %s135 = scalar_select %p134, %s133, 127
        %s136 = smul.addr %s135, 8
        %s137 = scalar_lea.vmem %s0, %s136
        %s138 = smul.u32 64, %s9
      $region24: #{_forward.22} parent=19 // pred_fallthru
        _
      // Predicated region
      $region25: #{_forward.22} parent=19 // pred_check
        %p139 = pneg %p76
      $region26: #{_forward.22} parent=19 // pred_check_branch
        %141 = sbr.rel (%p139) target = $region28
      $region27: #{_forward.22} parent=19 // pred_region
        %s142 = smul.u32 64, %s9
        %p143 = scmp.lt.s32.totalorder %s142, 127
        %s144 = scalar_select %p143, %s142, 127
        %s145 = smul.addr %s144, 8
        %s146 = scalar_lea.vmem %s2, %s145
        %s147 = smul.u32 64, %s9
      $region28: #{_forward.22} parent=19 // pred_fallthru
        _
    $region20: #{_forward.22} parent=5 // pred_fallthru
      _
    %p148 = scmp.le.s32.totalorder 1, %s9
    %p149 = scmp.lt.s32.totalorder %s9, 3
    %p150 = pnand %p148, %p149
    %p151 = pneg %p150
    // Predicated region
    $region29: #{_forward.22} parent=5 // pred_check
      _
    $region30: #{_forward.22} parent=5 // pred_check_branch
      %153 = sbr.rel (%p150) target = $region32
    $region31: #{_forward.22} parent=5 // pred_region
      %s154 = ssub.s32 %s9, 1
      %s155 = smul.u32 64, %s14
      %p156 = scmp.lt.s32.totalorder %s155, 127
      %s157 = scalar_select %p156, %s155, 127
      %s158 = smul.addr %s157, 8
      %s159 = scalar_lea.vmem %s0, %s158
      %p160 = pneg %p35
      %p161 = pneg %p32
      %p162 = pneg %p56
      %p163 = pneg %p53
      %s164 = smul.u32 64, %s14
      %p165 = scmp.lt.s32.totalorder %s164, 127
      %s166 = scalar_select %p165, %s164, 127
      %s167 = smul.addr %s166, 8
      %s168 = scalar_lea.vmem %s2, %s167
      %p169 = pneg %p82
      %p170 = pneg %p79
      %p171 = pneg %p108
      %p172 = pneg %p105
      %s173 = smul.u32 64, %s14
      %p174 = scmp.lt.s32.totalorder %s173, 127
      %s175 = scalar_select %p174, %s173, 127
      %s176 = smul.addr %s175, 8
      %s177 = scalar_lea.vmem %s3, %s176
      %s178 = smul.u32 64, %s14
      %p179 = scmp.lt.s32.totalorder %s178, 127
      %s180 = scalar_select %p179, %s178, 127
      %s181 = smul.addr %s180, 8
      %s182 = scalar_lea.vmem %s0, %s181
      %s183 = smul.u32 64, %s14
      %s184 = smul.u32 64, %s14
      %p185 = scmp.lt.s32.totalorder %s184, 127
      %s186 = scalar_select %p185, %s184, 127
      %s187 = smul.addr %s186, 8
      %s188 = scalar_lea.vmem %s2, %s187
      %s189 = smul.u32 64, %s14
      %s190 = smul.u32 64, %s14
      %p191 = scmp.lt.s32.totalorder %s190, 127
      %s192 = scalar_select %p191, %s190, 127
      %s193 = smul.addr %s192, 8
      %s194 = scalar_lea.vmem %s3, %s193
      %s195 = smul.u32 64, %s14
      %v197 = vld [vmem:[%s182] sm:$0xff]
      %v198 = vld [vmem:[%s182 + $0x8] sm:$0xff]
      %v199 = vld [vmem:[%s182 + $0x10] sm:$0xff]
      %v200 = vld [vmem:[%s182 + $0x18] sm:$0xff]
      %v201 = vld [vmem:[%s182 + $0x20] sm:$0xff]
      %v202 = vld [vmem:[%s182 + $0x28] sm:$0xff]
      %v203 = vld [vmem:[%s182 + $0x30] sm:$0xff]
      %v204 = vld [vmem:[%s182 + $0x38] sm:$0xff]
      %v205 = vld [vmem:[%s182 + $0x40] sm:$0xff]
      %v206 = vld [vmem:[%s182 + $0x48] sm:$0xff]
      %v207 = vld [vmem:[%s182 + $0x50] sm:$0xff]
      %v208 = vld [vmem:[%s182 + $0x58] sm:$0xff]
      %v209 = vld [vmem:[%s182 + $0x60] sm:$0xff]
      %v210 = vld [vmem:[%s182 + $0x68] sm:$0xff]
      %v211 = vld [vmem:[%s182 + $0x70] sm:$0xff]
      %v212 = vld [vmem:[%s182 + $0x78] sm:$0xff]
      %v213 = vld [vmem:[%s182 + $0x80] sm:$0xff]
      %v214 = vld [vmem:[%s182 + $0x88] sm:$0xff]
      %v215 = vld [vmem:[%s182 + $0x90] sm:$0xff]
      %v216 = vld [vmem:[%s182 + $0x98] sm:$0xff]
      %v217 = vld [vmem:[%s182 + $0xa0] sm:$0xff]
      %v218 = vld [vmem:[%s182 + $0xa8] sm:$0xff]
      %v219 = vld [vmem:[%s182 + $0xb0] sm:$0xff]
      %v220 = vld [vmem:[%s182 + $0xb8] sm:$0xff]
      %v221 = vld [vmem:[%s182 + $0xc0] sm:$0xff]
      %v222 = vld [vmem:[%s182 + $0xc8] sm:$0xff]
      %v223 = vld [vmem:[%s182 + $0xd0] sm:$0xff]
      %v224 = vld [vmem:[%s182 + $0xd8] sm:$0xff]
      %v225 = vld [vmem:[%s182 + $0xe0] sm:$0xff]
      %v226 = vld [vmem:[%s182 + $0xe8] sm:$0xff]
      %v227 = vld [vmem:[%s182 + $0xf0] sm:$0xff]
      %v228 = vld [vmem:[%s182 + $0xf8] sm:$0xff]
      %v229 = vld [vmem:[%s182 + $0x100] sm:$0xff]
      %v230 = vld [vmem:[%s182 + $0x108] sm:$0xff]
      %v231 = vld [vmem:[%s182 + $0x110] sm:$0xff]
      %v232 = vld [vmem:[%s182 + $0x118] sm:$0xff]
      %v233 = vld [vmem:[%s182 + $0x120] sm:$0xff]
      %v234 = vld [vmem:[%s182 + $0x128] sm:$0xff]
      %v235 = vld [vmem:[%s182 + $0x130] sm:$0xff]
      %v236 = vld [vmem:[%s182 + $0x138] sm:$0xff]
      %v237 = vld [vmem:[%s182 + $0x140] sm:$0xff]
      %v238 = vld [vmem:[%s182 + $0x148] sm:$0xff]
      %v239 = vld [vmem:[%s182 + $0x150] sm:$0xff]
      %v240 = vld [vmem:[%s182 + $0x158] sm:$0xff]
      %v241 = vld [vmem:[%s182 + $0x160] sm:$0xff]
      %v242 = vld [vmem:[%s182 + $0x168] sm:$0xff]
      %v243 = vld [vmem:[%s182 + $0x170] sm:$0xff]
      %v244 = vld [vmem:[%s182 + $0x178] sm:$0xff]
      %v245 = vld [vmem:[%s182 + $0x180] sm:$0xff]
      %v246 = vld [vmem:[%s182 + $0x188] sm:$0xff]
      %v247 = vld [vmem:[%s182 + $0x190] sm:$0xff]
      %v248 = vld [vmem:[%s182 + $0x198] sm:$0xff]
      %v249 = vld [vmem:[%s182 + $0x1a0] sm:$0xff]
      %v250 = vld [vmem:[%s182 + $0x1a8] sm:$0xff]
      %v251 = vld [vmem:[%s182 + $0x1b0] sm:$0xff]
      %v252 = vld [vmem:[%s182 + $0x1b8] sm:$0xff]
      %v253 = vld [vmem:[%s182 + $0x1c0] sm:$0xff]
      %v254 = vld [vmem:[%s182 + $0x1c8] sm:$0xff]
      %v255 = vld [vmem:[%s182 + $0x1d0] sm:$0xff]
      %v256 = vld [vmem:[%s182 + $0x1d8] sm:$0xff]
      %v257 = vld [vmem:[%s182 + $0x1e0] sm:$0xff]
      %v258 = vld [vmem:[%s182 + $0x1e8] sm:$0xff]
      %v259 = vld [vmem:[%s182 + $0x1f0] sm:$0xff]
      %v260 = vld [vmem:[%s182 + $0x1f8] sm:$0xff]
      %v261 = vpack.c.bf16 %v198, %v197
      %v262 = vpack.c.bf16 %v200, %v199
      %v263 = vpack.c.bf16 %v202, %v201
      %v264 = vpack.c.bf16 %v204, %v203
      %v265 = vpack.c.bf16 %v206, %v205
      %v266 = vpack.c.bf16 %v208, %v207
      %v267 = vpack.c.bf16 %v210, %v209
      %v268 = vpack.c.bf16 %v212, %v211
      %v269 = vpack.c.bf16 %v214, %v213
      %v270 = vpack.c.bf16 %v216, %v215
      %v271 = vpack.c.bf16 %v218, %v217
      %v272 = vpack.c.bf16 %v220, %v219
      %v273 = vpack.c.bf16 %v222, %v221
      %v274 = vpack.c.bf16 %v224, %v223
      %v275 = vpack.c.bf16 %v226, %v225
      %v276 = vpack.c.bf16 %v228, %v227
      %v277 = vpack.c.bf16 %v230, %v229
      %v278 = vpack.c.bf16 %v232, %v231
      %v279 = vpack.c.bf16 %v234, %v233
      %v280 = vpack.c.bf16 %v236, %v235
      %v281 = vpack.c.bf16 %v238, %v237
      %v282 = vpack.c.bf16 %v240, %v239
      %v283 = vpack.c.bf16 %v242, %v241
      %v284 = vpack.c.bf16 %v244, %v243
      %v285 = vpack.c.bf16 %v246, %v245
      %v286 = vpack.c.bf16 %v248, %v247
      %v287 = vpack.c.bf16 %v250, %v249
      %v288 = vpack.c.bf16 %v252, %v251
      %v289 = vpack.c.bf16 %v254, %v253
      %v290 = vpack.c.bf16 %v256, %v255
      %v291 = vpack.c.bf16 %v258, %v257
      %v292 = vpack.c.bf16 %v260, %v259
      %v293 = vld [vmem:[%s1] sm:$0xf]
      %v294 = vld [vmem:[%s188] sm:$0xff]
      %v295 = vld [vmem:[%s188 + $0x8] sm:$0xff]
      %v296 = vld [vmem:[%s188 + $0x10] sm:$0xff]
      %v297 = vld [vmem:[%s188 + $0x18] sm:$0xff]
      %v298 = vld [vmem:[%s188 + $0x20] sm:$0xff]
      %v299 = vld [vmem:[%s188 + $0x28] sm:$0xff]
      %v300 = vld [vmem:[%s188 + $0x30] sm:$0xff]
      %v301 = vld [vmem:[%s188 + $0x38] sm:$0xff]
      %v302 = vld [vmem:[%s188 + $0x40] sm:$0xff]
      %v303 = vld [vmem:[%s188 + $0x48] sm:$0xff]
      %v304 = vld [vmem:[%s188 + $0x50] sm:$0xff]
      %v305 = vld [vmem:[%s188 + $0x58] sm:$0xff]
      %v306 = vld [vmem:[%s188 + $0x60] sm:$0xff]
      %v307 = vld [vmem:[%s188 + $0x68] sm:$0xff]
      %v308 = vld [vmem:[%s188 + $0x70] sm:$0xff]
      %v309 = vld [vmem:[%s188 + $0x78] sm:$0xff]
      %v310 = vld [vmem:[%s188 + $0x80] sm:$0xff]
      %v311 = vld [vmem:[%s188 + $0x88] sm:$0xff]
      %v312 = vld [vmem:[%s188 + $0x90] sm:$0xff]
      %v313 = vld [vmem:[%s188 + $0x98] sm:$0xff]
      %v314 = vld [vmem:[%s188 + $0xa0] sm:$0xff]
      %v315 = vld [vmem:[%s188 + $0xa8] sm:$0xff]
      %v316 = vld [vmem:[%s188 + $0xb0] sm:$0xff]
      %v317 = vld [vmem:[%s188 + $0xb8] sm:$0xff]
      %v318 = vld [vmem:[%s188 + $0xc0] sm:$0xff]
      %v319 = vld [vmem:[%s188 + $0xc8] sm:$0xff]
      %v320 = vld [vmem:[%s188 + $0xd0] sm:$0xff]
      %v321 = vld [vmem:[%s188 + $0xd8] sm:$0xff]
      %v322 = vld [vmem:[%s188 + $0xe0] sm:$0xff]
      %v323 = vld [vmem:[%s188 + $0xe8] sm:$0xff]
      %v324 = vld [vmem:[%s188 + $0xf0] sm:$0xff]
      %v325 = vld [vmem:[%s188 + $0xf8] sm:$0xff]
      %v326 = vld [vmem:[%s188 + $0x100] sm:$0xff]
      %v327 = vld [vmem:[%s188 + $0x108] sm:$0xff]
      %v328 = vld [vmem:[%s188 + $0x110] sm:$0xff]
      %v329 = vld [vmem:[%s188 + $0x118] sm:$0xff]
      %v330 = vld [vmem:[%s188 + $0x120] sm:$0xff]
      %v331 = vld [vmem:[%s188 + $0x128] sm:$0xff]
      %v332 = vld [vmem:[%s188 + $0x130] sm:$0xff]
      %v333 = vld [vmem:[%s188 + $0x138] sm:$0xff]
      %v334 = vld [vmem:[%s188 + $0x140] sm:$0xff]
      %v335 = vld [vmem:[%s188 + $0x148] sm:$0xff]
      %v336 = vld [vmem:[%s188 + $0x150] sm:$0xff]
      %v337 = vld [vmem:[%s188 + $0x158] sm:$0xff]
      %v338 = vld [vmem:[%s188 + $0x160] sm:$0xff]
      %v339 = vld [vmem:[%s188 + $0x168] sm:$0xff]
      %v340 = vld [vmem:[%s188 + $0x170] sm:$0xff]
      %v341 = vld [vmem:[%s188 + $0x178] sm:$0xff]
      %v342 = vld [vmem:[%s188 + $0x180] sm:$0xff]
      %v343 = vld [vmem:[%s188 + $0x188] sm:$0xff]
      %v344 = vld [vmem:[%s188 + $0x190] sm:$0xff]
      %v345 = vld [vmem:[%s188 + $0x198] sm:$0xff]
      %v346 = vld [vmem:[%s188 + $0x1a0] sm:$0xff]
      %v347 = vld [vmem:[%s188 + $0x1a8] sm:$0xff]
      %v348 = vld [vmem:[%s188 + $0x1b0] sm:$0xff]
      %v349 = vld [vmem:[%s188 + $0x1b8] sm:$0xff]
      %v350 = vld [vmem:[%s188 + $0x1c0] sm:$0xff]
      %v351 = vld [vmem:[%s188 + $0x1c8] sm:$0xff]
      %v352 = vld [vmem:[%s188 + $0x1d0] sm:$0xff]
      %v353 = vld [vmem:[%s188 + $0x1d8] sm:$0xff]
      %v354 = vld [vmem:[%s188 + $0x1e0] sm:$0xff]
      %v355 = vld [vmem:[%s188 + $0x1e8] sm:$0xff]
      %v356 = vld [vmem:[%s188 + $0x1f0] sm:$0xff]
      %v357 = vld [vmem:[%s188 + $0x1f8] sm:$0xff]
      %vm358 = vcmask 64512
      %v360 = vsel %vm358, %v261, 0
      %v363 = vsel %vm358, %v262, 0
      %v366 = vsel %vm358, %v263, 0
      %v369 = vsel %vm358, %v264, 0
      %v372 = vsel %vm358, %v265, 0
      %v375 = vsel %vm358, %v266, 0
      %v378 = vsel %vm358, %v267, 0
      %v381 = vsel %vm358, %v268, 0
      %v384 = vsel %vm358, %v269, 0
      %v387 = vsel %vm358, %v270, 0
      %v390 = vsel %vm358, %v271, 0
      %v393 = vsel %vm358, %v272, 0
      %v396 = vsel %vm358, %v273, 0
      %v399 = vsel %vm358, %v274, 0
      %v402 = vsel %vm358, %v275, 0
      %v405 = vsel %vm358, %v276, 0
      %v408 = vsel %vm358, %v277, 0
      %v411 = vsel %vm358, %v278, 0
      %v414 = vsel %vm358, %v279, 0
      %v417 = vsel %vm358, %v280, 0
      %v420 = vsel %vm358, %v281, 0
      %v423 = vsel %vm358, %v282, 0
      %v426 = vsel %vm358, %v283, 0
      %v429 = vsel %vm358, %v284, 0
      %v432 = vsel %vm358, %v285, 0
      %v435 = vsel %vm358, %v286, 0
      %v438 = vsel %vm358, %v287, 0
      %v441 = vsel %vm358, %v288, 0
      %v444 = vsel %vm358, %v289, 0
      %v447 = vsel %vm358, %v290, 0
      %v450 = vsel %vm358, %v291, 0
      %v453 = vsel %vm358, %v292, 0
      %vm455 = vcmask 1043456
      %v457 = vsel %vm455, %v293, 0
      %459 = vmatpush.bf16.msra.mxu0 0
      %460 = vmatpush.bf16.msra.mxu0 0
      %461 = vmatpush.bf16.msra.mxu0 0
      %462 = vmatpush.bf16.msra.mxu0 0
      %463 = vmatpush.bf16.msra.mxu0 0
      %464 = vmatpush.bf16.msra.mxu0 0
      %465 = vmatpush.bf16.msra.mxu0 0
      %466 = vmatpush.bf16.msra.mxu0 %v457
      %467 = vmatmul.bf16.gmra.mxu0 %v360
      %v468 = vpop.f32.mrf.mxu0
      %v469 = vadd.f32 %v294, %v468
      %v470 = vpop.f32.mrf.mxu0
      %v471 = vadd.f32 %v295, %v470
      %472 = vmatmul.bf16.gmra.mxu0 %v363
      %v473 = vpop.f32.mrf.mxu0
      %v474 = vadd.f32 %v296, %v473
      %v475 = vpop.f32.mrf.mxu0
      %v476 = vadd.f32 %v297, %v475
      %477 = vmatmul.bf16.gmra.mxu0 %v366
      %v478 = vpop.f32.mrf.mxu0
      %v479 = vadd.f32 %v298, %v478
      %v480 = vpop.f32.mrf.mxu0
      %v481 = vadd.f32 %v299, %v480
      %482 = vmatmul.bf16.gmra.mxu0 %v369
      %v483 = vpop.f32.mrf.mxu0
      %v484 = vadd.f32 %v300, %v483
      %v485 = vpop.f32.mrf.mxu0
      %v486 = vadd.f32 %v301, %v485
      %487 = vmatmul.bf16.gmra.mxu0 %v372
      %v488 = vpop.f32.mrf.mxu0
      %v489 = vadd.f32 %v302, %v488
      %v490 = vpop.f32.mrf.mxu0
      %v491 = vadd.f32 %v303, %v490
      %492 = vmatmul.bf16.gmra.mxu0 %v375
      %v493 = vpop.f32.mrf.mxu0
      %v494 = vadd.f32 %v304, %v493
      %v495 = vpop.f32.mrf.mxu0
      %v496 = vadd.f32 %v305, %v495
      %497 = vmatmul.bf16.gmra.mxu0 %v378
      %v498 = vpop.f32.mrf.mxu0
      %v499 = vadd.f32 %v306, %v498
      %v500 = vpop.f32.mrf.mxu0
      %v501 = vadd.f32 %v307, %v500
      %502 = vmatmul.bf16.gmra.mxu0 %v381
      %v503 = vpop.f32.mrf.mxu0
      %v504 = vadd.f32 %v308, %v503
      %v505 = vpop.f32.mrf.mxu0
      %v506 = vadd.f32 %v309, %v505
      %507 = vmatmul.bf16.gmra.mxu0 %v384
      %v508 = vpop.f32.mrf.mxu0
      %v509 = vadd.f32 %v310, %v508
      %v510 = vpop.f32.mrf.mxu0
      %v511 = vadd.f32 %v311, %v510
      %512 = vmatmul.bf16.gmra.mxu0 %v387
      %v513 = vpop.f32.mrf.mxu0
      %v514 = vadd.f32 %v312, %v513
      %v515 = vpop.f32.mrf.mxu0
      %v516 = vadd.f32 %v313, %v515
      %517 = vmatmul.bf16.gmra.mxu0 %v390
      %v518 = vpop.f32.mrf.mxu0
      %v519 = vadd.f32 %v314, %v518
      %v520 = vpop.f32.mrf.mxu0
      %v521 = vadd.f32 %v315, %v520
      %522 = vmatmul.bf16.gmra.mxu0 %v393
      %v523 = vpop.f32.mrf.mxu0
      %v524 = vadd.f32 %v316, %v523
      %v525 = vpop.f32.mrf.mxu0
      %v526 = vadd.f32 %v317, %v525
      %527 = vmatmul.bf16.gmra.mxu0 %v396
      %v528 = vpop.f32.mrf.mxu0
      %v529 = vadd.f32 %v318, %v528
      %v530 = vpop.f32.mrf.mxu0
      %v531 = vadd.f32 %v319, %v530
      %532 = vmatmul.bf16.gmra.mxu0 %v399
      %v533 = vpop.f32.mrf.mxu0
      %v534 = vadd.f32 %v320, %v533
      %v535 = vpop.f32.mrf.mxu0
      %v536 = vadd.f32 %v321, %v535
      %537 = vmatmul.bf16.gmra.mxu0 %v402
      %v538 = vpop.f32.mrf.mxu0
      %v539 = vadd.f32 %v322, %v538
      %v540 = vpop.f32.mrf.mxu0
      %v541 = vadd.f32 %v323, %v540
      %542 = vmatmul.bf16.gmra.mxu0 %v405
      %v543 = vpop.f32.mrf.mxu0
      %v544 = vadd.f32 %v324, %v543
      %v545 = vpop.f32.mrf.mxu0
      %v546 = vadd.f32 %v325, %v545
      %547 = vmatmul.bf16.gmra.mxu0 %v408
      %v548 = vpop.f32.mrf.mxu0
      %v549 = vadd.f32 %v326, %v548
      %v550 = vpop.f32.mrf.mxu0
      %v551 = vadd.f32 %v327, %v550
      %552 = vmatmul.bf16.gmra.mxu0 %v411
      %v553 = vpop.f32.mrf.mxu0
      %v554 = vadd.f32 %v328, %v553
      %v555 = vpop.f32.mrf.mxu0
      %v556 = vadd.f32 %v329, %v555
      %557 = vmatmul.bf16.gmra.mxu0 %v414
      %v558 = vpop.f32.mrf.mxu0
      %v559 = vadd.f32 %v330, %v558
      %v560 = vpop.f32.mrf.mxu0
      %v561 = vadd.f32 %v331, %v560
      %562 = vmatmul.bf16.gmra.mxu0 %v417
      %v563 = vpop.f32.mrf.mxu0
      %v564 = vadd.f32 %v332, %v563
      %v565 = vpop.f32.mrf.mxu0
      %v566 = vadd.f32 %v333, %v565
      %567 = vmatmul.bf16.gmra.mxu0 %v420
      %v568 = vpop.f32.mrf.mxu0
      %v569 = vadd.f32 %v334, %v568
      %v570 = vpop.f32.mrf.mxu0
      %v571 = vadd.f32 %v335, %v570
      %572 = vmatmul.bf16.gmra.mxu0 %v423
      %v573 = vpop.f32.mrf.mxu0
      %v574 = vadd.f32 %v336, %v573
      %v575 = vpop.f32.mrf.mxu0
      %v576 = vadd.f32 %v337, %v575
      %577 = vmatmul.bf16.gmra.mxu0 %v426
      %v578 = vpop.f32.mrf.mxu0
      %v579 = vadd.f32 %v338, %v578
      %v580 = vpop.f32.mrf.mxu0
      %v581 = vadd.f32 %v339, %v580
      %582 = vmatmul.bf16.gmra.mxu0 %v429
      %v583 = vpop.f32.mrf.mxu0
      %v584 = vadd.f32 %v340, %v583
      %v585 = vpop.f32.mrf.mxu0
      %v586 = vadd.f32 %v341, %v585
      %587 = vmatmul.bf16.gmra.mxu0 %v432
      %v588 = vpop.f32.mrf.mxu0
      %v589 = vadd.f32 %v342, %v588
      %v590 = vpop.f32.mrf.mxu0
      %v591 = vadd.f32 %v343, %v590
      %592 = vmatmul.bf16.gmra.mxu0 %v435
      %v593 = vpop.f32.mrf.mxu0
      %v594 = vadd.f32 %v344, %v593
      %v595 = vpop.f32.mrf.mxu0
      %v596 = vadd.f32 %v345, %v595
      %597 = vmatmul.bf16.gmra.mxu0 %v438
      %v598 = vpop.f32.mrf.mxu0
      %v599 = vadd.f32 %v346, %v598
      %v600 = vpop.f32.mrf.mxu0
      %v601 = vadd.f32 %v347, %v600
      %602 = vmatmul.bf16.gmra.mxu0 %v441
      %v603 = vpop.f32.mrf.mxu0
      %v604 = vadd.f32 %v348, %v603
      %v605 = vpop.f32.mrf.mxu0
      %v606 = vadd.f32 %v349, %v605
      %607 = vmatmul.bf16.gmra.mxu0 %v444
      %v608 = vpop.f32.mrf.mxu0
      %v609 = vadd.f32 %v350, %v608
      %v610 = vpop.f32.mrf.mxu0
      %v611 = vadd.f32 %v351, %v610
      %612 = vmatmul.bf16.gmra.mxu0 %v447
      %v613 = vpop.f32.mrf.mxu0
      %v614 = vadd.f32 %v352, %v613
      %v615 = vpop.f32.mrf.mxu0
      %v616 = vadd.f32 %v353, %v615
      %617 = vmatmul.bf16.gmra.mxu0 %v450
      %v618 = vpop.f32.mrf.mxu0
      %v619 = vadd.f32 %v354, %v618
      %v620 = vpop.f32.mrf.mxu0
      %v621 = vadd.f32 %v355, %v620
      %622 = vmatmul.bf16.gmra.mxu0 %v453
      %v623 = vpop.f32.mrf.mxu0
      %v624 = vadd.f32 %v356, %v623
      %v625 = vpop.f32.mrf.mxu0
      %v626 = vadd.f32 %v357, %v625
      %627 = vdwg.mxu0
      %vm628 = vcmask 130048
      %629 = vst.msk [vmem:[%s194] sm:$0xff] %vm628, %v469
      %630 = vst.msk [vmem:[%s194 + $0x8] sm:$0xff] %vm628, %v471
      %631 = vst.msk [vmem:[%s194 + $0x10] sm:$0xff] %vm628, %v474
      %632 = vst.msk [vmem:[%s194 + $0x18] sm:$0xff] %vm628, %v476
      %633 = vst.msk [vmem:[%s194 + $0x20] sm:$0xff] %vm628, %v479
      %634 = vst.msk [vmem:[%s194 + $0x28] sm:$0xff] %vm628, %v481
      %635 = vst.msk [vmem:[%s194 + $0x30] sm:$0xff] %vm628, %v484
      %636 = vst.msk [vmem:[%s194 + $0x38] sm:$0xff] %vm628, %v486
      %637 = vst.msk [vmem:[%s194 + $0x40] sm:$0xff] %vm628, %v489
      %638 = vst.msk [vmem:[%s194 + $0x48] sm:$0xff] %vm628, %v491
      %639 = vst.msk [vmem:[%s194 + $0x50] sm:$0xff] %vm628, %v494
      %640 = vst.msk [vmem:[%s194 + $0x58] sm:$0xff] %vm628, %v496
      %641 = vst.msk [vmem:[%s194 + $0x60] sm:$0xff] %vm628, %v499
      %642 = vst.msk [vmem:[%s194 + $0x68] sm:$0xff] %vm628, %v501
      %643 = vst.msk [vmem:[%s194 + $0x70] sm:$0xff] %vm628, %v504
      %644 = vst.msk [vmem:[%s194 + $0x78] sm:$0xff] %vm628, %v506
      %645 = vst.msk [vmem:[%s194 + $0x80] sm:$0xff] %vm628, %v509
      %646 = vst.msk [vmem:[%s194 + $0x88] sm:$0xff] %vm628, %v511
      %647 = vst.msk [vmem:[%s194 + $0x90] sm:$0xff] %vm628, %v514
      %648 = vst.msk [vmem:[%s194 + $0x98] sm:$0xff] %vm628, %v516
      %649 = vst.msk [vmem:[%s194 + $0xa0] sm:$0xff] %vm628, %v519
      %650 = vst.msk [vmem:[%s194 + $0xa8] sm:$0xff] %vm628, %v521
      %651 = vst.msk [vmem:[%s194 + $0xb0] sm:$0xff] %vm628, %v524
      %652 = vst.msk [vmem:[%s194 + $0xb8] sm:$0xff] %vm628, %v526
      %653 = vst.msk [vmem:[%s194 + $0xc0] sm:$0xff] %vm628, %v529
      %654 = vst.msk [vmem:[%s194 + $0xc8] sm:$0xff] %vm628, %v531
      %655 = vst.msk [vmem:[%s194 + $0xd0] sm:$0xff] %vm628, %v534
      %656 = vst.msk [vmem:[%s194 + $0xd8] sm:$0xff] %vm628, %v536
      %657 = vst.msk [vmem:[%s194 + $0xe0] sm:$0xff] %vm628, %v539
      %658 = vst.msk [vmem:[%s194 + $0xe8] sm:$0xff] %vm628, %v541
      %659 = vst.msk [vmem:[%s194 + $0xf0] sm:$0xff] %vm628, %v544
      %660 = vst.msk [vmem:[%s194 + $0xf8] sm:$0xff] %vm628, %v546
      %661 = vst.msk [vmem:[%s194 + $0x100] sm:$0xff] %vm628, %v549
      %662 = vst.msk [vmem:[%s194 + $0x108] sm:$0xff] %vm628, %v551
      %663 = vst.msk [vmem:[%s194 + $0x110] sm:$0xff] %vm628, %v554
      %664 = vst.msk [vmem:[%s194 + $0x118] sm:$0xff] %vm628, %v556
      %665 = vst.msk [vmem:[%s194 + $0x120] sm:$0xff] %vm628, %v559
      %666 = vst.msk [vmem:[%s194 + $0x128] sm:$0xff] %vm628, %v561
      %667 = vst.msk [vmem:[%s194 + $0x130] sm:$0xff] %vm628, %v564
      %668 = vst.msk [vmem:[%s194 + $0x138] sm:$0xff] %vm628, %v566
      %669 = vst.msk [vmem:[%s194 + $0x140] sm:$0xff] %vm628, %v569
      %670 = vst.msk [vmem:[%s194 + $0x148] sm:$0xff] %vm628, %v571
      %671 = vst.msk [vmem:[%s194 + $0x150] sm:$0xff] %vm628, %v574
      %672 = vst.msk [vmem:[%s194 + $0x158] sm:$0xff] %vm628, %v576
      %673 = vst.msk [vmem:[%s194 + $0x160] sm:$0xff] %vm628, %v579
      %674 = vst.msk [vmem:[%s194 + $0x168] sm:$0xff] %vm628, %v581
      %675 = vst.msk [vmem:[%s194 + $0x170] sm:$0xff] %vm628, %v584
      %676 = vst.msk [vmem:[%s194 + $0x178] sm:$0xff] %vm628, %v586
      %677 = vst.msk [vmem:[%s194 + $0x180] sm:$0xff] %vm628, %v589
      %678 = vst.msk [vmem:[%s194 + $0x188] sm:$0xff] %vm628, %v591
      %679 = vst.msk [vmem:[%s194 + $0x190] sm:$0xff] %vm628, %v594
      %680 = vst.msk [vmem:[%s194 + $0x198] sm:$0xff] %vm628, %v596
      %681 = vst.msk [vmem:[%s194 + $0x1a0] sm:$0xff] %vm628, %v599
      %682 = vst.msk [vmem:[%s194 + $0x1a8] sm:$0xff] %vm628, %v601
      %683 = vst.msk [vmem:[%s194 + $0x1b0] sm:$0xff] %vm628, %v604
      %684 = vst.msk [vmem:[%s194 + $0x1b8] sm:$0xff] %vm628, %v606
      %685 = vst.msk [vmem:[%s194 + $0x1c0] sm:$0xff] %vm628, %v609
      %686 = vst.msk [vmem:[%s194 + $0x1c8] sm:$0xff] %vm628, %v611
      %687 = vst.msk [vmem:[%s194 + $0x1d0] sm:$0xff] %vm628, %v614
      %688 = vst.msk [vmem:[%s194 + $0x1d8] sm:$0xff] %vm628, %v616
      %689 = vst.msk [vmem:[%s194 + $0x1e0] sm:$0xff] %vm628, %v619
      %690 = vst.msk [vmem:[%s194 + $0x1e8] sm:$0xff] %vm628, %v621
      %691 = vst.msk [vmem:[%s194 + $0x1f0] sm:$0xff] %vm628, %v624
      %692 = vst.msk [vmem:[%s194 + $0x1f8] sm:$0xff] %vm628, %v626
      %s693 = smul.u32 64, %s14
      %p694 = scmp.lt.s32.totalorder %s693, 127
      %s695 = scalar_select %p694, %s693, 127
      %s696 = smul.addr %s695, 8
      %s697 = scalar_lea.vmem %s3, %s696
      // Predicated region
      $region33: #{_forward.22} parent=31 // pred_check
        %p698 = pneg %p105
      $region34: #{_forward.22} parent=31 // pred_check_branch
        %700 = sbr.rel (%p698) target = $region36
      $region35: #{_forward.22} parent=31 // pred_region
        %s701 = smul.u32 64, %s14
      $region36: #{_forward.22} parent=31 // pred_fallthru
        _
    $region32: #{_forward.22} parent=5 // pred_fallthru
      _
    %p702 = scmp.le.s32.totalorder 2, %s9
    // Predicated region
    $region37: #{_forward.22} parent=5 // pred_check
      %p703 = pneg %p702
    $region38: #{_forward.22} parent=5 // pred_check_branch
      %705 = sbr.rel (%p703) target = $region40
    $region39: #{_forward.22} parent=5 // pred_region
      %s706 = ssub.s32 %s9, 2
      // Predicated region
      $region41: #{_forward.22} parent=39 // pred_check
        %p707 = pneg %p111
      $region42: #{_forward.22} parent=39 // pred_check_branch
        %709 = sbr.rel (%p707) target = $region44
      $region43: #{_forward.22} parent=39 // pred_region
        %s710 = smul.u32 64, %s15
        %p711 = scmp.lt.s32.totalorder %s710, 127
        %s712 = scalar_select %p711, %s710, 127
        %s713 = smul.addr %s712, 8
        %s714 = scalar_lea.vmem %s3, %s713
      $region44: #{_forward.22} parent=39 // pred_fallthru
        _
    $region40: #{_forward.22} parent=5 // pred_fallthru
      _
  $region6: #{_forward.22} parent=0 // loop_footer
    %s13 = sadd.s32 1, %s9
  $region7: #{_forward.22} parent=0 // loop_footer_branch
    %8 = sbr.rel target = $region3
  $region8: #{_forward.22} parent=0 // loop_exit
    _

// kernel: _forward.25
$region0: #{_forward.25}
  #allocation0 [shape = 'u32[]', space=smem, size = 0x4, offset = 0x4, fixed_abs, tag = 'smem constant byte address 0x4 - core index']
  #allocation1 [shape = 'u32[72,128]{1,0:T(1,128)}', space=vmem, size = 0x9000, scoped, tag = 'internal scratch']
  %s0 = inlined_call_operand.vmem [shape: bf16[32,288], index: 0, kind: input, shape index: {}]
  %s1 = inlined_call_operand.vmem [shape: f32[288,32], index: 1, kind: input, shape index: {}]
  %s2 = inlined_call_operand.vmem [shape: f32[32,1], index: 2, kind: input, shape index: {}]
  %s3 = inlined_call_operand.vmem [shape: f32[32,32], index: 3, kind: output, shape index: {}]
  %s4 = sld [smem:[#allocation0]]
  $region22: #{_forward.25} parent=0
    _
  %s6 = ssub.s32 1, %s4
  %s7 = scalar_select 0, %s6, %s4
  // Predicated region
  $region2: #{_forward.25} parent=0 // pred_check
    _
  $region3: #{_forward.25} parent=0 // pred_check_branch
    %9 = sbr.rel (0) target = $region5
  $region4: #{_forward.25} parent=0 // pred_region
    _
  $region5: #{_forward.25} parent=0 // pred_fallthru
    _
  // Predicated region
  $region6: #{_forward.25} parent=0 // pred_check
    _
  $region7: #{_forward.25} parent=0 // pred_check_branch
    %11 = sbr.rel (0) target = $region9
  $region8: #{_forward.25} parent=0 // pred_region
    _
  $region9: #{_forward.25} parent=0 // pred_fallthru
    _
  // Predicated region
  $region10: #{_forward.25} parent=0 // pred_check
    _
  $region11: #{_forward.25} parent=0 // pred_check_branch
    %13 = sbr.rel (0) target = $region13
  $region12: #{_forward.25} parent=0 // pred_region
    _
  $region13: #{_forward.25} parent=0 // pred_fallthru
    _
  %v15 = vld [vmem:[%s0] sm:$0xff]
  %v16 = vld [vmem:[%s0 + $0x8] sm:$0xf]
  %v17 = vld [vmem:[%s0 + $0xc] sm:$0xff]
  %v18 = vld [vmem:[%s0 + $0x14] sm:$0xf]
  %v19 = vld [vmem:[%s0 + $0x18] sm:$0xff]
  %v20 = vld [vmem:[%s0 + $0x20] sm:$0xf]
  %v21 = vld [vmem:[%s0 + $0x24] sm:$0xff]
  %v22 = vld [vmem:[%s0 + $0x2c] sm:$0xf]
  %v23 = vld [vmem:[%s1] sm:$0xff]
  %v24 = vld [vmem:[%s1 + $0x8] sm:$0xff]
  %v25 = vld [vmem:[%s1 + $0x10] sm:$0xff]
  %v26 = vld [vmem:[%s1 + $0x18] sm:$0xff]
  %v27 = vld [vmem:[%s1 + $0x20] sm:$0xff]
  %v28 = vld [vmem:[%s1 + $0x28] sm:$0xff]
  %v29 = vld [vmem:[%s1 + $0x30] sm:$0xff]
  %v30 = vld [vmem:[%s1 + $0x38] sm:$0xff]
  %v31 = vld [vmem:[%s1 + $0x40] sm:$0xff]
  %v32 = vld [vmem:[%s1 + $0x48] sm:$0xff]
  %v33 = vld [vmem:[%s1 + $0x50] sm:$0xff]
  %v34 = vld [vmem:[%s1 + $0x58] sm:$0xff]
  %v35 = vld [vmem:[%s1 + $0x60] sm:$0xff]
  %v36 = vld [vmem:[%s1 + $0x68] sm:$0xff]
  %v37 = vld [vmem:[%s1 + $0x70] sm:$0xff]
  %v38 = vld [vmem:[%s1 + $0x78] sm:$0xff]
  %v39 = vld [vmem:[%s1 + $0x80] sm:$0xff]
  %v40 = vld [vmem:[%s1 + $0x88] sm:$0xff]
  %v41 = vld [vmem:[%s1 + $0x90] sm:$0xff]
  %v42 = vld [vmem:[%s1 + $0x98] sm:$0xff]
  %v43 = vld [vmem:[%s1 + $0xa0] sm:$0xff]
  %v44 = vld [vmem:[%s1 + $0xa8] sm:$0xff]
  %v45 = vld [vmem:[%s1 + $0xb0] sm:$0xff]
  %v46 = vld [vmem:[%s1 + $0xb8] sm:$0xff]
  %v47 = vld [vmem:[%s1 + $0xc0] sm:$0xff]
  %v48 = vld [vmem:[%s1 + $0xc8] sm:$0xff]
  %v49 = vld [vmem:[%s1 + $0xd0] sm:$0xff]
  %v50 = vld [vmem:[%s1 + $0xd8] sm:$0xff]
  %v51 = vld [vmem:[%s1 + $0xe0] sm:$0xff]
  %v52 = vld [vmem:[%s1 + $0xe8] sm:$0xff]
  %v53 = vld [vmem:[%s1 + $0xf0] sm:$0xff]
  %v54 = vld [vmem:[%s1 + $0xf8] sm:$0xff]
  %v55 = vld [vmem:[%s1 + $0x100] sm:$0xff]
  %v56 = vld [vmem:[%s1 + $0x108] sm:$0xff]
  %v57 = vld [vmem:[%s1 + $0x110] sm:$0xff]
  %v58 = vld [vmem:[%s1 + $0x118] sm:$0xff]
  %v59 = vpack.c.bf16 %v24, %v23
  %v60 = vpack.c.bf16 %v26, %v25
  %v61 = vpack.c.bf16 %v28, %v27
  %v62 = vpack.c.bf16 %v30, %v29
  %v63 = vpack.c.bf16 %v32, %v31
  %v64 = vpack.c.bf16 %v34, %v33
  %v65 = vpack.c.bf16 %v36, %v35
  %v66 = vpack.c.bf16 %v38, %v37
  %v67 = vpack.c.bf16 %v40, %v39
  %v68 = vpack.c.bf16 %v42, %v41
  %v69 = vpack.c.bf16 %v44, %v43
  %v70 = vpack.c.bf16 %v46, %v45
  %v71 = vpack.c.bf16 %v48, %v47
  %v72 = vpack.c.bf16 %v50, %v49
  %v73 = vpack.c.bf16 %v52, %v51
  %v74 = vpack.c.bf16 %v54, %v53
  %v75 = vpack.c.bf16 %v56, %v55
  %v76 = vpack.c.bf16 %v58, %v57
  %v77 = vld [vmem:[%s2] sm:$0xff]
  %v78 = vld [vmem:[%s2 + $0x8] sm:$0xff]
  %v79 = vld [vmem:[%s2 + $0x10] sm:$0xff]
  %v80 = vld [vmem:[%s2 + $0x18] sm:$0xff]
  %82 = vset.pattern.permute.xlu0 0
  %83 = vperm.xlu0 %82, %v77
  %v84 = vpop.permute.xlu0 %83
  %87 = vset.pattern.permute.xlu0 0
  %88 = vperm.xlu0 %87, %v78
  %v89 = vpop.permute.xlu0 %88
  %92 = vset.pattern.permute.xlu0 0
  %93 = vperm.xlu0 %92, %v79
  %v94 = vpop.permute.xlu0 %93
  %97 = vset.pattern.permute.xlu0 0
  %98 = vperm.xlu0 %97, %v80
  %v99 = vpop.permute.xlu0 %98
  %v109 = vunpack.c.l.b16 %v15
  %v110 = vunpack.c.h.b16 %v15
  %v111 = vunpack.c.l.b16 %v16
  %v112 = vunpack.c.l.b16 %v17
  %v113 = vunpack.c.h.b16 %v17
  %v114 = vunpack.c.l.b16 %v18
  %v115 = vunpack.c.l.b16 %v19
  %v116 = vunpack.c.h.b16 %v19
  %v117 = vunpack.c.l.b16 %v20
  %v118 = vunpack.c.l.b16 %v21
  %v119 = vunpack.c.h.b16 %v21
  %v120 = vunpack.c.l.b16 %v22
  %v121 = vpack.c.b16 %v112, %v109
  %v122 = vpack.c.b16 %v113, %v110
  %v123 = vpack.c.b16 %v114, %v111
  %v124 = vpack.c.b16 %v118, %v115
  %v125 = vpack.c.b16 %v119, %v116
  %v126 = vpack.c.b16 %v120, %v117
  %vm131 = vcmask 261120
  %v133 = vsel %vm131, %v123, 0
  %v136 = vsel %vm131, %v126, 0
  %138 = vmatpush.bf16.msra.mxu0 %v66
  %139 = vmatpush.bf16.msra.mxu0 %v65
  %140 = vmatpush.bf16.msra.mxu0 %v64
  %141 = vmatpush.bf16.msra.mxu0 %v63
  %142 = vmatpush.bf16.msra.mxu0 %v62
  %143 = vmatpush.bf16.msra.mxu0 %v61
  %144 = vmatpush.bf16.msra.mxu0 %v60
  %145 = vmatpush.bf16.msra.mxu0 %v59
  %146 = vmatmul.bf16.gmra.mxu0 %v121
  %v147 = vpop.f32.mrf.mxu0
  %v148 = vadd.f32 %v84, %v147
  %v149 = vpop.f32.mrf.mxu0
  %v150 = vadd.f32 %v89, %v149
  %151 = vmatmul.bf16.gmra.mxu0 %v124
  %v152 = vpop.f32.mrf.mxu0
  %v153 = vadd.f32 %v94, %v152
  %v154 = vpop.f32.mrf.mxu0
  %v155 = vadd.f32 %v99, %v154
  %156 = vdwg.mxu0
  %157 = vmatpush.bf16.msra.mxu0 %v74
  %158 = vmatpush.bf16.msra.mxu0 %v73
  %159 = vmatpush.bf16.msra.mxu0 %v72
  %160 = vmatpush.bf16.msra.mxu0 %v71
  %161 = vmatpush.bf16.msra.mxu0 %v70
  %162 = vmatpush.bf16.msra.mxu0 %v69
  %163 = vmatpush.bf16.msra.mxu0 %v68
  %164 = vmatpush.bf16.msra.mxu0 %v67
  %165 = vmatmul.bf16.gmra.mxu0 %v122
  %v166 = vpop.f32.mrf.mxu0
  %v167 = vadd.f32 %v148, %v166
  %v168 = vpop.f32.mrf.mxu0
  %v169 = vadd.f32 %v150, %v168
  %170 = vmatmul.bf16.gmra.mxu0 %v125
  %v171 = vpop.f32.mrf.mxu0
  %v172 = vadd.f32 %v153, %v171
  %v173 = vpop.f32.mrf.mxu0
  %v174 = vadd.f32 %v155, %v173
  %175 = vdwg.mxu0
  %176 = vmatpush.bf16.msra.mxu0 0
  %177 = vmatpush.bf16.msra.mxu0 0
  %178 = vmatpush.bf16.msra.mxu0 0
  %179 = vmatpush.bf16.msra.mxu0 0
  %180 = vmatpush.bf16.msra.mxu0 0
  %181 = vmatpush.bf16.msra.mxu0 0
  %182 = vmatpush.bf16.msra.mxu0 %v76
  %183 = vmatpush.bf16.msra.mxu0 %v75
  %184 = vmatmul.bf16.gmra.mxu0 %v133
  %v185 = vpop.f32.mrf.mxu0
  %v186 = vadd.f32 %v167, %v185
  %v187 = vpop.f32.mrf.mxu0
  %v188 = vadd.f32 %v169, %v187
  %189 = vmatmul.bf16.gmra.mxu0 %v136
  %v190 = vpop.f32.mrf.mxu0
  %v191 = vadd.f32 %v172, %v190
  %v192 = vpop.f32.mrf.mxu0
  %v193 = vadd.f32 %v174, %v192
  %194 = vdwg.mxu0
  %195 = vst.msk [vmem:[%s3] sm:$0xff] %vm131, %v186
  %196 = vst.msk [vmem:[%s3 + $0x8] sm:$0xff] %vm131, %v188
  %197 = vst.msk [vmem:[%s3 + $0x10] sm:$0xff] %vm131, %v191
  %198 = vst.msk [vmem:[%s3 + $0x18] sm:$0xff] %vm131, %v193
  // Predicated region
  $region14: #{_forward.25} parent=0 // pred_check
    _
  $region15: #{_forward.25} parent=0 // pred_check_branch
    %200 = sbr.rel (0) target = $region17
  $region16: #{_forward.25} parent=0 // pred_region
    _
  $region17: #{_forward.25} parent=0 // pred_fallthru
    _
  // Predicated region
  $region18: #{_forward.25} parent=0 // pred_check
    _
  $region19: #{_forward.25} parent=0 // pred_check_branch
    %202 = sbr.rel (0) target = $region21
  $region20: #{_forward.25} parent=0 // pred_region
    _
  $region21: #{_forward.25} parent=0 // pred_fallthru
    _

// kernel: _forward.24
$region0: #{_forward.24}
  #allocation0 [shape = 'u32[]', space=smem, size = 0x4, offset = 0x4, fixed_abs, tag = 'smem constant byte address 0x4 - core index']
  #allocation1 [shape = 'u32[72,128]{1,0:T(1,128)}', space=vmem, size = 0x9000, scoped, tag = 'internal scratch']
  %s0 = inlined_call_operand.vmem [shape: bf16[32,288], index: 0, kind: input, shape index: {}]
  %s1 = inlined_call_operand.vmem [shape: f32[288,128], index: 1, kind: input, shape index: {}]
  %s2 = inlined_call_operand.vmem [shape: f32[32,1], index: 2, kind: input, shape index: {}]
  %s3 = inlined_call_operand.vmem [shape: f32[32,128], index: 3, kind: output, shape index: {}]
  %s4 = sld [smem:[#allocation0]]
  $region22: #{_forward.24} parent=0
    _
  %s6 = ssub.s32 1, %s4
  %s7 = scalar_select 0, %s6, %s4
  // Predicated region
  $region2: #{_forward.24} parent=0 // pred_check
    _
  $region3: #{_forward.24} parent=0 // pred_check_branch
    %9 = sbr.rel (0) target = $region5
  $region4: #{_forward.24} parent=0 // pred_region
    _
  $region5: #{_forward.24} parent=0 // pred_fallthru
    _
  // Predicated region
  $region6: #{_forward.24} parent=0 // pred_check
    _
  $region7: #{_forward.24} parent=0 // pred_check_branch
    %11 = sbr.rel (0) target = $region9
  $region8: #{_forward.24} parent=0 // pred_region
    _
  $region9: #{_forward.24} parent=0 // pred_fallthru
    _
  // Predicated region
  $region10: #{_forward.24} parent=0 // pred_check
    _
  $region11: #{_forward.24} parent=0 // pred_check_branch
    %13 = sbr.rel (0) target = $region13
  $region12: #{_forward.24} parent=0 // pred_region
    _
  $region13: #{_forward.24} parent=0 // pred_fallthru
    _
  %v15 = vld [vmem:[%s0] sm:$0xff]
  %v16 = vld [vmem:[%s0 + $0x8] sm:$0xf]
  %v17 = vld [vmem:[%s0 + $0xc] sm:$0xff]
  %v18 = vld [vmem:[%s0 + $0x14] sm:$0xf]
  %v19 = vld [vmem:[%s0 + $0x18] sm:$0xff]
  %v20 = vld [vmem:[%s0 + $0x20] sm:$0xf]
  %v21 = vld [vmem:[%s0 + $0x24] sm:$0xff]
  %v22 = vld [vmem:[%s0 + $0x2c] sm:$0xf]
  %v23 = vld [vmem:[%s1] sm:$0xff]
  %v24 = vld [vmem:[%s1 + $0x8] sm:$0xff]
  %v25 = vld [vmem:[%s1 + $0x10] sm:$0xff]
  %v26 = vld [vmem:[%s1 + $0x18] sm:$0xff]
  %v27 = vld [vmem:[%s1 + $0x20] sm:$0xff]
  %v28 = vld [vmem:[%s1 + $0x28] sm:$0xff]
  %v29 = vld [vmem:[%s1 + $0x30] sm:$0xff]
  %v30 = vld [vmem:[%s1 + $0x38] sm:$0xff]
  %v31 = vld [vmem:[%s1 + $0x40] sm:$0xff]
  %v32 = vld [vmem:[%s1 + $0x48] sm:$0xff]
  %v33 = vld [vmem:[%s1 + $0x50] sm:$0xff]
  %v34 = vld [vmem:[%s1 + $0x58] sm:$0xff]
  %v35 = vld [vmem:[%s1 + $0x60] sm:$0xff]
  %v36 = vld [vmem:[%s1 + $0x68] sm:$0xff]
  %v37 = vld [vmem:[%s1 + $0x70] sm:$0xff]
  %v38 = vld [vmem:[%s1 + $0x78] sm:$0xff]
  %v39 = vld [vmem:[%s1 + $0x80] sm:$0xff]
  %v40 = vld [vmem:[%s1 + $0x88] sm:$0xff]
  %v41 = vld [vmem:[%s1 + $0x90] sm:$0xff]
  %v42 = vld [vmem:[%s1 + $0x98] sm:$0xff]
  %v43 = vld [vmem:[%s1 + $0xa0] sm:$0xff]
  %v44 = vld [vmem:[%s1 + $0xa8] sm:$0xff]
  %v45 = vld [vmem:[%s1 + $0xb0] sm:$0xff]
  %v46 = vld [vmem:[%s1 + $0xb8] sm:$0xff]
  %v47 = vld [vmem:[%s1 + $0xc0] sm:$0xff]
  %v48 = vld [vmem:[%s1 + $0xc8] sm:$0xff]
  %v49 = vld [vmem:[%s1 + $0xd0] sm:$0xff]
  %v50 = vld [vmem:[%s1 + $0xd8] sm:$0xff]
  %v51 = vld [vmem:[%s1 + $0xe0] sm:$0xff]
  %v52 = vld [vmem:[%s1 + $0xe8] sm:$0xff]
  %v53 = vld [vmem:[%s1 + $0xf0] sm:$0xff]
  %v54 = vld [vmem:[%s1 + $0xf8] sm:$0xff]
  %v55 = vld [vmem:[%s1 + $0x100] sm:$0xff]
  %v56 = vld [vmem:[%s1 + $0x108] sm:$0xff]
  %v57 = vld [vmem:[%s1 + $0x110] sm:$0xff]
  %v58 = vld [vmem:[%s1 + $0x118] sm:$0xff]
  %v59 = vpack.c.bf16 %v24, %v23
  %v60 = vpack.c.bf16 %v26, %v25
  %v61 = vpack.c.bf16 %v28, %v27
  %v62 = vpack.c.bf16 %v30, %v29
  %v63 = vpack.c.bf16 %v32, %v31
  %v64 = vpack.c.bf16 %v34, %v33
  %v65 = vpack.c.bf16 %v36, %v35
  %v66 = vpack.c.bf16 %v38, %v37
  %v67 = vpack.c.bf16 %v40, %v39
  %v68 = vpack.c.bf16 %v42, %v41
  %v69 = vpack.c.bf16 %v44, %v43
  %v70 = vpack.c.bf16 %v46, %v45
  %v71 = vpack.c.bf16 %v48, %v47
  %v72 = vpack.c.bf16 %v50, %v49
  %v73 = vpack.c.bf16 %v52, %v51
  %v74 = vpack.c.bf16 %v54, %v53
  %v75 = vpack.c.bf16 %v56, %v55
  %v76 = vpack.c.bf16 %v58, %v57
  %v77 = vld [vmem:[%s2] sm:$0xff]
  %v78 = vld [vmem:[%s2 + $0x8] sm:$0xff]
  %v79 = vld [vmem:[%s2 + $0x10] sm:$0xff]
  %v80 = vld [vmem:[%s2 + $0x18] sm:$0xff]
  %82 = vset.pattern.permute.xlu0 0
  %83 = vperm.xlu0 %82, %v77
  %v84 = vpop.permute.xlu0 %83
  %87 = vset.pattern.permute.xlu0 0
  %88 = vperm.xlu0 %87, %v78
  %v89 = vpop.permute.xlu0 %88
  %92 = vset.pattern.permute.xlu0 0
  %93 = vperm.xlu0 %92, %v79
  %v94 = vpop.permute.xlu0 %93
  %97 = vset.pattern.permute.xlu0 0
  %98 = vperm.xlu0 %97, %v80
  %v99 = vpop.permute.xlu0 %98
  %v109 = vunpack.c.l.b16 %v15
  %v110 = vunpack.c.h.b16 %v15
  %v111 = vunpack.c.l.b16 %v16
  %v112 = vunpack.c.l.b16 %v17
  %v113 = vunpack.c.h.b16 %v17
  %v114 = vunpack.c.l.b16 %v18
  %v115 = vunpack.c.l.b16 %v19
  %v116 = vunpack.c.h.b16 %v19
  %v117 = vunpack.c.l.b16 %v20
  %v118 = vunpack.c.l.b16 %v21
  %v119 = vunpack.c.h.b16 %v21
  %v120 = vunpack.c.l.b16 %v22
  %v121 = vpack.c.b16 %v112, %v109
  %v122 = vpack.c.b16 %v113, %v110
  %v123 = vpack.c.b16 %v114, %v111
  %v124 = vpack.c.b16 %v118, %v115
  %v125 = vpack.c.b16 %v119, %v116
  %v126 = vpack.c.b16 %v120, %v117
  %vm131 = vcmask 261120
  %v133 = vsel %vm131, %v123, 0
  %v136 = vsel %vm131, %v126, 0
  %138 = vmatpush.bf16.msra.mxu0 %v66
  %139 = vmatpush.bf16.msra.mxu0 %v65
  %140 = vmatpush.bf16.msra.mxu0 %v64
  %141 = vmatpush.bf16.msra.mxu0 %v63
  %142 = vmatpush.bf16.msra.mxu0 %v62
  %143 = vmatpush.bf16.msra.mxu0 %v61
  %144 = vmatpush.bf16.msra.mxu0 %v60
  %145 = vmatpush.bf16.msra.mxu0 %v59
  %146 = vmatmul.bf16.gmra.mxu0 %v121
  %v147 = vpop.f32.mrf.mxu0
  %v148 = vadd.f32 %v84, %v147
  %v149 = vpop.f32.mrf.mxu0
  %v150 = vadd.f32 %v89, %v149
  %151 = vmatmul.bf16.gmra.mxu0 %v124
  %v152 = vpop.f32.mrf.mxu0
  %v153 = vadd.f32 %v94, %v152
  %v154 = vpop.f32.mrf.mxu0
  %v155 = vadd.f32 %v99, %v154
  %156 = vdwg.mxu0
  %157 = vmatpush.bf16.msra.mxu0 %v74
  %158 = vmatpush.bf16.msra.mxu0 %v73
  %159 = vmatpush.bf16.msra.mxu0 %v72
  %160 = vmatpush.bf16.msra.mxu0 %v71
  %161 = vmatpush.bf16.msra.mxu0 %v70
  %162 = vmatpush.bf16.msra.mxu0 %v69
  %163 = vmatpush.bf16.msra.mxu0 %v68
  %164 = vmatpush.bf16.msra.mxu0 %v67
  %165 = vmatmul.bf16.gmra.mxu0 %v122
  %v166 = vpop.f32.mrf.mxu0
  %v167 = vadd.f32 %v148, %v166
  %v168 = vpop.f32.mrf.mxu0
  %v169 = vadd.f32 %v150, %v168
  %170 = vmatmul.bf16.gmra.mxu0 %v125
  %v171 = vpop.f32.mrf.mxu0
  %v172 = vadd.f32 %v153, %v171
  %v173 = vpop.f32.mrf.mxu0
  %v174 = vadd.f32 %v155, %v173
  %175 = vdwg.mxu0
  %176 = vmatpush.bf16.msra.mxu0 0
  %177 = vmatpush.bf16.msra.mxu0 0
  %178 = vmatpush.bf16.msra.mxu0 0
  %179 = vmatpush.bf16.msra.mxu0 0
  %180 = vmatpush.bf16.msra.mxu0 0
  %181 = vmatpush.bf16.msra.mxu0 0
  %182 = vmatpush.bf16.msra.mxu0 %v76
  %183 = vmatpush.bf16.msra.mxu0 %v75
  %184 = vmatmul.bf16.gmra.mxu0 %v133
  %v185 = vpop.f32.mrf.mxu0
  %v186 = vadd.f32 %v167, %v185
  %v187 = vpop.f32.mrf.mxu0
  %v188 = vadd.f32 %v169, %v187
  %189 = vmatmul.bf16.gmra.mxu0 %v136
  %v190 = vpop.f32.mrf.mxu0
  %v191 = vadd.f32 %v172, %v190
  %v192 = vpop.f32.mrf.mxu0
  %v193 = vadd.f32 %v174, %v192
  %194 = vdwg.mxu0
  %195 = vst [vmem:[%s3] sm:$0xff] %v186
  %196 = vst [vmem:[%s3 + $0x8] sm:$0xff] %v188
  %197 = vst [vmem:[%s3 + $0x10] sm:$0xff] %v191
  %198 = vst [vmem:[%s3 + $0x18] sm:$0xff] %v193
  // Predicated region
  $region14: #{_forward.24} parent=0 // pred_check
    _
  $region15: #{_forward.24} parent=0 // pred_check_branch
    %200 = sbr.rel (0) target = $region17
  $region16: #{_forward.24} parent=0 // pred_region
    _
  $region17: #{_forward.24} parent=0 // pred_fallthru
    _
  // Predicated region
  $region18: #{_forward.24} parent=0 // pred_check
    _
  $region19: #{_forward.24} parent=0 // pred_check_branch
    %202 = sbr.rel (0) target = $region21
  $region20: #{_forward.24} parent=0 // pred_region
    _
  $region21: #{_forward.24} parent=0 // pred_fallthru
    _

// kernel: _forward.23
$region0: #{_forward.23}
  #allocation0 [shape = 'u32[]', space=smem, size = 0x4, offset = 0x4, fixed_abs, tag = 'smem constant byte address 0x4 - core index']
  #allocation1 [shape = 'u32[72,128]{1,0:T(1,128)}', space=vmem, size = 0x9000, scoped, tag = 'internal scratch']
  %s0 = inlined_call_operand.vmem [shape: bf16[32,288], index: 0, kind: input, shape index: {}]
  %s1 = inlined_call_operand.vmem [shape: f32[288,512], index: 1, kind: input, shape index: {}]
  %s2 = inlined_call_operand.vmem [shape: f32[32,1], index: 2, kind: input, shape index: {}]
  %s3 = inlined_call_operand.vmem [shape: f32[32,512], index: 3, kind: output, shape index: {}]
  %s4 = sld [smem:[#allocation0]]
  $region87: #{_forward.23} parent=0
    _
  %s6 = ssub.s32 1, %s4
  %s7 = scalar_select 0, %s6, %s4
  $region1: #{_forward.23} parent=0
    #allocation2 [shape = 'u8[589824]{0}', space=vmem, size = 0x90000, scoped, tag = 'input window, operand 1']
    #allocation3 [shape = 'u8[65536]{0}', space=vmem, size = 0x10000, scoped, tag = 'output window, operand 0']
    loop: start=0, step=1, limit=4
    $region2: #{_forward.23} parent=1 // loop_pre_header
      _
    $region3: #{_forward.23} parent=1 // loop_header
      %s9 = sphi 0, %s13
      %p10 = scmp.ge.s32.totalorder %s9, 4
      %s17 = sphi 0, %s17
      %s19 = sphi 0, %s17
      %s20 = sphi 0, %s19
      %s34 = sphi 0, %s20
      %s40 = sphi 0, %s42
      %s43 = sphi 0, %s40
      %s44 = sphi 0, %s43
      %s60 = sphi 0, %s44
      %s64 = sphi 0, %s64
      %s66 = sphi 0, %s64
      %s67 = sphi 0, %s66
      %s81 = sphi 0, %s67
      %s87 = sphi 0, %s89
      %s90 = sphi 0, %s87
      %s91 = sphi 0, %s90
      %s107 = sphi 0, %s91
    $region4: #{_forward.23} parent=1 // loop_header_branch
      %12 = sbr.rel (%p10) target = $region8
    $region5: #{_forward.23} parent=1 // loop_body
      %s14 = ssub.s32 %s9, 1
      %s15 = ssub.s32 %s9, 2
      %s16 = sadd.s32 %s9, 1
      %s18 = sadd.s32 %s17, 1
      %p21 = scmp.eq.s32.totalorder %s9, 1
      %p22 = scmp.ne.s32.totalorder %s17, %s19
      %p23 = scmp.eq.s32.totalorder %s9, 0
      %p24 = por %p22, %p23
      %p25 = scmp.ne.s32.totalorder %s17, %s19
      %p26 = scmp.eq.s32.totalorder %s14, 1
      %p27 = por %p25, %p26
      %p28 = scmp.ne.s32.totalorder %s19, %s20
      %p29 = scmp.eq.s32.totalorder %s14, 0
      %p30 = por %p28, %p29
      %p31 = scmp.ne.s32.totalorder %s19, %s20
      %p32 = scmp.eq.s32.totalorder %s15, 1
      %p33 = por %p31, %p32
      %p35 = scmp.ne.s32.totalorder %s20, %s34
      %p36 = scmp.eq.s32.totalorder %s15, 0
      %p37 = por %p35, %p36
      %s38 = ssub.s32 %s9, %s16
      %p39 = scmp.eq.s32.totalorder %s38, 0
      %s41 = sadd.s32 %s40, 1
      %s42 = scalar_select %p39, %s40, %s41
      %p45 = pneg %p39
      %p46 = scmp.eq.s32.totalorder %s9, 1
      %p47 = por %p45, %p46
      %p48 = scmp.ne.s32.totalorder %s40, %s43
      %p49 = scmp.eq.s32.totalorder %s9, 0
      %p50 = por %p48, %p49
      %p51 = scmp.ne.s32.totalorder %s40, %s43
      %p52 = scmp.eq.s32.totalorder %s14, 1
      %p53 = por %p51, %p52
      %p54 = scmp.ne.s32.totalorder %s43, %s44
      %p55 = scmp.eq.s32.totalorder %s14, 0
      %p56 = por %p54, %p55
      %p57 = scmp.ne.s32.totalorder %s43, %s44
      %p58 = scmp.eq.s32.totalorder %s15, 1
      %p59 = por %p57, %p58
      %p61 = scmp.ne.s32.totalorder %s44, %s60
      %p62 = scmp.eq.s32.totalorder %s15, 0
      %p63 = por %p61, %p62
      %s65 = sadd.s32 %s64, 1
      %p68 = scmp.eq.s32.totalorder %s9, 1
      %p69 = scmp.ne.s32.totalorder %s64, %s66
      %p70 = scmp.eq.s32.totalorder %s9, 0
      %p71 = por %p69, %p70
      %p72 = scmp.ne.s32.totalorder %s64, %s66
      %p73 = scmp.eq.s32.totalorder %s14, 1
      %p74 = por %p72, %p73
      %p75 = scmp.ne.s32.totalorder %s66, %s67
      %p76 = scmp.eq.s32.totalorder %s14, 0
      %p77 = por %p75, %p76
      %p78 = scmp.ne.s32.totalorder %s66, %s67
      %p79 = scmp.eq.s32.totalorder %s15, 1
      %p80 = por %p78, %p79
      %p82 = scmp.ne.s32.totalorder %s67, %s81
      %p83 = scmp.eq.s32.totalorder %s15, 0
      %p84 = por %p82, %p83
      %s85 = ssub.s32 %s9, %s16
      %p86 = scmp.eq.s32.totalorder %s85, 0
      %s88 = sadd.s32 %s87, 1
      %s89 = scalar_select %p86, %s87, %s88
      %p92 = pneg %p86
      %p93 = scmp.eq.s32.totalorder %s9, 1
      %p94 = por %p92, %p93
      %p95 = scmp.ne.s32.totalorder %s87, %s90
      %p96 = scmp.eq.s32.totalorder %s9, 0
      %p97 = por %p95, %p96
      %p98 = scmp.ne.s32.totalorder %s87, %s90
      %p99 = scmp.eq.s32.totalorder %s14, 1
      %p100 = por %p98, %p99
      %p101 = scmp.ne.s32.totalorder %s90, %s91
      %p102 = scmp.eq.s32.totalorder %s14, 0
      %p103 = por %p101, %p102
      %p104 = scmp.ne.s32.totalorder %s90, %s91
      %p105 = scmp.eq.s32.totalorder %s15, 1
      %p106 = por %p104, %p105
      %p108 = scmp.ne.s32.totalorder %s91, %s107
      %p109 = scmp.eq.s32.totalorder %s15, 0
      %p110 = por %p108, %p109
      %p111 = scmp.le.s32.totalorder 1, %s9
      %p112 = scmp.lt.s32.totalorder %s9, 3
      %p113 = pnand %p111, %p112
      %p114 = pneg %p113
      // Predicated region
      $region9: #{_forward.23} parent=5 // pred_check
        _
      $region10: #{_forward.23} parent=5 // pred_check_branch
        %116 = sbr.rel (%p113) target = $region12
      $region11: #{_forward.23} parent=5 // pred_region
        %s117 = ssub.s32 %s9, 1
        // Predicated region
        $region13: #{_forward.23} parent=11 // pred_check
          %p118 = pneg %p30
        $region14: #{_forward.23} parent=11 // pred_check_branch
          %120 = sbr.rel (%p118) target = $region16
        $region15: #{_forward.23} parent=11 // pred_region
          _
        $region16: #{_forward.23} parent=11 // pred_fallthru
          _
        // Predicated region
        $region17: #{_forward.23} parent=11 // pred_check
          %p121 = pneg %p77
        $region18: #{_forward.23} parent=11 // pred_check_branch
          %123 = sbr.rel (%p121) target = $region20
        $region19: #{_forward.23} parent=11 // pred_region
          _
        $region20: #{_forward.23} parent=11 // pred_fallthru
          _
      $region12: #{_forward.23} parent=5 // pred_fallthru
        _
      %p124 = scmp.lt.s32.totalorder %s9, 2
      // Predicated region
      $region21: #{_forward.23} parent=5 // pred_check
        %p125 = pneg %p124
      $region22: #{_forward.23} parent=5 // pred_check_branch
        %127 = sbr.rel (%p125) target = $region24
      $region23: #{_forward.23} parent=5 // pred_region
        // Predicated region
        $region25: #{_forward.23} parent=23 // pred_check
          %p128 = pneg %p50
        $region26: #{_forward.23} parent=23 // pred_check_branch
          %130 = sbr.rel (%p128) target = $region28
        $region27: #{_forward.23} parent=23 // pred_region
          %s131 = sand.u32 %s40, 1
          %s132 = sand.u32 %s40, 1
          %s133 = smul.addr %s132, 576
          %s134 = scalar_lea.vmem [#allocation2], %s133
          %s135 = smul.u32 2, %s9
          %s136 = smul.addr %s135, 8
          %s137 = scalar_lea.vmem %s1, %s136
          // Predicated region
          $region29: #{_forward.23} parent=27 // pred_check
            _
          $region30: #{_forward.23} parent=27 // pred_check_branch
            %139 = sbr.rel (0) target = $region32
          $region31: #{_forward.23} parent=27 // pred_region
            // Predicated region
            $region33: #{_forward.23} parent=31 // pred_check
              _
            $region34: #{_forward.23} parent=31 // pred_check_branch
              %141 = sbr.rel (0) target = $region36
            $region35: #{_forward.23} parent=31 // pred_region
              loop: start=0, step=1, limit=1
              $region37: #{_forward.23} parent=35 // loop_pre_header
                _
              $region38: #{_forward.23} parent=35 // loop_header
                %s143 = sphi 0, %s147
                %p144 = scmp.ge.s32.totalorder %s143, 1
                %s148 = sphi %s137, %s137
                %s149 = sphi %s134, %s134
              $region39: #{_forward.23} parent=35 // loop_header_branch
                %146 = sbr.rel (%p144) target = $region43
              $region40: #{_forward.23} parent=35 // loop_body
                %v150 = vld [vmem:[%s148] sm:$0xff]
                %151 = vst [vmem:[%s149] sm:$0xff] %v150
                %v152 = vld [vmem:[%s148 + $0x8] sm:$0xff]
                %153 = vst [vmem:[%s149 + $0x8] sm:$0xff] %v152
                %v154 = vld [vmem:[%s148 + $0x20] sm:$0xff]
                %155 = vst [vmem:[%s149 + $0x10] sm:$0xff] %v154
                %v156 = vld [vmem:[%s148 + $0x28] sm:$0xff]
                %157 = vst [vmem:[%s149 + $0x18] sm:$0xff] %v156
                %v158 = vld [vmem:[%s148 + $0x40] sm:$0xff]
                %159 = vst [vmem:[%s149 + $0x20] sm:$0xff] %v158
                %v160 = vld [vmem:[%s148 + $0x48] sm:$0xff]
                %161 = vst [vmem:[%s149 + $0x28] sm:$0xff] %v160
                %v162 = vld [vmem:[%s148 + $0x60] sm:$0xff]
                %163 = vst [vmem:[%s149 + $0x30] sm:$0xff] %v162
                %v164 = vld [vmem:[%s148 + $0x68] sm:$0xff]
                %165 = vst [vmem:[%s149 + $0x38] sm:$0xff] %v164
                %v166 = vld [vmem:[%s148 + $0x80] sm:$0xff]
                %167 = vst [vmem:[%s149 + $0x40] sm:$0xff] %v166
                %v168 = vld [vmem:[%s148 + $0x88] sm:$0xff]
                %169 = vst [vmem:[%s149 + $0x48] sm:$0xff] %v168
                %v170 = vld [vmem:[%s148 + $0xa0] sm:$0xff]
                %171 = vst [vmem:[%s149 + $0x50] sm:$0xff] %v170
                %v172 = vld [vmem:[%s148 + $0xa8] sm:$0xff]
                %173 = vst [vmem:[%s149 + $0x58] sm:$0xff] %v172
                %v174 = vld [vmem:[%s148 + $0xc0] sm:$0xff]
                %175 = vst [vmem:[%s149 + $0x60] sm:$0xff] %v174
                %v176 = vld [vmem:[%s148 + $0xc8] sm:$0xff]
                %177 = vst [vmem:[%s149 + $0x68] sm:$0xff] %v176
                %v178 = vld [vmem:[%s148 + $0xe0] sm:$0xff]
                %179 = vst [vmem:[%s149 + $0x70] sm:$0xff] %v178
                %v180 = vld [vmem:[%s148 + $0xe8] sm:$0xff]
                %181 = vst [vmem:[%s149 + $0x78] sm:$0xff] %v180
                %v182 = vld [vmem:[%s148 + $0x100] sm:$0xff]
                %183 = vst [vmem:[%s149 + $0x80] sm:$0xff] %v182
                %v184 = vld [vmem:[%s148 + $0x108] sm:$0xff]
                %185 = vst [vmem:[%s149 + $0x88] sm:$0xff] %v184
                %v186 = vld [vmem:[%s148 + $0x120] sm:$0xff]
                %187 = vst [vmem:[%s149 + $0x90] sm:$0xff] %v186
                %v188 = vld [vmem:[%s148 + $0x128] sm:$0xff]
                %189 = vst [vmem:[%s149 + $0x98] sm:$0xff] %v188
                %v190 = vld [vmem:[%s148 + $0x140] sm:$0xff]
                %191 = vst [vmem:[%s149 + $0xa0] sm:$0xff] %v190
                %v192 = vld [vmem:[%s148 + $0x148] sm:$0xff]
                %193 = vst [vmem:[%s149 + $0xa8] sm:$0xff] %v192
                %v194 = vld [vmem:[%s148 + $0x160] sm:$0xff]
                %195 = vst [vmem:[%s149 + $0xb0] sm:$0xff] %v194
                %v196 = vld [vmem:[%s148 + $0x168] sm:$0xff]
                %197 = vst [vmem:[%s149 + $0xb8] sm:$0xff] %v196
                %v198 = vld [vmem:[%s148 + $0x180] sm:$0xff]
                %199 = vst [vmem:[%s149 + $0xc0] sm:$0xff] %v198
                %v200 = vld [vmem:[%s148 + $0x188] sm:$0xff]
                %201 = vst [vmem:[%s149 + $0xc8] sm:$0xff] %v200
                %v202 = vld [vmem:[%s148 + $0x1a0] sm:$0xff]
                %203 = vst [vmem:[%s149 + $0xd0] sm:$0xff] %v202
                %v204 = vld [vmem:[%s148 + $0x1a8] sm:$0xff]
                %205 = vst [vmem:[%s149 + $0xd8] sm:$0xff] %v204
                %v206 = vld [vmem:[%s148 + $0x1c0] sm:$0xff]
                %207 = vst [vmem:[%s149 + $0xe0] sm:$0xff] %v206
                %v208 = vld [vmem:[%s148 + $0x1c8] sm:$0xff]
                %209 = vst [vmem:[%s149 + $0xe8] sm:$0xff] %v208
                %v210 = vld [vmem:[%s148 + $0x1e0] sm:$0xff]
                %211 = vst [vmem:[%s149 + $0xf0] sm:$0xff] %v210
                %v212 = vld [vmem:[%s148 + $0x1e8] sm:$0xff]
                %213 = vst [vmem:[%s149 + $0xf8] sm:$0xff] %v212
                %v214 = vld [vmem:[%s148 + $0x200] sm:$0xff]
                %215 = vst [vmem:[%s149 + $0x100] sm:$0xff] %v214
                %v216 = vld [vmem:[%s148 + $0x208] sm:$0xff]
                %217 = vst [vmem:[%s149 + $0x108] sm:$0xff] %v216
                %v218 = vld [vmem:[%s148 + $0x220] sm:$0xff]
                %219 = vst [vmem:[%s149 + $0x110] sm:$0xff] %v218
                %v220 = vld [vmem:[%s148 + $0x228] sm:$0xff]
                %221 = vst [vmem:[%s149 + $0x118] sm:$0xff] %v220
                %v222 = vld [vmem:[%s148 + $0x240] sm:$0xff]
                %223 = vst [vmem:[%s149 + $0x120] sm:$0xff] %v222
                %v224 = vld [vmem:[%s148 + $0x248] sm:$0xff]
                %225 = vst [vmem:[%s149 + $0x128] sm:$0xff] %v224
                %v226 = vld [vmem:[%s148 + $0x260] sm:$0xff]
                %227 = vst [vmem:[%s149 + $0x130] sm:$0xff] %v226
                %v228 = vld [vmem:[%s148 + $0x268] sm:$0xff]
                %229 = vst [vmem:[%s149 + $0x138] sm:$0xff] %v228
                %v230 = vld [vmem:[%s148 + $0x280] sm:$0xff]
                %231 = vst [vmem:[%s149 + $0x140] sm:$0xff] %v230
                %v232 = vld [vmem:[%s148 + $0x288] sm:$0xff]
                %233 = vst [vmem:[%s149 + $0x148] sm:$0xff] %v232
                %v234 = vld [vmem:[%s148 + $0x2a0] sm:$0xff]
                %235 = vst [vmem:[%s149 + $0x150] sm:$0xff] %v234
                %v236 = vld [vmem:[%s148 + $0x2a8] sm:$0xff]
                %237 = vst [vmem:[%s149 + $0x158] sm:$0xff] %v236
                %v238 = vld [vmem:[%s148 + $0x2c0] sm:$0xff]
                %239 = vst [vmem:[%s149 + $0x160] sm:$0xff] %v238
                %v240 = vld [vmem:[%s148 + $0x2c8] sm:$0xff]
                %241 = vst [vmem:[%s149 + $0x168] sm:$0xff] %v240
                %v242 = vld [vmem:[%s148 + $0x2e0] sm:$0xff]
                %243 = vst [vmem:[%s149 + $0x170] sm:$0xff] %v242
                %v244 = vld [vmem:[%s148 + $0x2e8] sm:$0xff]
                %245 = vst [vmem:[%s149 + $0x178] sm:$0xff] %v244
                %v246 = vld [vmem:[%s148 + $0x300] sm:$0xff]
                %247 = vst [vmem:[%s149 + $0x180] sm:$0xff] %v246
                %v248 = vld [vmem:[%s148 + $0x308] sm:$0xff]
                %249 = vst [vmem:[%s149 + $0x188] sm:$0xff] %v248
                %v250 = vld [vmem:[%s148 + $0x320] sm:$0xff]
                %251 = vst [vmem:[%s149 + $0x190] sm:$0xff] %v250
                %v252 = vld [vmem:[%s148 + $0x328] sm:$0xff]
                %253 = vst [vmem:[%s149 + $0x198] sm:$0xff] %v252
                %v254 = vld [vmem:[%s148 + $0x340] sm:$0xff]
                %255 = vst [vmem:[%s149 + $0x1a0] sm:$0xff] %v254
                %v256 = vld [vmem:[%s148 + $0x348] sm:$0xff]
                %257 = vst [vmem:[%s149 + $0x1a8] sm:$0xff] %v256
                %v258 = vld [vmem:[%s148 + $0x360] sm:$0xff]
                %259 = vst [vmem:[%s149 + $0x1b0] sm:$0xff] %v258
                %v260 = vld [vmem:[%s148 + $0x368] sm:$0xff]
                %261 = vst [vmem:[%s149 + $0x1b8] sm:$0xff] %v260
                %v262 = vld [vmem:[%s148 + $0x380] sm:$0xff]
                %263 = vst [vmem:[%s149 + $0x1c0] sm:$0xff] %v262
                %v264 = vld [vmem:[%s148 + $0x388] sm:$0xff]
                %265 = vst [vmem:[%s149 + $0x1c8] sm:$0xff] %v264
                %v266 = vld [vmem:[%s148 + $0x3a0] sm:$0xff]
                %267 = vst [vmem:[%s149 + $0x1d0] sm:$0xff] %v266
                %v268 = vld [vmem:[%s148 + $0x3a8] sm:$0xff]
                %269 = vst [vmem:[%s149 + $0x1d8] sm:$0xff] %v268
                %v270 = vld [vmem:[%s148 + $0x3c0] sm:$0xff]
                %271 = vst [vmem:[%s149 + $0x1e0] sm:$0xff] %v270
                %v272 = vld [vmem:[%s148 + $0x3c8] sm:$0xff]
                %273 = vst [vmem:[%s149 + $0x1e8] sm:$0xff] %v272
                %v274 = vld [vmem:[%s148 + $0x3e0] sm:$0xff]
                %275 = vst [vmem:[%s149 + $0x1f0] sm:$0xff] %v274
                %v276 = vld [vmem:[%s148 + $0x3e8] sm:$0xff]
                %277 = vst [vmem:[%s149 + $0x1f8] sm:$0xff] %v276
                %v278 = vld [vmem:[%s148 + $0x400] sm:$0xff]
                %279 = vst [vmem:[%s149 + $0x200] sm:$0xff] %v278
                %v280 = vld [vmem:[%s148 + $0x408] sm:$0xff]
                %281 = vst [vmem:[%s149 + $0x208] sm:$0xff] %v280
                %v282 = vld [vmem:[%s148 + $0x420] sm:$0xff]
                %283 = vst [vmem:[%s149 + $0x210] sm:$0xff] %v282
                %v284 = vld [vmem:[%s148 + $0x428] sm:$0xff]
                %285 = vst [vmem:[%s149 + $0x218] sm:$0xff] %v284
                %v286 = vld [vmem:[%s148 + $0x440] sm:$0xff]
                %287 = vst [vmem:[%s149 + $0x220] sm:$0xff] %v286
                %v288 = vld [vmem:[%s148 + $0x448] sm:$0xff]
                %289 = vst [vmem:[%s149 + $0x228] sm:$0xff] %v288
                %v290 = vld [vmem:[%s148 + $0x460] sm:$0xff]
                %291 = vst [vmem:[%s149 + $0x230] sm:$0xff] %v290
                %v292 = vld [vmem:[%s148 + $0x468] sm:$0xff]
                %293 = vst [vmem:[%s149 + $0x238] sm:$0xff] %v292
              $region41: #{_forward.23} parent=35 // loop_footer
                %s147 = sadd.s32 1, %s143
              $region42: #{_forward.23} parent=35 // loop_footer_branch
                %142 = sbr.rel target = $region38
              $region43: #{_forward.23} parent=35 // loop_exit
                _
            $region36: #{_forward.23} parent=31 // pred_fallthru
              _
            // Predicated region
            $region44: #{_forward.23} parent=31 // pred_check
              _
            $region45: #{_forward.23} parent=31 // pred_check_branch
              %295 = sbr.rel target = $region47
            $region46: #{_forward.23} parent=31 // pred_region
              _
            $region47: #{_forward.23} parent=31 // pred_fallthru
              _
          $region32: #{_forward.23} parent=27 // pred_fallthru
            _
          %296 = vnop
        $region28: #{_forward.23} parent=23 // pred_fallthru
          _
      $region24: #{_forward.23} parent=5 // pred_fallthru
        _
      %p297 = scmp.le.s32.totalorder 1, %s9
      %p298 = scmp.lt.s32.totalorder %s9, 3
      %p299 = pnand %p297, %p298
      %p300 = pneg %p299
      // Predicated region
      $region48: #{_forward.23} parent=5 // pred_check
        _
      $region49: #{_forward.23} parent=5 // pred_check_branch
        %302 = sbr.rel (%p299) target = $region51
      $region50: #{_forward.23} parent=5 // pred_region
        %s303 = ssub.s32 %s9, 1
        %s304 = sand.u32 %s43, 1
        %s305 = sand.u32 %s43, 1
        %s306 = smul.addr %s305, 576
        %s307 = scalar_lea.vmem [#allocation2], %s306
        // Predicated region
        $region52: #{_forward.23} parent=50 // pred_check
          %p308 = pneg %p56
        $region53: #{_forward.23} parent=50 // pred_check_branch
          %310 = sbr.rel (%p308) target = $region55
        $region54: #{_forward.23} parent=50 // pred_region
          _
        $region55: #{_forward.23} parent=50 // pred_fallthru
          _
        %p311 = pneg %p30
        %p312 = pneg %p27
        %s313 = sand.u32 %s43, 1
        %s314 = sand.u32 %s43, 1
        %s315 = smul.addr %s314, 576
        %s316 = scalar_lea.vmem [#allocation2], %s315
        %p317 = pneg %p56
        %p318 = pneg %p53
        %p319 = pneg %p77
        %p320 = pneg %p74
        %p321 = pneg %p103
        %p322 = pneg %p100
        %s323 = sand.u32 %s90, 1
        %s324 = sand.u32 %s90, 1
        %s325 = smul.addr %s324, 64
        %s326 = scalar_lea.vmem [#allocation3], %s325
        %s327 = smul.u32 2, %s14
        %s328 = smul.u32 2, %s14
        %v330 = vld [vmem:[%s0] sm:$0xff]
        %v331 = vld [vmem:[%s0 + $0x8] sm:$0xf]
        %v332 = vld [vmem:[%s0 + $0xc] sm:$0xff]
        %v333 = vld [vmem:[%s0 + $0x14] sm:$0xf]
        %v334 = vld [vmem:[%s0 + $0x18] sm:$0xff]
        %v335 = vld [vmem:[%s0 + $0x20] sm:$0xf]
        %v336 = vld [vmem:[%s0 + $0x24] sm:$0xff]
        %v337 = vld [vmem:[%s0 + $0x2c] sm:$0xf]
        %v338 = vld [vmem:[%s307] sm:$0xff]
        %v339 = vld [vmem:[%s307 + $0x8] sm:$0xff]
        %v340 = vld [vmem:[%s307 + $0x10] sm:$0xff]
        %v341 = vld [vmem:[%s307 + $0x18] sm:$0xff]
        %v342 = vld [vmem:[%s307 + $0x20] sm:$0xff]
        %v343 = vld [vmem:[%s307 + $0x28] sm:$0xff]
        %v344 = vld [vmem:[%s307 + $0x30] sm:$0xff]
        %v345 = vld [vmem:[%s307 + $0x38] sm:$0xff]
        %v346 = vld [vmem:[%s307 + $0x40] sm:$0xff]
        %v347 = vld [vmem:[%s307 + $0x48] sm:$0xff]
        %v348 = vld [vmem:[%s307 + $0x50] sm:$0xff]
        %v349 = vld [vmem:[%s307 + $0x58] sm:$0xff]
        %v350 = vld [vmem:[%s307 + $0x60] sm:$0xff]
        %v351 = vld [vmem:[%s307 + $0x68] sm:$0xff]
        %v352 = vld [vmem:[%s307 + $0x70] sm:$0xff]
        %v353 = vld [vmem:[%s307 + $0x78] sm:$0xff]
        %v354 = vld [vmem:[%s307 + $0x80] sm:$0xff]
        %v355 = vld [vmem:[%s307 + $0x88] sm:$0xff]
        %v356 = vld [vmem:[%s307 + $0x90] sm:$0xff]
        %v357 = vld [vmem:[%s307 + $0x98] sm:$0xff]
        %v358 = vld [vmem:[%s307 + $0xa0] sm:$0xff]
        %v359 = vld [vmem:[%s307 + $0xa8] sm:$0xff]
        %v360 = vld [vmem:[%s307 + $0xb0] sm:$0xff]
        %v361 = vld [vmem:[%s307 + $0xb8] sm:$0xff]
        %v362 = vld [vmem:[%s307 + $0xc0] sm:$0xff]
        %v363 = vld [vmem:[%s307 + $0xc8] sm:$0xff]
        %v364 = vld [vmem:[%s307 + $0xd0] sm:$0xff]
        %v365 = vld [vmem:[%s307 + $0xd8] sm:$0xff]
        %v366 = vld [vmem:[%s307 + $0xe0] sm:$0xff]
        %v367 = vld [vmem:[%s307 + $0xe8] sm:$0xff]
        %v368 = vld [vmem:[%s307 + $0xf0] sm:$0xff]
        %v369 = vld [vmem:[%s307 + $0xf8] sm:$0xff]
        %v370 = vld [vmem:[%s307 + $0x100] sm:$0xff]
        %v371 = vld [vmem:[%s307 + $0x108] sm:$0xff]
        %v372 = vld [vmem:[%s307 + $0x110] sm:$0xff]
        %v373 = vld [vmem:[%s307 + $0x118] sm:$0xff]
        %v374 = vld [vmem:[%s307 + $0x120] sm:$0xff]
        %v375 = vld [vmem:[%s307 + $0x128] sm:$0xff]
        %v376 = vld [vmem:[%s307 + $0x130] sm:$0xff]
        %v377 = vld [vmem:[%s307 + $0x138] sm:$0xff]
        %v378 = vld [vmem:[%s307 + $0x140] sm:$0xff]
        %v379 = vld [vmem:[%s307 + $0x148] sm:$0xff]
        %v380 = vld [vmem:[%s307 + $0x150] sm:$0xff]
        %v381 = vld [vmem:[%s307 + $0x158] sm:$0xff]
        %v382 = vld [vmem:[%s307 + $0x160] sm:$0xff]
        %v383 = vld [vmem:[%s307 + $0x168] sm:$0xff]
        %v384 = vld [vmem:[%s307 + $0x170] sm:$0xff]
        %v385 = vld [vmem:[%s307 + $0x178] sm:$0xff]
        %v386 = vld [vmem:[%s307 + $0x180] sm:$0xff]
        %v387 = vld [vmem:[%s307 + $0x188] sm:$0xff]
        %v388 = vld [vmem:[%s307 + $0x190] sm:$0xff]
        %v389 = vld [vmem:[%s307 + $0x198] sm:$0xff]
        %v390 = vld [vmem:[%s307 + $0x1a0] sm:$0xff]
        %v391 = vld [vmem:[%s307 + $0x1a8] sm:$0xff]
        %v392 = vld [vmem:[%s307 + $0x1b0] sm:$0xff]
        %v393 = vld [vmem:[%s307 + $0x1b8] sm:$0xff]
        %v394 = vld [vmem:[%s307 + $0x1c0] sm:$0xff]
        %v395 = vld [vmem:[%s307 + $0x1c8] sm:$0xff]
        %v396 = vld [vmem:[%s307 + $0x1d0] sm:$0xff]
        %v397 = vld [vmem:[%s307 + $0x1d8] sm:$0xff]
        %v398 = vld [vmem:[%s307 + $0x1e0] sm:$0xff]
        %v399 = vld [vmem:[%s307 + $0x1e8] sm:$0xff]
        %v400 = vld [vmem:[%s307 + $0x1f0] sm:$0xff]
        %v401 = vld [vmem:[%s307 + $0x1f8] sm:$0xff]
        %v402 = vld [vmem:[%s307 + $0x200] sm:$0xff]
        %v403 = vld [vmem:[%s307 + $0x208] sm:$0xff]
        %v404 = vld [vmem:[%s307 + $0x210] sm:$0xff]
        %v405 = vld [vmem:[%s307 + $0x218] sm:$0xff]
        %v406 = vld [vmem:[%s307 + $0x220] sm:$0xff]
        %v407 = vld [vmem:[%s307 + $0x228] sm:$0xff]
        %v408 = vld [vmem:[%s307 + $0x230] sm:$0xff]
        %v409 = vld [vmem:[%s307 + $0x238] sm:$0xff]
        %v410 = vpack.c.bf16 %v340, %v338
        %v411 = vpack.c.bf16 %v341, %v339
        %v412 = vpack.c.bf16 %v344, %v342
        %v413 = vpack.c.bf16 %v345, %v343
        %v414 = vpack.c.bf16 %v348, %v346
        %v415 = vpack.c.bf16 %v349, %v347
        %v416 = vpack.c.bf16 %v352, %v350
        %v417 = vpack.c.bf16 %v353, %v351
        %v418 = vpack.c.bf16 %v356, %v354
        %v419 = vpack.c.bf16 %v357, %v355
        %v420 = vpack.c.bf16 %v360, %v358
        %v421 = vpack.c.bf16 %v361, %v359
        %v422 = vpack.c.bf16 %v364, %v362
        %v423 = vpack.c.bf16 %v365, %v363
        %v424 = vpack.c.bf16 %v368, %v366
        %v425 = vpack.c.bf16 %v369, %v367
        %v426 = vpack.c.bf16 %v372, %v370
        %v427 = vpack.c.bf16 %v373, %v371
        %v428 = vpack.c.bf16 %v376, %v374
        %v429 = vpack.c.bf16 %v377, %v375
        %v430 = vpack.c.bf16 %v380, %v378
        %v431 = vpack.c.bf16 %v381, %v379
        %v432 = vpack.c.bf16 %v384, %v382
        %v433 = vpack.c.bf16 %v385, %v383
        %v434 = vpack.c.bf16 %v388, %v386
        %v435 = vpack.c.bf16 %v389, %v387
        %v436 = vpack.c.bf16 %v392, %v390
        %v437 = vpack.c.bf16 %v393, %v391
        %v438 = vpack.c.bf16 %v396, %v394
        %v439 = vpack.c.bf16 %v397, %v395
        %v440 = vpack.c.bf16 %v400, %v398
        %v441 = vpack.c.bf16 %v401, %v399
        %v442 = vpack.c.bf16 %v404, %v402
        %v443 = vpack.c.bf16 %v405, %v403
        %v444 = vpack.c.bf16 %v408, %v406
        %v445 = vpack.c.bf16 %v409, %v407
        %v446 = vld [vmem:[%s2] sm:$0xff]
        %v447 = vld [vmem:[%s2 + $0x8] sm:$0xff]
        %v448 = vld [vmem:[%s2 + $0x10] sm:$0xff]
        %v449 = vld [vmem:[%s2 + $0x18] sm:$0xff]
        %451 = vset.pattern.permute.xlu0 0
        %452 = vperm.xlu0 %451, %v446
        %v453 = vpop.permute.xlu0 %452
        %456 = vset.pattern.permute.xlu0 0
        %457 = vperm.xlu0 %456, %v447
        %v458 = vpop.permute.xlu0 %457
        %461 = vset.pattern.permute.xlu0 0
        %462 = vperm.xlu0 %461, %v448
        %v463 = vpop.permute.xlu0 %462
        %466 = vset.pattern.permute.xlu0 0
        %467 = vperm.xlu0 %466, %v449
        %v468 = vpop.permute.xlu0 %467
        %v478 = vunpack.c.l.b16 %v330
        %v479 = vunpack.c.h.b16 %v330
        %v480 = vunpack.c.l.b16 %v331
        %v481 = vunpack.c.l.b16 %v332
        %v482 = vunpack.c.h.b16 %v332
        %v483 = vunpack.c.l.b16 %v333
        %v484 = vunpack.c.l.b16 %v334
        %v485 = vunpack.c.h.b16 %v334
        %v486 = vunpack.c.l.b16 %v335
        %v487 = vunpack.c.l.b16 %v336
        %v488 = vunpack.c.h.b16 %v336
        %v489 = vunpack.c.l.b16 %v337
        %v490 = vpack.c.b16 %v481, %v478
        %v491 = vpack.c.b16 %v482, %v479
        %v492 = vpack.c.b16 %v483, %v480
        %v493 = vpack.c.b16 %v487, %v484
        %v494 = vpack.c.b16 %v488, %v485
        %v495 = vpack.c.b16 %v489, %v486
        %vm500 = vcmask 261120
        %v502 = vsel %vm500, %v492, 0
        %v505 = vsel %vm500, %v495, 0
        %507 = vmatpush.bf16.msra.mxu0 %v424
        %508 = vmatpush.bf16.msra.mxu0 %v422
        %509 = vmatpush.bf16.msra.mxu0 %v420
        %510 = vmatpush.bf16.msra.mxu0 %v418
        %511 = vmatpush.bf16.msra.mxu0 %v416
        %512 = vmatpush.bf16.msra.mxu0 %v414
        %513 = vmatpush.bf16.msra.mxu0 %v412
        %514 = vmatpush.bf16.msra.mxu0 %v410
        %515 = vmatmul.bf16.gmra.mxu0 %v490
        %v516 = vpop.f32.mrf.mxu0
        %v517 = vadd.f32 %v453, %v516
        %v518 = vpop.f32.mrf.mxu0
        %v519 = vadd.f32 %v458, %v518
        %520 = vmatmul.bf16.gmra.mxu0 %v493
        %v521 = vpop.f32.mrf.mxu0
        %v522 = vadd.f32 %v463, %v521
        %v523 = vpop.f32.mrf.mxu0
        %v524 = vadd.f32 %v468, %v523
        %525 = vdwg.mxu0
        %526 = vmatpush.bf16.msra.mxu0 %v440
        %527 = vmatpush.bf16.msra.mxu0 %v438
        %528 = vmatpush.bf16.msra.mxu0 %v436
        %529 = vmatpush.bf16.msra.mxu0 %v434
        %530 = vmatpush.bf16.msra.mxu0 %v432
        %531 = vmatpush.bf16.msra.mxu0 %v430
        %532 = vmatpush.bf16.msra.mxu0 %v428
        %533 = vmatpush.bf16.msra.mxu0 %v426
        %534 = vmatmul.bf16.gmra.mxu0 %v491
        %v535 = vpop.f32.mrf.mxu0
        %v536 = vadd.f32 %v517, %v535
        %v537 = vpop.f32.mrf.mxu0
        %v538 = vadd.f32 %v519, %v537
        %539 = vmatmul.bf16.gmra.mxu0 %v494
        %v540 = vpop.f32.mrf.mxu0
        %v541 = vadd.f32 %v522, %v540
        %v542 = vpop.f32.mrf.mxu0
        %v543 = vadd.f32 %v524, %v542
        %544 = vdwg.mxu0
        %545 = vmatpush.bf16.msra.mxu0 0
        %546 = vmatpush.bf16.msra.mxu0 0
        %547 = vmatpush.bf16.msra.mxu0 0
        %548 = vmatpush.bf16.msra.mxu0 0
        %549 = vmatpush.bf16.msra.mxu0 0
        %550 = vmatpush.bf16.msra.mxu0 0
        %551 = vmatpush.bf16.msra.mxu0 %v444
        %552 = vmatpush.bf16.msra.mxu0 %v442
        %553 = vmatmul.bf16.gmra.mxu0 %v502
        %v554 = vpop.f32.mrf.mxu0
        %v555 = vadd.f32 %v536, %v554
        %v556 = vpop.f32.mrf.mxu0
        %v557 = vadd.f32 %v538, %v556
        %558 = vmatmul.bf16.gmra.mxu0 %v505
        %v559 = vpop.f32.mrf.mxu0
        %v560 = vadd.f32 %v541, %v559
        %v561 = vpop.f32.mrf.mxu0
        %v562 = vadd.f32 %v543, %v561
        %563 = vdwg.mxu0
        %564 = vmatpush.bf16.msra.mxu0 %v425
        %565 = vmatpush.bf16.msra.mxu0 %v423
        %566 = vmatpush.bf16.msra.mxu0 %v421
        %567 = vmatpush.bf16.msra.mxu0 %v419
        %568 = vmatpush.bf16.msra.mxu0 %v417
        %569 = vmatpush.bf16.msra.mxu0 %v415
        %570 = vmatpush.bf16.msra.mxu0 %v413
        %571 = vmatpush.bf16.msra.mxu0 %v411
        %572 = vmatmul.bf16.gmra.mxu0 %v490
        %v573 = vpop.f32.mrf.mxu0
        %v574 = vadd.f32 %v453, %v573
        %v575 = vpop.f32.mrf.mxu0
        %v576 = vadd.f32 %v458, %v575
        %577 = vmatmul.bf16.gmra.mxu0 %v493
        %v578 = vpop.f32.mrf.mxu0
        %v579 = vadd.f32 %v463, %v578
        %v580 = vpop.f32.mrf.mxu0
        %v581 = vadd.f32 %v468, %v580
        %582 = vdwg.mxu0
        %583 = vmatpush.bf16.msra.mxu0 %v441
        %584 = vmatpush.bf16.msra.mxu0 %v439
        %585 = vmatpush.bf16.msra.mxu0 %v437
        %586 = vmatpush.bf16.msra.mxu0 %v435
        %587 = vmatpush.bf16.msra.mxu0 %v433
        %588 = vmatpush.bf16.msra.mxu0 %v431
        %589 = vmatpush.bf16.msra.mxu0 %v429
        %590 = vmatpush.bf16.msra.mxu0 %v427
        %591 = vmatmul.bf16.gmra.mxu0 %v491
        %v592 = vpop.f32.mrf.mxu0
        %v593 = vadd.f32 %v574, %v592
        %v594 = vpop.f32.mrf.mxu0
        %v595 = vadd.f32 %v576, %v594
        %596 = vmatmul.bf16.gmra.mxu0 %v494
        %v597 = vpop.f32.mrf.mxu0
        %v598 = vadd.f32 %v579, %v597
        %v599 = vpop.f32.mrf.mxu0
        %v600 = vadd.f32 %v581, %v599
        %601 = vdwg.mxu0
        %602 = vmatpush.bf16.msra.mxu0 0
        %603 = vmatpush.bf16.msra.mxu0 0
        %604 = vmatpush.bf16.msra.mxu0 0
        %605 = vmatpush.bf16.msra.mxu0 0
        %606 = vmatpush.bf16.msra.mxu0 0
        %607 = vmatpush.bf16.msra.mxu0 0
        %608 = vmatpush.bf16.msra.mxu0 %v445
        %609 = vmatpush.bf16.msra.mxu0 %v443
        %610 = vmatmul.bf16.gmra.mxu0 %v502
        %v611 = vpop.f32.mrf.mxu0
        %v612 = vadd.f32 %v593, %v611
        %v613 = vpop.f32.mrf.mxu0
        %v614 = vadd.f32 %v595, %v613
        %615 = vmatmul.bf16.gmra.mxu0 %v505
        %v616 = vpop.f32.mrf.mxu0
        %v617 = vadd.f32 %v598, %v616
        %v618 = vpop.f32.mrf.mxu0
        %v619 = vadd.f32 %v600, %v618
        %620 = vdwg.mxu0
        %621 = vst [vmem:[%s326] sm:$0xff] %v555
        %622 = vst [vmem:[%s326 + $0x8] sm:$0xff] %v612
        %623 = vst [vmem:[%s326 + $0x10] sm:$0xff] %v557
        %624 = vst [vmem:[%s326 + $0x18] sm:$0xff] %v614
        %625 = vst [vmem:[%s326 + $0x20] sm:$0xff] %v560
        %626 = vst [vmem:[%s326 + $0x28] sm:$0xff] %v617
        %627 = vst [vmem:[%s326 + $0x30] sm:$0xff] %v562
        %628 = vst [vmem:[%s326 + $0x38] sm:$0xff] %v619
        %s629 = sand.u32 %s90, 1
        %s630 = sand.u32 %s90, 1
        %s631 = smul.addr %s630, 64
        %s632 = scalar_lea.vmem [#allocation3], %s631
        // Predicated region
        $region56: #{_forward.23} parent=50 // pred_check
          %p633 = pneg %p100
        $region57: #{_forward.23} parent=50 // pred_check_branch
          %635 = sbr.rel (%p633) target = $region59
        $region58: #{_forward.23} parent=50 // pred_region
          %s636 = smul.u32 2, %s14
          %s637 = smul.addr %s636, 8
          %s638 = scalar_lea.vmem %s3, %s637
          // Predicated region
          $region60: #{_forward.23} parent=58 // pred_check
            _
          $region61: #{_forward.23} parent=58 // pred_check_branch
            %640 = sbr.rel (0) target = $region63
          $region62: #{_forward.23} parent=58 // pred_region
            // Predicated region
            $region64: #{_forward.23} parent=62 // pred_check
              _
            $region65: #{_forward.23} parent=62 // pred_check_branch
              %642 = sbr.rel (0) target = $region67
            $region66: #{_forward.23} parent=62 // pred_region
              loop: start=0, step=1, limit=1
              $region68: #{_forward.23} parent=66 // loop_pre_header
                _
              $region69: #{_forward.23} parent=66 // loop_header
                %s644 = sphi 0, %s648
                %p645 = scmp.ge.s32.totalorder %s644, 1
                %s649 = sphi %s632, %s632
                %s650 = sphi %s638, %s638
              $region70: #{_forward.23} parent=66 // loop_header_branch
                %647 = sbr.rel (%p645) target = $region74
              $region71: #{_forward.23} parent=66 // loop_body
                %v651 = vld [vmem:[%s649] sm:$0xff]
                %652 = vst [vmem:[%s650] sm:$0xff] %v651
                %v653 = vld [vmem:[%s649 + $0x8] sm:$0xff]
                %654 = vst [vmem:[%s650 + $0x8] sm:$0xff] %v653
                %v655 = vld [vmem:[%s649 + $0x10] sm:$0xff]
                %656 = vst [vmem:[%s650 + $0x20] sm:$0xff] %v655
                %v657 = vld [vmem:[%s649 + $0x18] sm:$0xff]
                %658 = vst [vmem:[%s650 + $0x28] sm:$0xff] %v657
                %v659 = vld [vmem:[%s649 + $0x20] sm:$0xff]
                %660 = vst [vmem:[%s650 + $0x40] sm:$0xff] %v659
                %v661 = vld [vmem:[%s649 + $0x28] sm:$0xff]
                %662 = vst [vmem:[%s650 + $0x48] sm:$0xff] %v661
                %v663 = vld [vmem:[%s649 + $0x30] sm:$0xff]
                %664 = vst [vmem:[%s650 + $0x60] sm:$0xff] %v663
                %v665 = vld [vmem:[%s649 + $0x38] sm:$0xff]
                %666 = vst [vmem:[%s650 + $0x68] sm:$0xff] %v665
              $region72: #{_forward.23} parent=66 // loop_footer
                %s648 = sadd.s32 1, %s644
              $region73: #{_forward.23} parent=66 // loop_footer_branch
                %643 = sbr.rel target = $region69
              $region74: #{_forward.23} parent=66 // loop_exit
                _
            $region67: #{_forward.23} parent=62 // pred_fallthru
              _
            // Predicated region
            $region75: #{_forward.23} parent=62 // pred_check
              _
            $region76: #{_forward.23} parent=62 // pred_check_branch
              %668 = sbr.rel target = $region78
            $region77: #{_forward.23} parent=62 // pred_region
              _
            $region78: #{_forward.23} parent=62 // pred_fallthru
              _
          $region63: #{_forward.23} parent=58 // pred_fallthru
            _
          %669 = vnop
        $region59: #{_forward.23} parent=50 // pred_fallthru
          _
      $region51: #{_forward.23} parent=5 // pred_fallthru
        _
      %p670 = scmp.le.s32.totalorder 2, %s9
      // Predicated region
      $region79: #{_forward.23} parent=5 // pred_check
        %p671 = pneg %p670
      $region80: #{_forward.23} parent=5 // pred_check_branch
        %673 = sbr.rel (%p671) target = $region82
      $region81: #{_forward.23} parent=5 // pred_region
        %s674 = ssub.s32 %s9, 2
        // Predicated region
        $region83: #{_forward.23} parent=81 // pred_check
          %p675 = pneg %p106
        $region84: #{_forward.23} parent=81 // pred_check_branch
          %677 = sbr.rel (%p675) target = $region86
        $region85: #{_forward.23} parent=81 // pred_region
          %s678 = sand.u32 %s91, 1
          %s679 = sand.u32 %s91, 1
          %s680 = smul.addr %s679, 64
          %s681 = scalar_lea.vmem [#allocation3], %s680
        $region86: #{_forward.23} parent=81 // pred_fallthru
          _
      $region82: #{_forward.23} parent=5 // pred_fallthru
        _
    $region6: #{_forward.23} parent=1 // loop_footer
      %s13 = sadd.s32 1, %s9
    $region7: #{_forward.23} parent=1 // loop_footer_branch
      %8 = sbr.rel target = $region3
    $region8: #{_forward.23} parent=1 // loop_exit
      _

</llo_original>
